<compile_context>
chip_gen: v6e
topology: v6e:2x2x1
jax: 0.10.0
libtpu: 0.0.40
codegen_flags: <defaults>
</compile_context>

<pallas_src>
import numpy as np
import jax
import jax.numpy as jnp
from jax import lax
from jax.experimental import pallas as pl
from jax.experimental.pallas import tpu as pltpu


def _make_ode_kernel(C, AUG, H, W, F, num_steps, dt):
    Caug = C + AUG
    HW = H * W
    PAD = W + 1                    # flat halo on each side of the staging scratches
    taps = [(dy - 1, dx - 1) for dy in range(3) for dx in range(3)]

    def kernel(x_ref, w1_ref, b1_ref, w2_ref, b2_ref, w3_ref, b3_ref,
               out_ref, col0_ref, colp_ref, colm_ref, patches_ref):
        # col*_ref: (F, HW + 2*PAD) bf16 flat-halo staging scratches.  Only the two
        # PAD-wide halo bands need zeroing (the interior is fully overwritten on
        # every odefunc eval).  Zero them every grid step — do NOT guard with
        # program_id == 0 (unsafe under v7x core-parallel grid sharding).
        zero_band = jnp.zeros((F, PAD), jnp.bfloat16)
        for cref in (col0_ref, colp_ref, colm_ref):
            cref[:, 0:PAD] = zero_band
            cref[:, PAD + HW:PAD + HW + PAD] = zero_band

        # ---- loop-invariant values, hoisted out of the 16 odefunc evaluations ----
        w1 = w1_ref[...]                                    # (F, Caug)   bf16
        w2 = w2_ref[...]                                    # (F, 9*F)    bf16
        w3 = w3_ref[...]                                    # (Caug, F)   bf16
        b1 = jnp.broadcast_to(b1_ref[...], (F, HW))         # (F, HW)     f32
        b2 = jnp.broadcast_to(b2_ref[...], (F, HW))         # (F, HW)     f32
        b3 = jnp.broadcast_to(b3_ref[...], (Caug, HW))      # (Caug, HW)  f32

        # Source-pixel w coordinate, used to build the two masked staged copies of
        # h1: the dw=+1 taps read a source w==0 pixel exactly (and only) at their
        # wrapped / out-of-bounds positions, the dw=-1 taps read source w==W-1
        # there.  Zeroing those source columns in the staged copies makes every tap
        # a pure lane-offset slice with no per-tap mask multiply.
        src_w = lax.broadcasted_iota(jnp.int32, (F, HW), 1) % W
        mask_w0 = (src_w != 0).astype(jnp.bfloat16)         # used by dw = +1 taps
        mask_wl = (src_w != (W - 1)).astype(jnp.bfloat16)   # used by dw = -1 taps

        def odefunc(y):                                     # y: (Caug, HW) f32
            # conv1 (1x1) + ReLU: channel-major matmul (F,Caug) x (Caug,HW).
            h1 = jnp.dot(w1, y.astype(jnp.bfloat16),
                         preferred_element_type=jnp.float32) + b1
            h1 = jnp.maximum(h1, 0.0).astype(jnp.bfloat16)

            # conv2 (3x3, stride 1, padding 1): stage the three halo copies, then
            # write the 9 lane-offset tap slices straight into the (9F, HW) patches
            # scratch and do a single im2col matmul with K = 9*F.
            col0_ref[:, PAD:PAD + HW] = h1                  # dw =  0 taps
            colp_ref[:, PAD:PAD + HW] = h1 * mask_w0        # dw = +1 taps
            colm_ref[:, PAD:PAD + HW] = h1 * mask_wl        # dw = -1 taps
            for t, (dh, dw) in enumerate(taps):
                src = colm_ref if dw == -1 else (colp_ref if dw == 1 else col0_ref)
                start = PAD + dh * W + dw
                patches_ref[t * F:(t + 1) * F, :] = src[:, start:start + HW]

            h2 = jnp.dot(w2, patches_ref[...],
                         preferred_element_type=jnp.float32) + b2
            h2 = jnp.maximum(h2, 0.0)
            # conv3 (1x1) back to the augmented channel count.
            return jnp.dot(w3, h2.astype(jnp.bfloat16),
                           preferred_element_type=jnp.float32) + b3

        # ANODE zero-channel augmentation, built in registers (no VMEM round trip).
        y0 = x_ref[...]
        if AUG > 0:
            y0 = jnp.concatenate([y0, jnp.zeros((AUG, HW), jnp.float32)], axis=0)

        # torchdiffeq fixed-grid 'rk4' = 3/8-rule step per interval of the 5-point
        # linspace(0,1,5) grid -> 4 steps of dt = 0.25 (odefunc is time-independent).
        def rk4_step(_, y):
            k1 = odefunc(y)
            k2 = odefunc(y + dt * (1.0 / 3.0) * k1)
            k3 = odefunc(y + dt * (k2 - (1.0 / 3.0) * k1))
            k4 = odefunc(y + dt * (k1 - k2 + k3))
            return y + dt * 0.125 * (k1 + 3.0 * (k2 + k3) + k4)

        out_ref[...] = lax.fori_loop(0, num_steps, rk4_step, y0)

    return kernel


def ode_block_forward(x_nchw, params, *, augment_dim, num_filters,
                      num_steps=4, dt=0.25):
    """Pallas implementation of ODEBlock.forward(x, eval_times=None)."""
    w1, b1, w2, b2, w3, b3 = params
    B, C, H, W = x_nchw.shape
    AUG = augment_dim
    Caug = C + AUG
    F = num_filters
    HW = H * W
    PAD = W + 1

    # Channel-major, lane-dense layout: (channels, B*H*W) with p = b*H*W + h*W + w.
    x_cm = jnp.transpose(x_nchw, (1, 0, 2, 3)).reshape(C, B * HW).astype(jnp.float32)

    # Matmul-ready weights (bf16 MXU operands; accumulation stays f32 in-kernel).
    w1t = jnp.asarray(w1, jnp.float32).T.astype(jnp.bfloat16)                 # (F, Caug)
    w2m = jnp.transpose(jnp.asarray(w2, jnp.float32), (3, 0, 1, 2)
                        ).reshape(F, 9 * F).astype(jnp.bfloat16)              # (F, 9F)
    w3t = jnp.asarray(w3, jnp.float32).T.astype(jnp.bfloat16)                 # (Caug, F)
    b1c = jnp.asarray(b1, jnp.float32).reshape(F, 1)
    b2c = jnp.asarray(b2, jnp.float32).reshape(F, 1)
    b3c = jnp.asarray(b3, jnp.float32).reshape(Caug, 1)

    kernel = _make_ode_kernel(C, AUG, H, W, F, num_steps, dt)
    whole = lambda b: (0, 0)

    out_cm = pl.pallas_call(
        kernel,
        out_shape=jax.ShapeDtypeStruct((Caug, B * HW), jnp.float32),
        grid=(B,),
        in_specs=[
            pl.BlockSpec((C, HW), lambda b: (0, b)),      # per-image state tile
            pl.BlockSpec((F, Caug), whole),
            pl.BlockSpec((F, 1), whole),
            pl.BlockSpec((F, 9 * F), whole),
            pl.BlockSpec((F, 1), whole),
            pl.BlockSpec((Caug, F), whole),
            pl.BlockSpec((Caug, 1), whole),
        ],
        out_specs=pl.BlockSpec((Caug, HW), lambda b: (0, b)),   # lane-dense output
        scratch_shapes=[
            pltpu.VMEM((F, HW + 2 * PAD), jnp.bfloat16),        # plain staged h1
            pltpu.VMEM((F, HW + 2 * PAD), jnp.bfloat16),        # w==0 zeroed  (dw=+1)
            pltpu.VMEM((F, HW + 2 * PAD), jnp.bfloat16),        # w==W-1 zeroed (dw=-1)
            pltpu.VMEM((9 * F, HW), jnp.bfloat16),              # im2col patches
        ],
        compiler_params=pltpu.CompilerParams(
            dimension_semantics=("parallel",)),           # both TensorCores on v7x
    )(x_cm, w1t, b1c, w2m, b2c, w3t, b3c)

    # Back to PyTorch's NCHW convention.
    return jnp.transpose(out_cm.reshape(Caug, B, H, W), (1, 0, 2, 3))


# -------------------- pure-JAX reference (for verification) --------------------
def _odefunc_ref(y_nhwc, params):
    w1, b1, w2, b2, w3, b3 = params
    h1 = jax.nn.relu(jnp.einsum('bhwc,cf->bhwf', y_nhwc, w1,
                                precision=lax.Precision.HIGHEST) + b1.reshape(-1))
    h2 = lax.conv_general_dilated(h1, w2, (1, 1), 'SAME',
                                  dimension_numbers=('NHWC', 'HWIO', 'NHWC'),
                                  precision=lax.Precision.HIGHEST)
    h2 = jax.nn.relu(h2 + b2.reshape(-1))
    return jnp.einsum('bhwf,fc->bhwc', h2, w3,
                      precision=lax.Precision.HIGHEST) + b3.reshape(-1)


def ode_block_reference(x_nchw, params, *, augment_dim, num_steps=4, dt=0.25):
    B, C, H, W = x_nchw.shape
    aug = jnp.zeros((B, augment_dim, H, W), x_nchw.dtype)
    x_aug = jnp.concatenate([x_nchw, aug], axis=1)
    y = jnp.transpose(x_aug, (0, 2, 3, 1)).astype(jnp.float32)
    for _ in range(num_steps):
        k1 = _odefunc_ref(y, params)
        k2 = _odefunc_ref(y + dt * (1.0 / 3.0) * k1, params)
        k3 = _odefunc_ref(y + dt * (k2 - (1.0 / 3.0) * k1), params)
        k4 = _odefunc_ref(y + dt * (k1 - k2 + k3), params)
        y = y + dt * 0.125 * (k1 + 3.0 * (k2 + k3) + k4)
    return jnp.transpose(y, (0, 3, 1, 2))


if __name__ == "__main__":
    # Small shapes consistent with the module: NCHW input, conv ODE func.
    B, C, H, W = 2, 4, 16, 16
    AUG = 2                 # odefunc.augment_dim
    F = 16                  # odefunc num_filters
    Caug = C + AUG

    key = jax.random.PRNGKey(0)
    kx, k1, k2, k3, k4, k5, k6 = jax.random.split(key, 7)
    x = jax.random.normal(kx, (B, C, H, W), jnp.float32)

    # Deterministic synthetic parameters (matmul-friendly layouts):
    #   conv1 1x1: (Caug -> F), conv2 3x3 (HWIO), conv3 1x1: (F -> Caug).
    w1 = jax.random.normal(k1, (Caug, F), jnp.float32) * 0.1
    b1 = jax.random.normal(k2, (1, F), jnp.float32) * 0.1
    w2 = jax.random.normal(k3, (3, 3, F, F), jnp.float32) * 0.1
    b2 = jax.random.normal(k4, (1, F), jnp.float32) * 0.1
    w3 = jax.random.normal(k5, (F, Caug), jnp.float32) * 0.1
    b3 = jax.random.normal(k6, (1, Caug), jnp.float32) * 0.1
    params = (w1, b1, w2, b2, w3, b3)

    out = ode_block_forward(x, params, augment_dim=AUG, num_filters=F)
    out = jax.block_until_ready(out)
    assert out.shape == (B, Caug, H, W)

    ref = ode_block_reference(x, params, augment_dim=AUG)
    np.testing.assert_allclose(np.asarray(out), np.asarray(ref), rtol=2e-2, atol=2e-2)

    # TODO(synk): adaptive-step adjoint odeint (tol/adjoint) has no forward-pass
    # effect for the fixed-grid 'rk4' method and is not implemented.
    print("KERNEL_OK")
</pallas_src>

<mosaic_0001>
module attributes {stable_mosaic.version = 11 : i64} {
  func.func @kernel(%arg0: i32, %arg1: memref<4x256xf32, #tpu.memory_space<vmem>>, %arg2: memref<16x6xbf16, #tpu.memory_space<vmem>>, %arg3: memref<16x1xf32, #tpu.memory_space<vmem>>, %arg4: memref<16x144xbf16, #tpu.memory_space<vmem>>, %arg5: memref<16x1xf32, #tpu.memory_space<vmem>>, %arg6: memref<6x16xbf16, #tpu.memory_space<vmem>>, %arg7: memref<6x1xf32, #tpu.memory_space<vmem>>, %arg8: memref<6x256xf32, #tpu.memory_space<vmem>>, %arg9: memref<16x290xbf16, #tpu.memory_space<vmem>>, %arg10: memref<16x290xbf16, #tpu.memory_space<vmem>>, %arg11: memref<16x290xbf16, #tpu.memory_space<vmem>>, %arg12: memref<144x256xbf16, #tpu.memory_space<vmem>>) attributes {dimension_semantics = [#tpu.dimension_semantics<parallel>], iteration_bounds = array<i64: 2>, scalar_prefetch = 0 : i64, scratch_operands = 4 : i64, tpu.core_type = #tpu.core_type<tc>, window_params = [{transform_indices = @transform_0, window_bounds = array<i64: 4, 256>}, {pipeline_mode = #tpu.pipeline_mode<synchronous>, transform_indices = @transform_1, window_bounds = array<i64: 16, 6>}, {pipeline_mode = #tpu.pipeline_mode<synchronous>, transform_indices = @transform_2, window_bounds = array<i64: 16, 1>}, {pipeline_mode = #tpu.pipeline_mode<synchronous>, transform_indices = @transform_3, window_bounds = array<i64: 16, 144>}, {pipeline_mode = #tpu.pipeline_mode<synchronous>, transform_indices = @transform_4, window_bounds = array<i64: 16, 1>}, {pipeline_mode = #tpu.pipeline_mode<synchronous>, transform_indices = @transform_5, window_bounds = array<i64: 6, 16>}, {pipeline_mode = #tpu.pipeline_mode<synchronous>, transform_indices = @transform_6, window_bounds = array<i64: 6, 1>}, {transform_indices = @transform_7, window_bounds = array<i64: 6, 256>}]} {
    %cst = arith.constant 0.000000e+00 : bf16
    %0 = vector.broadcast %cst : bf16 to vector<16x17xbf16>
    %c0 = arith.constant 0 : index
    %c0_0 = arith.constant 0 : index
    %1 = vector.load %arg9[%c0, %c0_0] : memref<16x290xbf16, #tpu.memory_space<vmem>>, vector<16x17xbf16>
    tpu.vector_store %arg9[%c0, %c0_0], %0 {strides = array<i32>} : memref<16x290xbf16, #tpu.memory_space<vmem>>, vector<16x17xbf16>,
    %c0_1 = arith.constant 0 : index
    %c273 = arith.constant 273 : index
    %2 = vector.load %arg9[%c0_1, %c273] : memref<16x290xbf16, #tpu.memory_space<vmem>>, vector<16x17xbf16>
    tpu.vector_store %arg9[%c0_1, %c273], %0 {strides = array<i32>} : memref<16x290xbf16, #tpu.memory_space<vmem>>, vector<16x17xbf16>,
    %c0_2 = arith.constant 0 : index
    %c0_3 = arith.constant 0 : index
    %3 = vector.load %arg10[%c0_2, %c0_3] : memref<16x290xbf16, #tpu.memory_space<vmem>>, vector<16x17xbf16>
    tpu.vector_store %arg10[%c0_2, %c0_3], %0 {strides = array<i32>} : memref<16x290xbf16, #tpu.memory_space<vmem>>, vector<16x17xbf16>,
    %c0_4 = arith.constant 0 : index
    %c273_5 = arith.constant 273 : index
    %4 = vector.load %arg10[%c0_4, %c273_5] : memref<16x290xbf16, #tpu.memory_space<vmem>>, vector<16x17xbf16>
    tpu.vector_store %arg10[%c0_4, %c273_5], %0 {strides = array<i32>} : memref<16x290xbf16, #tpu.memory_space<vmem>>, vector<16x17xbf16>,
    %c0_6 = arith.constant 0 : index
    %c0_7 = arith.constant 0 : index
    %5 = vector.load %arg11[%c0_6, %c0_7] : memref<16x290xbf16, #tpu.memory_space<vmem>>, vector<16x17xbf16>
    tpu.vector_store %arg11[%c0_6, %c0_7], %0 {strides = array<i32>} : memref<16x290xbf16, #tpu.memory_space<vmem>>, vector<16x17xbf16>,
    %c0_8 = arith.constant 0 : index
    %c273_9 = arith.constant 273 : index
    %6 = vector.load %arg11[%c0_8, %c273_9] : memref<16x290xbf16, #tpu.memory_space<vmem>>, vector<16x17xbf16>
    tpu.vector_store %arg11[%c0_8, %c273_9], %0 {strides = array<i32>} : memref<16x290xbf16, #tpu.memory_space<vmem>>, vector<16x17xbf16>,
    %c0_10 = arith.constant 0 : index
    %c0_11 = arith.constant 0 : index
    %7 = vector.load %arg2[%c0_10, %c0_11] : memref<16x6xbf16, #tpu.memory_space<vmem>>, vector<16x6xbf16>
    %c0_12 = arith.constant 0 : index
    %c0_13 = arith.constant 0 : index
    %8 = vector.load %arg4[%c0_12, %c0_13] : memref<16x144xbf16, #tpu.memory_space<vmem>>, vector<16x144xbf16>
    %c0_14 = arith.constant 0 : index
    %c0_15 = arith.constant 0 : index
    %9 = vector.load %arg6[%c0_14, %c0_15] : memref<6x16xbf16, #tpu.memory_space<vmem>>, vector<6x16xbf16>
    %c0_16 = arith.constant 0 : index
    %c0_17 = arith.constant 0 : index
    %10 = vector.load %arg3[%c0_16, %c0_17] : memref<16x1xf32, #tpu.memory_space<vmem>>, vector<16x1xf32>
    %11 = vector.shape_cast %10 : vector<16x1xf32> to vector<16x1xf32>
    %12 = vector.broadcast %11 : vector<16x1xf32> to vector<16x256xf32>
    %c0_18 = arith.constant 0 : index
    %c0_19 = arith.constant 0 : index
    %13 = vector.load %arg5[%c0_18, %c0_19] : memref<16x1xf32, #tpu.memory_space<vmem>>, vector<16x1xf32>
    %14 = vector.shape_cast %13 : vector<16x1xf32> to vector<16x1xf32>
    %15 = vector.broadcast %14 : vector<16x1xf32> to vector<16x256xf32>
    %c0_20 = arith.constant 0 : index
    %c0_21 = arith.constant 0 : index
    %16 = vector.load %arg7[%c0_20, %c0_21] : memref<6x1xf32, #tpu.memory_space<vmem>>, vector<6x1xf32>
    %17 = vector.shape_cast %16 : vector<6x1xf32> to vector<6x1xf32>
    %18 = vector.broadcast %17 : vector<6x1xf32> to vector<6x256xf32>
    %19 = tpu.iota {dimensions = array<i32: 1>} : vector<16x256xi32>
    %c16_i32 = arith.constant 16 : i32
    %c0_i32 = arith.constant 0 : i32
    %20 = arith.cmpi eq, %c16_i32, %c0_i32 : i32
    %c1_i32 = arith.constant 1 : i32
    %21 = arith.select %20, %c1_i32, %c16_i32 : i32
    %22 = vector.broadcast %21 : i32 to vector<16x256xi32>
    %23 = arith.remsi %19, %22 : vector<16x256xi32>
    %c0_i32_22 = arith.constant 0 : i32
    %24 = vector.broadcast %c0_i32_22 : i32 to vector<16x256xi32>
    %25 = arith.cmpi ne, %23, %24 : vector<16x256xi32>
    %c0_i32_23 = arith.constant 0 : i32
    %26 = vector.broadcast %c0_i32_23 : i32 to vector<16x256xi32>
    %27 = arith.cmpi slt, %23, %26 : vector<16x256xi32>
    %c0_i32_24 = arith.constant 0 : i32
    %28 = arith.cmpi slt, %21, %c0_i32_24 : i32
    %29 = vector.broadcast %28 : i1 to vector<16x256xi1>
    %30 = vector.broadcast %29 : vector<16x256xi1> to vector<16x256xi1>
    %31 = arith.xori %27, %30 : vector<16x256xi1>
    %32 = arith.andi %31, %25 : vector<16x256xi1>
    %33 = vector.broadcast %21 : i32 to vector<16x256xi32>
    %34 = arith.addi %23, %33 : vector<16x256xi32>
    %35 = arith.select %32, %34, %23 : vector<16x256xi1>, vector<16x256xi32>
    %c0_i32_25 = arith.constant 0 : i32
    %36 = vector.broadcast %c0_i32_25 : i32 to vector<16x256xi32>
    %37 = arith.cmpi ne, %35, %36 : vector<16x256xi32>
    %38 = arith.extui %37 : vector<16x256xi1> to vector<16x256xi32>
    %39 = arith.sitofp %38 : vector<16x256xi32> to vector<16x256xf32>
    %40 = arith.truncf %39 : vector<16x256xf32> to vector<16x256xbf16>
    %c15_i32 = arith.constant 15 : i32
    %41 = vector.broadcast %c15_i32 : i32 to vector<16x256xi32>
    %42 = arith.cmpi ne, %35, %41 : vector<16x256xi32>
    %43 = arith.extui %42 : vector<16x256xi1> to vector<16x256xi32>
    %44 = arith.sitofp %43 : vector<16x256xi32> to vector<16x256xf32>
    %45 = arith.truncf %44 : vector<16x256xf32> to vector<16x256xbf16>
    %c0_26 = arith.constant 0 : index
    %c0_27 = arith.constant 0 : index
    %46 = vector.load %arg1[%c0_26, %c0_27] : memref<4x256xf32, #tpu.memory_space<vmem>>, vector<4x256xf32>
    %cst_28 = arith.constant 0.000000e+00 : f32
    %47 = vector.broadcast %cst_28 : f32 to vector<2x256xf32>
    %48 = tpu.concatenate %46, %47 in 0 : vector<4x256xf32>, vector<2x256xf32> -> vector<6x256xf32>
    %c0_i32_29 = arith.constant 0 : i32
    %c4_i32 = arith.constant 4 : i32
    %49 = arith.addi %c0_i32_29, %c4_i32 : i32
    %c1_i32_30 = arith.constant 1 : i32
    %50 = scf.for %arg13 = %c0_i32_29 to %49 step %c1_i32_30 iter_args(%arg14 = %48) -> (vector<6x256xf32>)  : i32 {
      %52 = arith.truncf %arg14 : vector<6x256xf32> to vector<6x256xbf16>
      %cst_33 = arith.constant dense<0.000000e+00> : vector<16x256xf32>
      %53 = tpu.matmul %7, %52, %cst_33 {dimension_numbers = #tpu.dot_dimension_numbers<[1], [0], [0], [1], [0, 0, 1, 1], [], []>} : vector<16x6xbf16>, vector<6x256xbf16>, vector<16x256xf32> -> vector<16x256xf32>
      %54 = arith.addf %53, %12 : vector<16x256xf32>
      %cst_34 = arith.constant 0.000000e+00 : f32
      %55 = vector.broadcast %cst_34 : f32 to vector<16x256xf32>
      %56 = arith.maximumf %54, %55 : vector<16x256xf32>
      %57 = arith.truncf %56 : vector<16x256xf32> to vector<16x256xbf16>
      %c0_35 = arith.constant 0 : index
      %c17 = arith.constant 17 : index
      %58 = vector.load %arg9[%c0_35, %c17] : memref<16x290xbf16, #tpu.memory_space<vmem>>, vector<16x256xbf16>
      tpu.vector_store %arg9[%c0_35, %c17], %57 {strides = array<i32>} : memref<16x290xbf16, #tpu.memory_space<vmem>>, vector<16x256xbf16>,
      %59 = arith.mulf %57, %40 : vector<16x256xbf16>
      %c0_36 = arith.constant 0 : index
      %c17_37 = arith.constant 17 : index
      %60 = vector.load %arg10[%c0_36, %c17_37] : memref<16x290xbf16, #tpu.memory_space<vmem>>, vector<16x256xbf16>
      tpu.vector_store %arg10[%c0_36, %c17_37], %59 {strides = array<i32>} : memref<16x290xbf16, #tpu.memory_space<vmem>>, vector<16x256xbf16>,
      %61 = arith.mulf %57, %45 : vector<16x256xbf16>
      %c0_38 = arith.constant 0 : index
      %c17_39 = arith.constant 17 : index
      %62 = vector.load %arg11[%c0_38, %c17_39] : memref<16x290xbf16, #tpu.memory_space<vmem>>, vector<16x256xbf16>
      tpu.vector_store %arg11[%c0_38, %c17_39], %61 {strides = array<i32>} : memref<16x290xbf16, #tpu.memory_space<vmem>>, vector<16x256xbf16>,
      %c0_40 = arith.constant 0 : index
      %c0_41 = arith.constant 0 : index
      %63 = vector.load %arg11[%c0_40, %c0_41] : memref<16x290xbf16, #tpu.memory_space<vmem>>, vector<16x256xbf16>
      %c0_42 = arith.constant 0 : index
      %c0_43 = arith.constant 0 : index
      %64 = vector.load %arg12[%c0_42, %c0_43] : memref<144x256xbf16, #tpu.memory_space<vmem>>, vector<16x256xbf16>
      tpu.vector_store %arg12[%c0_42, %c0_43], %63 {strides = array<i32>} : memref<144x256xbf16, #tpu.memory_space<vmem>>, vector<16x256xbf16>,
      %c0_44 = arith.constant 0 : index
      %c1 = arith.constant 1 : index
      %65 = vector.load %arg9[%c0_44, %c1] : memref<16x290xbf16, #tpu.memory_space<vmem>>, vector<16x256xbf16>
      %c16 = arith.constant 16 : index
      %c0_45 = arith.constant 0 : index
      %66 = vector.load %arg12[%c16, %c0_45] : memref<144x256xbf16, #tpu.memory_space<vmem>>, vector<16x256xbf16>
      tpu.vector_store %arg12[%c16, %c0_45], %65 {strides = array<i32>} : memref<144x256xbf16, #tpu.memory_space<vmem>>, vector<16x256xbf16>,
      %c0_46 = arith.constant 0 : index
      %c2 = arith.constant 2 : index
      %67 = vector.load %arg10[%c0_46, %c2] : memref<16x290xbf16, #tpu.memory_space<vmem>>, vector<16x256xbf16>
      %c32 = arith.constant 32 : index
      %c0_47 = arith.constant 0 : index
      %68 = vector.load %arg12[%c32, %c0_47] : memref<144x256xbf16, #tpu.memory_space<vmem>>, vector<16x256xbf16>
      tpu.vector_store %arg12[%c32, %c0_47], %67 {strides = array<i32>} : memref<144x256xbf16, #tpu.memory_space<vmem>>, vector<16x256xbf16>,
      %c0_48 = arith.constant 0 : index
      %c16_49 = arith.constant 16 : index
      %69 = vector.load %arg11[%c0_48, %c16_49] : memref<16x290xbf16, #tpu.memory_space<vmem>>, vector<16x256xbf16>
      %c48 = arith.constant 48 : index
      %c0_50 = arith.constant 0 : index
      %70 = vector.load %arg12[%c48, %c0_50] : memref<144x256xbf16, #tpu.memory_space<vmem>>, vector<16x256xbf16>
      tpu.vector_store %arg12[%c48, %c0_50], %69 {strides = array<i32>} : memref<144x256xbf16, #tpu.memory_space<vmem>>, vector<16x256xbf16>,
      %c0_51 = arith.constant 0 : index
      %c17_52 = arith.constant 17 : index
      %71 = vector.load %arg9[%c0_51, %c17_52] : memref<16x290xbf16, #tpu.memory_space<vmem>>, vector<16x256xbf16>
      %c64 = arith.constant 64 : index
      %c0_53 = arith.constant 0 : index
      %72 = vector.load %arg12[%c64, %c0_53] : memref<144x256xbf16, #tpu.memory_space<vmem>>, vector<16x256xbf16>
      tpu.vector_store %arg12[%c64, %c0_53], %71 {strides = array<i32>} : memref<144x256xbf16, #tpu.memory_space<vmem>>, vector<16x256xbf16>,
      %c0_54 = arith.constant 0 : index
      %c18 = arith.constant 18 : index
      %73 = vector.load %arg10[%c0_54, %c18] : memref<16x290xbf16, #tpu.memory_space<vmem>>, vector<16x256xbf16>
      %c80 = arith.constant 80 : index
      %c0_55 = arith.constant 0 : index
      %74 = vector.load %arg12[%c80, %c0_55] : memref<144x256xbf16, #tpu.memory_space<vmem>>, vector<16x256xbf16>
      tpu.vector_store %arg12[%c80, %c0_55], %73 {strides = array<i32>} : memref<144x256xbf16, #tpu.memory_space<vmem>>, vector<16x256xbf16>,
      %c0_56 = arith.constant 0 : index
      %c32_57 = arith.constant 32 : index
      %75 = vector.load %arg11[%c0_56, %c32_57] : memref<16x290xbf16, #tpu.memory_space<vmem>>, vector<16x256xbf16>
      %c96 = arith.constant 96 : index
      %c0_58 = arith.constant 0 : index
      %76 = vector.load %arg12[%c96, %c0_58] : memref<144x256xbf16, #tpu.memory_space<vmem>>, vector<16x256xbf16>
      tpu.vector_store %arg12[%c96, %c0_58], %75 {strides = array<i32>} : memref<144x256xbf16, #tpu.memory_space<vmem>>, vector<16x256xbf16>,
      %c0_59 = arith.constant 0 : index
      %c33 = arith.constant 33 : index
      %77 = vector.load %arg9[%c0_59, %c33] : memref<16x290xbf16, #tpu.memory_space<vmem>>, vector<16x256xbf16>
      %c112 = arith.constant 112 : index
      %c0_60 = arith.constant 0 : index
      %78 = vector.load %arg12[%c112, %c0_60] : memref<144x256xbf16, #tpu.memory_space<vmem>>, vector<16x256xbf16>
      tpu.vector_store %arg12[%c112, %c0_60], %77 {strides = array<i32>} : memref<144x256xbf16, #tpu.memory_space<vmem>>, vector<16x256xbf16>,
      %c0_61 = arith.constant 0 : index
      %c34 = arith.constant 34 : index
      %79 = vector.load %arg10[%c0_61, %c34] : memref<16x290xbf16, #tpu.memory_space<vmem>>, vector<16x256xbf16>
      %c128 = arith.constant 128 : index
      %c0_62 = arith.constant 0 : index
      %80 = vector.load %arg12[%c128, %c0_62] : memref<144x256xbf16, #tpu.memory_space<vmem>>, vector<16x256xbf16>
      tpu.vector_store %arg12[%c128, %c0_62], %79 {strides = array<i32>} : memref<144x256xbf16, #tpu.memory_space<vmem>>, vector<16x256xbf16>,
      %c0_63 = arith.constant 0 : index
      %c0_64 = arith.constant 0 : index
      %81 = vector.load %arg12[%c0_63, %c0_64] : memref<144x256xbf16, #tpu.memory_space<vmem>>, vector<144x256xbf16>
      %cst_65 = arith.constant dense<0.000000e+00> : vector<16x256xf32>
      %82 = tpu.matmul %8, %81, %cst_65 {dimension_numbers = #tpu.dot_dimension_numbers<[1], [0], [0], [1], [0, 0, 1, 1], [], []>} : vector<16x144xbf16>, vector<144x256xbf16>, vector<16x256xf32> -> vector<16x256xf32>
      %83 = arith.addf %82, %15 : vector<16x256xf32>
      %cst_66 = arith.constant 0.000000e+00 : f32
      %84 = vector.broadcast %cst_66 : f32 to vector<16x256xf32>
      %85 = arith.maximumf %83, %84 : vector<16x256xf32>
      %86 = arith.truncf %85 : vector<16x256xf32> to vector<16x256xbf16>
      %cst_67 = arith.constant dense<0.000000e+00> : vector<6x256xf32>
      %87 = tpu.matmul %9, %86, %cst_67 {dimension_numbers = #tpu.dot_dimension_numbers<[1], [0], [0], [1], [0, 0, 1, 1], [], []>} : vector<6x16xbf16>, vector<16x256xbf16>, vector<6x256xf32> -> vector<6x256xf32>
      %88 = arith.addf %87, %18 : vector<6x256xf32>
      %cst_68 = arith.constant 0.0833333358 : f32
      %89 = vector.broadcast %cst_68 : f32 to vector<6x256xf32>
      %90 = arith.mulf %89, %88 : vector<6x256xf32>
      %91 = arith.addf %arg14, %90 : vector<6x256xf32>
      %92 = arith.truncf %91 : vector<6x256xf32> to vector<6x256xbf16>
      %cst_69 = arith.constant dense<0.000000e+00> : vector<16x256xf32>
      %93 = tpu.matmul %7, %92, %cst_69 {dimension_numbers = #tpu.dot_dimension_numbers<[1], [0], [0], [1], [0, 0, 1, 1], [], []>} : vector<16x6xbf16>, vector<6x256xbf16>, vector<16x256xf32> -> vector<16x256xf32>
      %94 = arith.addf %93, %12 : vector<16x256xf32>
      %cst_70 = arith.constant 0.000000e+00 : f32
      %95 = vector.broadcast %cst_70 : f32 to vector<16x256xf32>
      %96 = arith.maximumf %94, %95 : vector<16x256xf32>
      %97 = arith.truncf %96 : vector<16x256xf32> to vector<16x256xbf16>
      %c0_71 = arith.constant 0 : index
      %c17_72 = arith.constant 17 : index
      %98 = vector.load %arg9[%c0_71, %c17_72] : memref<16x290xbf16, #tpu.memory_space<vmem>>, vector<16x256xbf16>
      tpu.vector_store %arg9[%c0_71, %c17_72], %97 {strides = array<i32>} : memref<16x290xbf16, #tpu.memory_space<vmem>>, vector<16x256xbf16>,
      %99 = arith.mulf %97, %40 : vector<16x256xbf16>
      %c0_73 = arith.constant 0 : index
      %c17_74 = arith.constant 17 : index
      %100 = vector.load %arg10[%c0_73, %c17_74] : memref<16x290xbf16, #tpu.memory_space<vmem>>, vector<16x256xbf16>
      tpu.vector_store %arg10[%c0_73, %c17_74], %99 {strides = array<i32>} : memref<16x290xbf16, #tpu.memory_space<vmem>>, vector<16x256xbf16>,
      %101 = arith.mulf %97, %45 : vector<16x256xbf16>
      %c0_75 = arith.constant 0 : index
      %c17_76 = arith.constant 17 : index
      %102 = vector.load %arg11[%c0_75, %c17_76] : memref<16x290xbf16, #tpu.memory_space<vmem>>, vector<16x256xbf16>
      tpu.vector_store %arg11[%c0_75, %c17_76], %101 {strides = array<i32>} : memref<16x290xbf16, #tpu.memory_space<vmem>>, vector<16x256xbf16>,
      %c0_77 = arith.constant 0 : index
      %c0_78 = arith.constant 0 : index
      %103 = vector.load %arg11[%c0_77, %c0_78] : memref<16x290xbf16, #tpu.memory_space<vmem>>, vector<16x256xbf16>
      %c0_79 = arith.constant 0 : index
      %c0_80 = arith.constant 0 : index
      %104 = vector.load %arg12[%c0_79, %c0_80] : memref<144x256xbf16, #tpu.memory_space<vmem>>, vector<16x256xbf16>
      tpu.vector_store %arg12[%c0_79, %c0_80], %103 {strides = array<i32>} : memref<144x256xbf16, #tpu.memory_space<vmem>>, vector<16x256xbf16>,
      %c0_81 = arith.constant 0 : index
      %c1_82 = arith.constant 1 : index
      %105 = vector.load %arg9[%c0_81, %c1_82] : memref<16x290xbf16, #tpu.memory_space<vmem>>, vector<16x256xbf16>
      %c16_83 = arith.constant 16 : index
      %c0_84 = arith.constant 0 : index
      %106 = vector.load %arg12[%c16_83, %c0_84] : memref<144x256xbf16, #tpu.memory_space<vmem>>, vector<16x256xbf16>
      tpu.vector_store %arg12[%c16_83, %c0_84], %105 {strides = array<i32>} : memref<144x256xbf16, #tpu.memory_space<vmem>>, vector<16x256xbf16>,
      %c0_85 = arith.constant 0 : index
      %c2_86 = arith.constant 2 : index
      %107 = vector.load %arg10[%c0_85, %c2_86] : memref<16x290xbf16, #tpu.memory_space<vmem>>, vector<16x256xbf16>
      %c32_87 = arith.constant 32 : index
      %c0_88 = arith.constant 0 : index
      %108 = vector.load %arg12[%c32_87, %c0_88] : memref<144x256xbf16, #tpu.memory_space<vmem>>, vector<16x256xbf16>
      tpu.vector_store %arg12[%c32_87, %c0_88], %107 {strides = array<i32>} : memref<144x256xbf16, #tpu.memory_space<vmem>>, vector<16x256xbf16>,
      %c0_89 = arith.constant 0 : index
      %c16_90 = arith.constant 16 : index
      %109 = vector.load %arg11[%c0_89, %c16_90] : memref<16x290xbf16, #tpu.memory_space<vmem>>, vector<16x256xbf16>
      %c48_91 = arith.constant 48 : index
      %c0_92 = arith.constant 0 : index
      %110 = vector.load %arg12[%c48_91, %c0_92] : memref<144x256xbf16, #tpu.memory_space<vmem>>, vector<16x256xbf16>
      tpu.vector_store %arg12[%c48_91, %c0_92], %109 {strides = array<i32>} : memref<144x256xbf16, #tpu.memory_space<vmem>>, vector<16x256xbf16>,
      %c0_93 = arith.constant 0 : index
      %c17_94 = arith.constant 17 : index
      %111 = vector.load %arg9[%c0_93, %c17_94] : memref<16x290xbf16, #tpu.memory_space<vmem>>, vector<16x256xbf16>
      %c64_95 = arith.constant 64 : index
      %c0_96 = arith.constant 0 : index
      %112 = vector.load %arg12[%c64_95, %c0_96] : memref<144x256xbf16, #tpu.memory_space<vmem>>, vector<16x256xbf16>
      tpu.vector_store %arg12[%c64_95, %c0_96], %111 {strides = array<i32>} : memref<144x256xbf16, #tpu.memory_space<vmem>>, vector<16x256xbf16>,
      %c0_97 = arith.constant 0 : index
      %c18_98 = arith.constant 18 : index
      %113 = vector.load %arg10[%c0_97, %c18_98] : memref<16x290xbf16, #tpu.memory_space<vmem>>, vector<16x256xbf16>
      %c80_99 = arith.constant 80 : index
      %c0_100 = arith.constant 0 : index
      %114 = vector.load %arg12[%c80_99, %c0_100] : memref<144x256xbf16, #tpu.memory_space<vmem>>, vector<16x256xbf16>
      tpu.vector_store %arg12[%c80_99, %c0_100], %113 {strides = array<i32>} : memref<144x256xbf16, #tpu.memory_space<vmem>>, vector<16x256xbf16>,
      %c0_101 = arith.constant 0 : index
      %c32_102 = arith.constant 32 : index
      %115 = vector.load %arg11[%c0_101, %c32_102] : memref<16x290xbf16, #tpu.memory_space<vmem>>, vector<16x256xbf16>
      %c96_103 = arith.constant 96 : index
      %c0_104 = arith.constant 0 : index
      %116 = vector.load %arg12[%c96_103, %c0_104] : memref<144x256xbf16, #tpu.memory_space<vmem>>, vector<16x256xbf16>
      tpu.vector_store %arg12[%c96_103, %c0_104], %115 {strides = array<i32>} : memref<144x256xbf16, #tpu.memory_space<vmem>>, vector<16x256xbf16>,
      %c0_105 = arith.constant 0 : index
      %c33_106 = arith.constant 33 : index
      %117 = vector.load %arg9[%c0_105, %c33_106] : memref<16x290xbf16, #tpu.memory_space<vmem>>, vector<16x256xbf16>
      %c112_107 = arith.constant 112 : index
      %c0_108 = arith.constant 0 : index
      %118 = vector.load %arg12[%c112_107, %c0_108] : memref<144x256xbf16, #tpu.memory_space<vmem>>, vector<16x256xbf16>
      tpu.vector_store %arg12[%c112_107, %c0_108], %117 {strides = array<i32>} : memref<144x256xbf16, #tpu.memory_space<vmem>>, vector<16x256xbf16>,
      %c0_109 = arith.constant 0 : index
      %c34_110 = arith.constant 34 : index
      %119 = vector.load %arg10[%c0_109, %c34_110] : memref<16x290xbf16, #tpu.memory_space<vmem>>, vector<16x256xbf16>
      %c128_111 = arith.constant 128 : index
      %c0_112 = arith.constant 0 : index
      %120 = vector.load %arg12[%c128_111, %c0_112] : memref<144x256xbf16, #tpu.memory_space<vmem>>, vector<16x256xbf16>
      tpu.vector_store %arg12[%c128_111, %c0_112], %119 {strides = array<i32>} : memref<144x256xbf16, #tpu.memory_space<vmem>>, vector<16x256xbf16>,
      %c0_113 = arith.constant 0 : index
      %c0_114 = arith.constant 0 : index
      %121 = vector.load %arg12[%c0_113, %c0_114] : memref<144x256xbf16, #tpu.memory_space<vmem>>, vector<144x256xbf16>
      %cst_115 = arith.constant dense<0.000000e+00> : vector<16x256xf32>
      %122 = tpu.matmul %8, %121, %cst_115 {dimension_numbers = #tpu.dot_dimension_numbers<[1], [0], [0], [1], [0, 0, 1, 1], [], []>} : vector<16x144xbf16>, vector<144x256xbf16>, vector<16x256xf32> -> vector<16x256xf32>
      %123 = arith.addf %122, %15 : vector<16x256xf32>
      %cst_116 = arith.constant 0.000000e+00 : f32
      %124 = vector.broadcast %cst_116 : f32 to vector<16x256xf32>
      %125 = arith.maximumf %123, %124 : vector<16x256xf32>
      %126 = arith.truncf %125 : vector<16x256xf32> to vector<16x256xbf16>
      %cst_117 = arith.constant dense<0.000000e+00> : vector<6x256xf32>
      %127 = tpu.matmul %9, %126, %cst_117 {dimension_numbers = #tpu.dot_dimension_numbers<[1], [0], [0], [1], [0, 0, 1, 1], [], []>} : vector<6x16xbf16>, vector<16x256xbf16>, vector<6x256xf32> -> vector<6x256xf32>
      %128 = arith.addf %127, %18 : vector<6x256xf32>
      %cst_118 = arith.constant 0.333333343 : f32
      %129 = vector.broadcast %cst_118 : f32 to vector<6x256xf32>
      %130 = arith.mulf %129, %88 : vector<6x256xf32>
      %131 = arith.subf %128, %130 : vector<6x256xf32>
      %cst_119 = arith.constant 2.500000e-01 : f32
      %132 = vector.broadcast %cst_119 : f32 to vector<6x256xf32>
      %133 = arith.mulf %132, %131 : vector<6x256xf32>
      %134 = arith.addf %arg14, %133 : vector<6x256xf32>
      %135 = arith.truncf %134 : vector<6x256xf32> to vector<6x256xbf16>
      %cst_120 = arith.constant dense<0.000000e+00> : vector<16x256xf32>
      %136 = tpu.matmul %7, %135, %cst_120 {dimension_numbers = #tpu.dot_dimension_numbers<[1], [0], [0], [1], [0, 0, 1, 1], [], []>} : vector<16x6xbf16>, vector<6x256xbf16>, vector<16x256xf32> -> vector<16x256xf32>
      %137 = arith.addf %136, %12 : vector<16x256xf32>
      %cst_121 = arith.constant 0.000000e+00 : f32
      %138 = vector.broadcast %cst_121 : f32 to vector<16x256xf32>
      %139 = arith.maximumf %137, %138 : vector<16x256xf32>
      %140 = arith.truncf %139 : vector<16x256xf32> to vector<16x256xbf16>
      %c0_122 = arith.constant 0 : index
      %c17_123 = arith.constant 17 : index
      %141 = vector.load %arg9[%c0_122, %c17_123] : memref<16x290xbf16, #tpu.memory_space<vmem>>, vector<16x256xbf16>
      tpu.vector_store %arg9[%c0_122, %c17_123], %140 {strides = array<i32>} : memref<16x290xbf16, #tpu.memory_space<vmem>>, vector<16x256xbf16>,
      %142 = arith.mulf %140, %40 : vector<16x256xbf16>
      %c0_124 = arith.constant 0 : index
      %c17_125 = arith.constant 17 : index
      %143 = vector.load %arg10[%c0_124, %c17_125] : memref<16x290xbf16, #tpu.memory_space<vmem>>, vector<16x256xbf16>
      tpu.vector_store %arg10[%c0_124, %c17_125], %142 {strides = array<i32>} : memref<16x290xbf16, #tpu.memory_space<vmem>>, vector<16x256xbf16>,
      %144 = arith.mulf %140, %45 : vector<16x256xbf16>
      %c0_126 = arith.constant 0 : index
      %c17_127 = arith.constant 17 : index
      %145 = vector.load %arg11[%c0_126, %c17_127] : memref<16x290xbf16, #tpu.memory_space<vmem>>, vector<16x256xbf16>
      tpu.vector_store %arg11[%c0_126, %c17_127], %144 {strides = array<i32>} : memref<16x290xbf16, #tpu.memory_space<vmem>>, vector<16x256xbf16>,
      %c0_128 = arith.constant 0 : index
      %c0_129 = arith.constant 0 : index
      %146 = vector.load %arg11[%c0_128, %c0_129] : memref<16x290xbf16, #tpu.memory_space<vmem>>, vector<16x256xbf16>
      %c0_130 = arith.constant 0 : index
      %c0_131 = arith.constant 0 : index
      %147 = vector.load %arg12[%c0_130, %c0_131] : memref<144x256xbf16, #tpu.memory_space<vmem>>, vector<16x256xbf16>
      tpu.vector_store %arg12[%c0_130, %c0_131], %146 {strides = array<i32>} : memref<144x256xbf16, #tpu.memory_space<vmem>>, vector<16x256xbf16>,
      %c0_132 = arith.constant 0 : index
      %c1_133 = arith.constant 1 : index
      %148 = vector.load %arg9[%c0_132, %c1_133] : memref<16x290xbf16, #tpu.memory_space<vmem>>, vector<16x256xbf16>
      %c16_134 = arith.constant 16 : index
      %c0_135 = arith.constant 0 : index
      %149 = vector.load %arg12[%c16_134, %c0_135] : memref<144x256xbf16, #tpu.memory_space<vmem>>, vector<16x256xbf16>
      tpu.vector_store %arg12[%c16_134, %c0_135], %148 {strides = array<i32>} : memref<144x256xbf16, #tpu.memory_space<vmem>>, vector<16x256xbf16>,
      %c0_136 = arith.constant 0 : index
      %c2_137 = arith.constant 2 : index
      %150 = vector.load %arg10[%c0_136, %c2_137] : memref<16x290xbf16, #tpu.memory_space<vmem>>, vector<16x256xbf16>
      %c32_138 = arith.constant 32 : index
      %c0_139 = arith.constant 0 : index
      %151 = vector.load %arg12[%c32_138, %c0_139] : memref<144x256xbf16, #tpu.memory_space<vmem>>, vector<16x256xbf16>
      tpu.vector_store %arg12[%c32_138, %c0_139], %150 {strides = array<i32>} : memref<144x256xbf16, #tpu.memory_space<vmem>>, vector<16x256xbf16>,
      %c0_140 = arith.constant 0 : index
      %c16_141 = arith.constant 16 : index
      %152 = vector.load %arg11[%c0_140, %c16_141] : memref<16x290xbf16, #tpu.memory_space<vmem>>, vector<16x256xbf16>
      %c48_142 = arith.constant 48 : index
      %c0_143 = arith.constant 0 : index
      %153 = vector.load %arg12[%c48_142, %c0_143] : memref<144x256xbf16, #tpu.memory_space<vmem>>, vector<16x256xbf16>
      tpu.vector_store %arg12[%c48_142, %c0_143], %152 {strides = array<i32>} : memref<144x256xbf16, #tpu.memory_space<vmem>>, vector<16x256xbf16>,
      %c0_144 = arith.constant 0 : index
      %c17_145 = arith.constant 17 : index
      %154 = vector.load %arg9[%c0_144, %c17_145] : memref<16x290xbf16, #tpu.memory_space<vmem>>, vector<16x256xbf16>
      %c64_146 = arith.constant 64 : index
      %c0_147 = arith.constant 0 : index
      %155 = vector.load %arg12[%c64_146, %c0_147] : memref<144x256xbf16, #tpu.memory_space<vmem>>, vector<16x256xbf16>
      tpu.vector_store %arg12[%c64_146, %c0_147], %154 {strides = array<i32>} : memref<144x256xbf16, #tpu.memory_space<vmem>>, vector<16x256xbf16>,
      %c0_148 = arith.constant 0 : index
      %c18_149 = arith.constant 18 : index
      %156 = vector.load %arg10[%c0_148, %c18_149] : memref<16x290xbf16, #tpu.memory_space<vmem>>, vector<16x256xbf16>
      %c80_150 = arith.constant 80 : index
      %c0_151 = arith.constant 0 : index
      %157 = vector.load %arg12[%c80_150, %c0_151] : memref<144x256xbf16, #tpu.memory_space<vmem>>, vector<16x256xbf16>
      tpu.vector_store %arg12[%c80_150, %c0_151], %156 {strides = array<i32>} : memref<144x256xbf16, #tpu.memory_space<vmem>>, vector<16x256xbf16>,
      %c0_152 = arith.constant 0 : index
      %c32_153 = arith.constant 32 : index
      %158 = vector.load %arg11[%c0_152, %c32_153] : memref<16x290xbf16, #tpu.memory_space<vmem>>, vector<16x256xbf16>
      %c96_154 = arith.constant 96 : index
      %c0_155 = arith.constant 0 : index
      %159 = vector.load %arg12[%c96_154, %c0_155] : memref<144x256xbf16, #tpu.memory_space<vmem>>, vector<16x256xbf16>
      tpu.vector_store %arg12[%c96_154, %c0_155], %158 {strides = array<i32>} : memref<144x256xbf16, #tpu.memory_space<vmem>>, vector<16x256xbf16>,
      %c0_156 = arith.constant 0 : index
      %c33_157 = arith.constant 33 : index
      %160 = vector.load %arg9[%c0_156, %c33_157] : memref<16x290xbf16, #tpu.memory_space<vmem>>, vector<16x256xbf16>
      %c112_158 = arith.constant 112 : index
      %c0_159 = arith.constant 0 : index
      %161 = vector.load %arg12[%c112_158, %c0_159] : memref<144x256xbf16, #tpu.memory_space<vmem>>, vector<16x256xbf16>
      tpu.vector_store %arg12[%c112_158, %c0_159], %160 {strides = array<i32>} : memref<144x256xbf16, #tpu.memory_space<vmem>>, vector<16x256xbf16>,
      %c0_160 = arith.constant 0 : index
      %c34_161 = arith.constant 34 : index
      %162 = vector.load %arg10[%c0_160, %c34_161] : memref<16x290xbf16, #tpu.memory_space<vmem>>, vector<16x256xbf16>
      %c128_162 = arith.constant 128 : index
      %c0_163 = arith.constant 0 : index
      %163 = vector.load %arg12[%c128_162, %c0_163] : memref<144x256xbf16, #tpu.memory_space<vmem>>, vector<16x256xbf16>
      tpu.vector_store %arg12[%c128_162, %c0_163], %162 {strides = array<i32>} : memref<144x256xbf16, #tpu.memory_space<vmem>>, vector<16x256xbf16>,
      %c0_164 = arith.constant 0 : index
      %c0_165 = arith.constant 0 : index
      %164 = vector.load %arg12[%c0_164, %c0_165] : memref<144x256xbf16, #tpu.memory_space<vmem>>, vector<144x256xbf16>
      %cst_166 = arith.constant dense<0.000000e+00> : vector<16x256xf32>
      %165 = tpu.matmul %8, %164, %cst_166 {dimension_numbers = #tpu.dot_dimension_numbers<[1], [0], [0], [1], [0, 0, 1, 1], [], []>} : vector<16x144xbf16>, vector<144x256xbf16>, vector<16x256xf32> -> vector<16x256xf32>
      %166 = arith.addf %165, %15 : vector<16x256xf32>
      %cst_167 = arith.constant 0.000000e+00 : f32
      %167 = vector.broadcast %cst_167 : f32 to vector<16x256xf32>
      %168 = arith.maximumf %166, %167 : vector<16x256xf32>
      %169 = arith.truncf %168 : vector<16x256xf32> to vector<16x256xbf16>
      %cst_168 = arith.constant dense<0.000000e+00> : vector<6x256xf32>
      %170 = tpu.matmul %9, %169, %cst_168 {dimension_numbers = #tpu.dot_dimension_numbers<[1], [0], [0], [1], [0, 0, 1, 1], [], []>} : vector<6x16xbf16>, vector<16x256xbf16>, vector<6x256xf32> -> vector<6x256xf32>
      %171 = arith.addf %170, %18 : vector<6x256xf32>
      %172 = arith.subf %88, %128 : vector<6x256xf32>
      %173 = arith.addf %172, %171 : vector<6x256xf32>
      %cst_169 = arith.constant 2.500000e-01 : f32
      %174 = vector.broadcast %cst_169 : f32 to vector<6x256xf32>
      %175 = arith.mulf %174, %173 : vector<6x256xf32>
      %176 = arith.addf %arg14, %175 : vector<6x256xf32>
      %177 = arith.truncf %176 : vector<6x256xf32> to vector<6x256xbf16>
      %cst_170 = arith.constant dense<0.000000e+00> : vector<16x256xf32>
      %178 = tpu.matmul %7, %177, %cst_170 {dimension_numbers = #tpu.dot_dimension_numbers<[1], [0], [0], [1], [0, 0, 1, 1], [], []>} : vector<16x6xbf16>, vector<6x256xbf16>, vector<16x256xf32> -> vector<16x256xf32>
      %179 = arith.addf %178, %12 : vector<16x256xf32>
      %cst_171 = arith.constant 0.000000e+00 : f32
      %180 = vector.broadcast %cst_171 : f32 to vector<16x256xf32>
      %181 = arith.maximumf %179, %180 : vector<16x256xf32>
      %182 = arith.truncf %181 : vector<16x256xf32> to vector<16x256xbf16>
      %c0_172 = arith.constant 0 : index
      %c17_173 = arith.constant 17 : index
      %183 = vector.load %arg9[%c0_172, %c17_173] : memref<16x290xbf16, #tpu.memory_space<vmem>>, vector<16x256xbf16>
      tpu.vector_store %arg9[%c0_172, %c17_173], %182 {strides = array<i32>} : memref<16x290xbf16, #tpu.memory_space<vmem>>, vector<16x256xbf16>,
      %184 = arith.mulf %182, %40 : vector<16x256xbf16>
      %c0_174 = arith.constant 0 : index
      %c17_175 = arith.constant 17 : index
      %185 = vector.load %arg10[%c0_174, %c17_175] : memref<16x290xbf16, #tpu.memory_space<vmem>>, vector<16x256xbf16>
      tpu.vector_store %arg10[%c0_174, %c17_175], %184 {strides = array<i32>} : memref<16x290xbf16, #tpu.memory_space<vmem>>, vector<16x256xbf16>,
      %186 = arith.mulf %182, %45 : vector<16x256xbf16>
      %c0_176 = arith.constant 0 : index
      %c17_177 = arith.constant 17 : index
      %187 = vector.load %arg11[%c0_176, %c17_177] : memref<16x290xbf16, #tpu.memory_space<vmem>>, vector<16x256xbf16>
      tpu.vector_store %arg11[%c0_176, %c17_177], %186 {strides = array<i32>} : memref<16x290xbf16, #tpu.memory_space<vmem>>, vector<16x256xbf16>,
      %c0_178 = arith.constant 0 : index
      %c0_179 = arith.constant 0 : index
      %188 = vector.load %arg11[%c0_178, %c0_179] : memref<16x290xbf16, #tpu.memory_space<vmem>>, vector<16x256xbf16>
      %c0_180 = arith.constant 0 : index
      %c0_181 = arith.constant 0 : index
      %189 = vector.load %arg12[%c0_180, %c0_181] : memref<144x256xbf16, #tpu.memory_space<vmem>>, vector<16x256xbf16>
      tpu.vector_store %arg12[%c0_180, %c0_181], %188 {strides = array<i32>} : memref<144x256xbf16, #tpu.memory_space<vmem>>, vector<16x256xbf16>,
      %c0_182 = arith.constant 0 : index
      %c1_183 = arith.constant 1 : index
      %190 = vector.load %arg9[%c0_182, %c1_183] : memref<16x290xbf16, #tpu.memory_space<vmem>>, vector<16x256xbf16>
      %c16_184 = arith.constant 16 : index
      %c0_185 = arith.constant 0 : index
      %191 = vector.load %arg12[%c16_184, %c0_185] : memref<144x256xbf16, #tpu.memory_space<vmem>>, vector<16x256xbf16>
      tpu.vector_store %arg12[%c16_184, %c0_185], %190 {strides = array<i32>} : memref<144x256xbf16, #tpu.memory_space<vmem>>, vector<16x256xbf16>,
      %c0_186 = arith.constant 0 : index
      %c2_187 = arith.constant 2 : index
      %192 = vector.load %arg10[%c0_186, %c2_187] : memref<16x290xbf16, #tpu.memory_space<vmem>>, vector<16x256xbf16>
      %c32_188 = arith.constant 32 : index
      %c0_189 = arith.constant 0 : index
      %193 = vector.load %arg12[%c32_188, %c0_189] : memref<144x256xbf16, #tpu.memory_space<vmem>>, vector<16x256xbf16>
      tpu.vector_store %arg12[%c32_188, %c0_189], %192 {strides = array<i32>} : memref<144x256xbf16, #tpu.memory_space<vmem>>, vector<16x256xbf16>,
      %c0_190 = arith.constant 0 : index
      %c16_191 = arith.constant 16 : index
      %194 = vector.load %arg11[%c0_190, %c16_191] : memref<16x290xbf16, #tpu.memory_space<vmem>>, vector<16x256xbf16>
      %c48_192 = arith.constant 48 : index
      %c0_193 = arith.constant 0 : index
      %195 = vector.load %arg12[%c48_192, %c0_193] : memref<144x256xbf16, #tpu.memory_space<vmem>>, vector<16x256xbf16>
      tpu.vector_store %arg12[%c48_192, %c0_193], %194 {strides = array<i32>} : memref<144x256xbf16, #tpu.memory_space<vmem>>, vector<16x256xbf16>,
      %c0_194 = arith.constant 0 : index
      %c17_195 = arith.constant 17 : index
      %196 = vector.load %arg9[%c0_194, %c17_195] : memref<16x290xbf16, #tpu.memory_space<vmem>>, vector<16x256xbf16>
      %c64_196 = arith.constant 64 : index
      %c0_197 = arith.constant 0 : index
      %197 = vector.load %arg12[%c64_196, %c0_197] : memref<144x256xbf16, #tpu.memory_space<vmem>>, vector<16x256xbf16>
      tpu.vector_store %arg12[%c64_196, %c0_197], %196 {strides = array<i32>} : memref<144x256xbf16, #tpu.memory_space<vmem>>, vector<16x256xbf16>,
      %c0_198 = arith.constant 0 : index
      %c18_199 = arith.constant 18 : index
      %198 = vector.load %arg10[%c0_198, %c18_199] : memref<16x290xbf16, #tpu.memory_space<vmem>>, vector<16x256xbf16>
      %c80_200 = arith.constant 80 : index
      %c0_201 = arith.constant 0 : index
      %199 = vector.load %arg12[%c80_200, %c0_201] : memref<144x256xbf16, #tpu.memory_space<vmem>>, vector<16x256xbf16>
      tpu.vector_store %arg12[%c80_200, %c0_201], %198 {strides = array<i32>} : memref<144x256xbf16, #tpu.memory_space<vmem>>, vector<16x256xbf16>,
      %c0_202 = arith.constant 0 : index
      %c32_203 = arith.constant 32 : index
      %200 = vector.load %arg11[%c0_202, %c32_203] : memref<16x290xbf16, #tpu.memory_space<vmem>>, vector<16x256xbf16>
      %c96_204 = arith.constant 96 : index
      %c0_205 = arith.constant 0 : index
      %201 = vector.load %arg12[%c96_204, %c0_205] : memref<144x256xbf16, #tpu.memory_space<vmem>>, vector<16x256xbf16>
      tpu.vector_store %arg12[%c96_204, %c0_205], %200 {strides = array<i32>} : memref<144x256xbf16, #tpu.memory_space<vmem>>, vector<16x256xbf16>,
      %c0_206 = arith.constant 0 : index
      %c33_207 = arith.constant 33 : index
      %202 = vector.load %arg9[%c0_206, %c33_207] : memref<16x290xbf16, #tpu.memory_space<vmem>>, vector<16x256xbf16>
      %c112_208 = arith.constant 112 : index
      %c0_209 = arith.constant 0 : index
      %203 = vector.load %arg12[%c112_208, %c0_209] : memref<144x256xbf16, #tpu.memory_space<vmem>>, vector<16x256xbf16>
      tpu.vector_store %arg12[%c112_208, %c0_209], %202 {strides = array<i32>} : memref<144x256xbf16, #tpu.memory_space<vmem>>, vector<16x256xbf16>,
      %c0_210 = arith.constant 0 : index
      %c34_211 = arith.constant 34 : index
      %204 = vector.load %arg10[%c0_210, %c34_211] : memref<16x290xbf16, #tpu.memory_space<vmem>>, vector<16x256xbf16>
      %c128_212 = arith.constant 128 : index
      %c0_213 = arith.constant 0 : index
      %205 = vector.load %arg12[%c128_212, %c0_213] : memref<144x256xbf16, #tpu.memory_space<vmem>>, vector<16x256xbf16>
      tpu.vector_store %arg12[%c128_212, %c0_213], %204 {strides = array<i32>} : memref<144x256xbf16, #tpu.memory_space<vmem>>, vector<16x256xbf16>,
      %c0_214 = arith.constant 0 : index
      %c0_215 = arith.constant 0 : index
      %206 = vector.load %arg12[%c0_214, %c0_215] : memref<144x256xbf16, #tpu.memory_space<vmem>>, vector<144x256xbf16>
      %cst_216 = arith.constant dense<0.000000e+00> : vector<16x256xf32>
      %207 = tpu.matmul %8, %206, %cst_216 {dimension_numbers = #tpu.dot_dimension_numbers<[1], [0], [0], [1], [0, 0, 1, 1], [], []>} : vector<16x144xbf16>, vector<144x256xbf16>, vector<16x256xf32> -> vector<16x256xf32>
      %208 = arith.addf %207, %15 : vector<16x256xf32>
      %cst_217 = arith.constant 0.000000e+00 : f32
      %209 = vector.broadcast %cst_217 : f32 to vector<16x256xf32>
      %210 = arith.maximumf %208, %209 : vector<16x256xf32>
      %211 = arith.truncf %210 : vector<16x256xf32> to vector<16x256xbf16>
      %cst_218 = arith.constant dense<0.000000e+00> : vector<6x256xf32>
      %212 = tpu.matmul %9, %211, %cst_218 {dimension_numbers = #tpu.dot_dimension_numbers<[1], [0], [0], [1], [0, 0, 1, 1], [], []>} : vector<6x16xbf16>, vector<16x256xbf16>, vector<6x256xf32> -> vector<6x256xf32>
      %213 = arith.addf %212, %18 : vector<6x256xf32>
      %214 = arith.addf %128, %171 : vector<6x256xf32>
      %cst_219 = arith.constant 3.000000e+00 : f32
      %215 = vector.broadcast %cst_219 : f32 to vector<6x256xf32>
      %216 = arith.mulf %215, %214 : vector<6x256xf32>
      %217 = arith.addf %88, %216 : vector<6x256xf32>
      %218 = arith.addf %217, %213 : vector<6x256xf32>
      %cst_220 = arith.constant 3.125000e-02 : f32
      %219 = vector.broadcast %cst_220 : f32 to vector<6x256xf32>
      %220 = arith.mulf %219, %218 : vector<6x256xf32>
      %221 = arith.addf %arg14, %220 : vector<6x256xf32>
      scf.yield %221 : vector<6x256xf32>
    }
    %c0_31 = arith.constant 0 : index
    %c0_32 = arith.constant 0 : index
    %51 = vector.load %arg8[%c0_31, %c0_32] : memref<6x256xf32, #tpu.memory_space<vmem>>, vector<6x256xf32>
    tpu.vector_store %arg8[%c0_31, %c0_32], %50 {strides = array<i32>} : memref<6x256xf32, #tpu.memory_space<vmem>>, vector<6x256xf32>,
    return
  }
  func.func @transform_0(%arg0: i32) -> (i32, i32) {
    %c0_i32 = arith.constant 0 : i32
    %c0_i32_0 = arith.constant 0 : i32
    return %c0_i32, %arg0 : i32, i32
  }
  func.func @transform_1(%arg0: i32) -> (i32, i32) {
    %c0_i32 = arith.constant 0 : i32
    %c0_i32_0 = arith.constant 0 : i32
    %c0_i32_1 = arith.constant 0 : i32
    return %c0_i32, %c0_i32_0 : i32, i32
  }
  func.func @transform_2(%arg0: i32) -> (i32, i32) {
    %c0_i32 = arith.constant 0 : i32
    %c0_i32_0 = arith.constant 0 : i32
    %c0_i32_1 = arith.constant 0 : i32
    return %c0_i32, %c0_i32_0 : i32, i32
  }
  func.func @transform_3(%arg0: i32) -> (i32, i32) {
    %c0_i32 = arith.constant 0 : i32
    %c0_i32_0 = arith.constant 0 : i32
    %c0_i32_1 = arith.constant 0 : i32
    return %c0_i32, %c0_i32_0 : i32, i32
  }
  func.func @transform_4(%arg0: i32) -> (i32, i32) {
    %c0_i32 = arith.constant 0 : i32
    %c0_i32_0 = arith.constant 0 : i32
    %c0_i32_1 = arith.constant 0 : i32
    return %c0_i32, %c0_i32_0 : i32, i32
  }
  func.func @transform_5(%arg0: i32) -> (i32, i32) {
    %c0_i32 = arith.constant 0 : i32
    %c0_i32_0 = arith.constant 0 : i32
    %c0_i32_1 = arith.constant 0 : i32
    return %c0_i32, %c0_i32_0 : i32, i32
  }
  func.func @transform_6(%arg0: i32) -> (i32, i32) {
    %c0_i32 = arith.constant 0 : i32
    %c0_i32_0 = arith.constant 0 : i32
    %c0_i32_1 = arith.constant 0 : i32
    return %c0_i32, %c0_i32_0 : i32, i32
  }
  func.func @transform_7(%arg0: i32) -> (i32, i32) {
    %c0_i32 = arith.constant 0 : i32
    %c0_i32_0 = arith.constant 0 : i32
    return %c0_i32, %arg0 : i32, i32
  }
}

</mosaic_0001>

<llo_original>
// kernel: tpu_custom_call.1
$region0: #{tpu_custom_call.1}
  #allocation0 [shape = 'u32[]', space=smem, size = 0x4, offset = 0x4, fixed_abs, tag = 'smem constant byte address 0x4 - core index']
  #allocation1 [shape = 'u32[144,128]{1,0:T(1,128)}', space=vmem, size = 0x12000, scoped, tag = 'internal scratch']
  #allocation2 [shape = 'bf16[16,290]{1,0:T(8,128)(2,1)}', space=vmem, size = 0x3000, scoped, tag = 'scratch operand']
  #allocation3 [shape = 'bf16[16,290]{1,0:T(8,128)(2,1)}', space=vmem, size = 0x3000, scoped, tag = 'scratch operand']
  #allocation4 [shape = 'bf16[16,290]{1,0:T(8,128)(2,1)}', space=vmem, size = 0x3000, scoped, tag = 'scratch operand']
  #allocation5 [shape = 'bf16[144,256]{1,0:T(8,128)(2,1)}', space=vmem, size = 0x12000, scoped, tag = 'scratch operand']
  %s0 = inlined_call_operand.vmem [shape: f32[4,512], index: 0, kind: input, shape index: {}]
  %s1 = inlined_call_operand.vmem [shape: bf16[16,6], index: 1, kind: input, shape index: {}]
  %s2 = inlined_call_operand.vmem [shape: f32[16,1], index: 2, kind: input, shape index: {}]
  %s3 = inlined_call_operand.vmem [shape: bf16[16,144], index: 3, kind: input, shape index: {}]
  %s4 = inlined_call_operand.vmem [shape: f32[16,1], index: 4, kind: input, shape index: {}]
  %s5 = inlined_call_operand.vmem [shape: bf16[6,16], index: 5, kind: input, shape index: {}]
  %s6 = inlined_call_operand.vmem [shape: f32[6,1], index: 6, kind: input, shape index: {}]
  %s7 = inlined_call_operand.hbm [shape: f32[6,512], index: 7, kind: output, shape index: {}]
  %s8 = sld [smem:[#allocation0]]
  $region68: #{tpu_custom_call.1} parent=0
    _
  %s10 = ssub.s32 1, %s8
  %s11 = scalar_select 0, %s10, %s8
  $region1: #{tpu_custom_call.1} parent=0
    #allocation6 [shape = 'u8[16384]{0}', space=vmem, size = 0x4000, scoped, tag = 'output window, operand 0']
    #allocation7 [shape = 's32[2]{0}', space=sflag, size = 0x8, scoped, tag = 'scoped memory for tpu_custom_call.1']
    %12 = vsyncpa [#allocation7], 0
    %s13 = scalar_lea.sflag [#allocation7], 1
    %14 = vsyncpa %s13, 0
    loop: start=0, step=1, limit=4
    $region2: #{tpu_custom_call.1} parent=1 // loop_pre_header
      _
    $region3: #{tpu_custom_call.1} parent=1 // loop_header
      %s16 = sphi 0, %s20
      %p17 = scmp.ge.s32.totalorder %s16, 4
      %s26 = sphi 0, %s28
      %s29 = sphi 0, %s26
      %s30 = sphi 0, %s29
      %s46 = sphi 0, %s30
      %s50 = sphi 0, %s50
      %s52 = sphi 0, %s50
      %s53 = sphi 0, %s52
      %s67 = sphi 0, %s53
      %s71 = sphi 0, %s71
      %s73 = sphi 0, %s71
      %s74 = sphi 0, %s73
      %s88 = sphi 0, %s74
      %s92 = sphi 0, %s92
      %s94 = sphi 0, %s92
      %s95 = sphi 0, %s94
      %s109 = sphi 0, %s95
      %s113 = sphi 0, %s113
      %s115 = sphi 0, %s113
      %s116 = sphi 0, %s115
      %s130 = sphi 0, %s116
      %s134 = sphi 0, %s134
      %s136 = sphi 0, %s134
      %s137 = sphi 0, %s136
      %s151 = sphi 0, %s137
      %s155 = sphi 0, %s155
      %s157 = sphi 0, %s155
      %s158 = sphi 0, %s157
      %s172 = sphi 0, %s158
      %s178 = sphi 0, %s180
      %s181 = sphi 0, %s178
      %s182 = sphi 0, %s181
      %s198 = sphi 0, %s182
    $region4: #{tpu_custom_call.1} parent=1 // loop_header_branch
      %19 = sbr.rel (%p17) target = $region8
    $region5: #{tpu_custom_call.1} parent=1 // loop_body
      %s21 = ssub.s32 %s16, 1
      %s22 = ssub.s32 %s16, 2
      %s23 = sadd.s32 %s16, 1
      %s24 = ssub.s32 %s16, %s23
      %p25 = scmp.eq.s32.totalorder %s24, 0
      %s27 = sadd.s32 %s26, 1
      %s28 = scalar_select %p25, %s26, %s27
      %p31 = pneg %p25
      %p32 = scmp.eq.s32.totalorder %s16, 1
      %p33 = por %p31, %p32
      %p34 = scmp.ne.s32.totalorder %s26, %s29
      %p35 = scmp.eq.s32.totalorder %s16, 0
      %p36 = por %p34, %p35
      %p37 = scmp.ne.s32.totalorder %s26, %s29
      %p38 = scmp.eq.s32.totalorder %s21, 1
      %p39 = por %p37, %p38
      %p40 = scmp.ne.s32.totalorder %s29, %s30
      %p41 = scmp.eq.s32.totalorder %s21, 0
      %p42 = por %p40, %p41
      %p43 = scmp.ne.s32.totalorder %s29, %s30
      %p44 = scmp.eq.s32.totalorder %s22, 1
      %p45 = por %p43, %p44
      %p47 = scmp.ne.s32.totalorder %s30, %s46
      %p48 = scmp.eq.s32.totalorder %s22, 0
      %p49 = por %p47, %p48
      %s51 = sadd.s32 %s50, 1
      %p54 = scmp.eq.s32.totalorder %s16, 1
      %p55 = scmp.ne.s32.totalorder %s50, %s52
      %p56 = scmp.eq.s32.totalorder %s16, 0
      %p57 = por %p55, %p56
      %p58 = scmp.ne.s32.totalorder %s50, %s52
      %p59 = scmp.eq.s32.totalorder %s21, 1
      %p60 = por %p58, %p59
      %p61 = scmp.ne.s32.totalorder %s52, %s53
      %p62 = scmp.eq.s32.totalorder %s21, 0
      %p63 = por %p61, %p62
      %p64 = scmp.ne.s32.totalorder %s52, %s53
      %p65 = scmp.eq.s32.totalorder %s22, 1
      %p66 = por %p64, %p65
      %p68 = scmp.ne.s32.totalorder %s53, %s67
      %p69 = scmp.eq.s32.totalorder %s22, 0
      %p70 = por %p68, %p69
      %s72 = sadd.s32 %s71, 1
      %p75 = scmp.eq.s32.totalorder %s16, 1
      %p76 = scmp.ne.s32.totalorder %s71, %s73
      %p77 = scmp.eq.s32.totalorder %s16, 0
      %p78 = por %p76, %p77
      %p79 = scmp.ne.s32.totalorder %s71, %s73
      %p80 = scmp.eq.s32.totalorder %s21, 1
      %p81 = por %p79, %p80
      %p82 = scmp.ne.s32.totalorder %s73, %s74
      %p83 = scmp.eq.s32.totalorder %s21, 0
      %p84 = por %p82, %p83
      %p85 = scmp.ne.s32.totalorder %s73, %s74
      %p86 = scmp.eq.s32.totalorder %s22, 1
      %p87 = por %p85, %p86
      %p89 = scmp.ne.s32.totalorder %s74, %s88
      %p90 = scmp.eq.s32.totalorder %s22, 0
      %p91 = por %p89, %p90
      %s93 = sadd.s32 %s92, 1
      %p96 = scmp.eq.s32.totalorder %s16, 1
      %p97 = scmp.ne.s32.totalorder %s92, %s94
      %p98 = scmp.eq.s32.totalorder %s16, 0
      %p99 = por %p97, %p98
      %p100 = scmp.ne.s32.totalorder %s92, %s94
      %p101 = scmp.eq.s32.totalorder %s21, 1
      %p102 = por %p100, %p101
      %p103 = scmp.ne.s32.totalorder %s94, %s95
      %p104 = scmp.eq.s32.totalorder %s21, 0
      %p105 = por %p103, %p104
      %p106 = scmp.ne.s32.totalorder %s94, %s95
      %p107 = scmp.eq.s32.totalorder %s22, 1
      %p108 = por %p106, %p107
      %p110 = scmp.ne.s32.totalorder %s95, %s109
      %p111 = scmp.eq.s32.totalorder %s22, 0
      %p112 = por %p110, %p111
      %s114 = sadd.s32 %s113, 1
      %p117 = scmp.eq.s32.totalorder %s16, 1
      %p118 = scmp.ne.s32.totalorder %s113, %s115
      %p119 = scmp.eq.s32.totalorder %s16, 0
      %p120 = por %p118, %p119
      %p121 = scmp.ne.s32.totalorder %s113, %s115
      %p122 = scmp.eq.s32.totalorder %s21, 1
      %p123 = por %p121, %p122
      %p124 = scmp.ne.s32.totalorder %s115, %s116
      %p125 = scmp.eq.s32.totalorder %s21, 0
      %p126 = por %p124, %p125
      %p127 = scmp.ne.s32.totalorder %s115, %s116
      %p128 = scmp.eq.s32.totalorder %s22, 1
      %p129 = por %p127, %p128
      %p131 = scmp.ne.s32.totalorder %s116, %s130
      %p132 = scmp.eq.s32.totalorder %s22, 0
      %p133 = por %p131, %p132
      %s135 = sadd.s32 %s134, 1
      %p138 = scmp.eq.s32.totalorder %s16, 1
      %p139 = scmp.ne.s32.totalorder %s134, %s136
      %p140 = scmp.eq.s32.totalorder %s16, 0
      %p141 = por %p139, %p140
      %p142 = scmp.ne.s32.totalorder %s134, %s136
      %p143 = scmp.eq.s32.totalorder %s21, 1
      %p144 = por %p142, %p143
      %p145 = scmp.ne.s32.totalorder %s136, %s137
      %p146 = scmp.eq.s32.totalorder %s21, 0
      %p147 = por %p145, %p146
      %p148 = scmp.ne.s32.totalorder %s136, %s137
      %p149 = scmp.eq.s32.totalorder %s22, 1
      %p150 = por %p148, %p149
      %p152 = scmp.ne.s32.totalorder %s137, %s151
      %p153 = scmp.eq.s32.totalorder %s22, 0
      %p154 = por %p152, %p153
      %s156 = sadd.s32 %s155, 1
      %p159 = scmp.eq.s32.totalorder %s16, 1
      %p160 = scmp.ne.s32.totalorder %s155, %s157
      %p161 = scmp.eq.s32.totalorder %s16, 0
      %p162 = por %p160, %p161
      %p163 = scmp.ne.s32.totalorder %s155, %s157
      %p164 = scmp.eq.s32.totalorder %s21, 1
      %p165 = por %p163, %p164
      %p166 = scmp.ne.s32.totalorder %s157, %s158
      %p167 = scmp.eq.s32.totalorder %s21, 0
      %p168 = por %p166, %p167
      %p169 = scmp.ne.s32.totalorder %s157, %s158
      %p170 = scmp.eq.s32.totalorder %s22, 1
      %p171 = por %p169, %p170
      %p173 = scmp.ne.s32.totalorder %s158, %s172
      %p174 = scmp.eq.s32.totalorder %s22, 0
      %p175 = por %p173, %p174
      %s176 = ssub.s32 %s16, %s23
      %p177 = scmp.eq.s32.totalorder %s176, 0
      %s179 = sadd.s32 %s178, 1
      %s180 = scalar_select %p177, %s178, %s179
      %p183 = pneg %p177
      %p184 = scmp.eq.s32.totalorder %s16, 1
      %p185 = por %p183, %p184
      %p186 = scmp.ne.s32.totalorder %s178, %s181
      %p187 = scmp.eq.s32.totalorder %s16, 0
      %p188 = por %p186, %p187
      %p189 = scmp.ne.s32.totalorder %s178, %s181
      %p190 = scmp.eq.s32.totalorder %s21, 1
      %p191 = por %p189, %p190
      %p192 = scmp.ne.s32.totalorder %s181, %s182
      %p193 = scmp.eq.s32.totalorder %s21, 0
      %p194 = por %p192, %p193
      %p195 = scmp.ne.s32.totalorder %s181, %s182
      %p196 = scmp.eq.s32.totalorder %s22, 1
      %p197 = por %p195, %p196
      %p199 = scmp.ne.s32.totalorder %s182, %s198
      %p200 = scmp.eq.s32.totalorder %s22, 0
      %p201 = por %p199, %p200
      %p202 = scmp.le.s32.totalorder 1, %s16
      %p203 = scmp.lt.s32.totalorder %s16, 3
      %p204 = pnand %p202, %p203
      %p205 = pneg %p204
      // Predicated region
      $region9: #{tpu_custom_call.1} parent=5 // pred_check
        _
      $region10: #{tpu_custom_call.1} parent=5 // pred_check_branch
        %207 = sbr.rel (%p204) target = $region12
      $region11: #{tpu_custom_call.1} parent=5 // pred_region
        %s208 = ssub.s32 %s16, 1
        // Predicated region
        $region13: #{tpu_custom_call.1} parent=11 // pred_check
          %p209 = pneg %p63
        $region14: #{tpu_custom_call.1} parent=11 // pred_check_branch
          %211 = sbr.rel (%p209) target = $region16
        $region15: #{tpu_custom_call.1} parent=11 // pred_region
          _
        $region16: #{tpu_custom_call.1} parent=11 // pred_fallthru
          _
        // Predicated region
        $region17: #{tpu_custom_call.1} parent=11 // pred_check
          %p212 = pneg %p84
        $region18: #{tpu_custom_call.1} parent=11 // pred_check_branch
          %214 = sbr.rel (%p212) target = $region20
        $region19: #{tpu_custom_call.1} parent=11 // pred_region
          _
        $region20: #{tpu_custom_call.1} parent=11 // pred_fallthru
          _
        // Predicated region
        $region21: #{tpu_custom_call.1} parent=11 // pred_check
          %p215 = pneg %p105
        $region22: #{tpu_custom_call.1} parent=11 // pred_check_branch
          %217 = sbr.rel (%p215) target = $region24
        $region23: #{tpu_custom_call.1} parent=11 // pred_region
          _
        $region24: #{tpu_custom_call.1} parent=11 // pred_fallthru
          _
        // Predicated region
        $region25: #{tpu_custom_call.1} parent=11 // pred_check
          %p218 = pneg %p126
        $region26: #{tpu_custom_call.1} parent=11 // pred_check_branch
          %220 = sbr.rel (%p218) target = $region28
        $region27: #{tpu_custom_call.1} parent=11 // pred_region
          _
        $region28: #{tpu_custom_call.1} parent=11 // pred_fallthru
          _
        // Predicated region
        $region29: #{tpu_custom_call.1} parent=11 // pred_check
          %p221 = pneg %p147
        $region30: #{tpu_custom_call.1} parent=11 // pred_check_branch
          %223 = sbr.rel (%p221) target = $region32
        $region31: #{tpu_custom_call.1} parent=11 // pred_region
          _
        $region32: #{tpu_custom_call.1} parent=11 // pred_fallthru
          _
        // Predicated region
        $region33: #{tpu_custom_call.1} parent=11 // pred_check
          %p224 = pneg %p168
        $region34: #{tpu_custom_call.1} parent=11 // pred_check_branch
          %226 = sbr.rel (%p224) target = $region36
        $region35: #{tpu_custom_call.1} parent=11 // pred_region
          _
        $region36: #{tpu_custom_call.1} parent=11 // pred_fallthru
          _
      $region12: #{tpu_custom_call.1} parent=5 // pred_fallthru
        _
      %p227 = scmp.lt.s32.totalorder %s16, 2
      // Predicated region
      $region37: #{tpu_custom_call.1} parent=5 // pred_check
        %p228 = pneg %p227
      $region38: #{tpu_custom_call.1} parent=5 // pred_check_branch
        %230 = sbr.rel (%p228) target = $region40
      $region39: #{tpu_custom_call.1} parent=5 // pred_region
        // Predicated region
        $region41: #{tpu_custom_call.1} parent=39 // pred_check
          %p231 = pneg %p36
        $region42: #{tpu_custom_call.1} parent=39 // pred_check_branch
          %233 = sbr.rel (%p231) target = $region44
        $region43: #{tpu_custom_call.1} parent=39 // pred_region
          %s234 = smul.u32 2, %s16
          %p235 = scmp.lt.s32.totalorder %s234, 3
          %s236 = scalar_select %p235, %s234, 3
          %s237 = smul.addr %s236, 4
          %s238 = scalar_lea.vmem %s0, %s237
          %s239 = smul.u32 2, %s16
        $region44: #{tpu_custom_call.1} parent=39 // pred_fallthru
          _
      $region40: #{tpu_custom_call.1} parent=5 // pred_fallthru
        _
      %p240 = scmp.le.s32.totalorder 1, %s16
      %p241 = scmp.lt.s32.totalorder %s16, 3
      %p242 = pnand %p240, %p241
      %p243 = pneg %p242
      // Predicated region
      $region45: #{tpu_custom_call.1} parent=5 // pred_check
        _
      $region46: #{tpu_custom_call.1} parent=5 // pred_check_branch
        %245 = sbr.rel (%p242) target = $region48
      $region47: #{tpu_custom_call.1} parent=5 // pred_region
        %s246 = ssub.s32 %s16, 1
        %s247 = smul.u32 2, %s21
        %p248 = scmp.lt.s32.totalorder %s247, 3
        %s249 = scalar_select %p248, %s247, 3
        %s250 = smul.addr %s249, 4
        %s251 = scalar_lea.vmem %s0, %s250
        %p252 = pneg %p42
        %p253 = pneg %p39
        %p254 = pneg %p63
        %p255 = pneg %p60
        %p256 = pneg %p84
        %p257 = pneg %p81
        %p258 = pneg %p105
        %p259 = pneg %p102
        %p260 = pneg %p126
        %p261 = pneg %p123
        %p262 = pneg %p147
        %p263 = pneg %p144
        %p264 = pneg %p168
        %p265 = pneg %p165
        %p266 = pneg %p194
        %p267 = pneg %p191
        %s268 = sand.u32 %s181, 1
        %s269 = scalar_lea.sflag [#allocation7], %s268
        %s270 = sand.u32 %s181, 1
        %s271 = smul.addr %s270, 16
        %s272 = scalar_lea.vmem [#allocation6], %s271
        %s273 = smul.u32 2, %s21
        %p274 = scmp.lt.s32.totalorder %s273, 3
        %s275 = scalar_select %p274, %s273, 3
        %s276 = smul.addr %s275, 4
        %s277 = scalar_lea.vmem %s0, %s276
        %s278 = smul.u32 2, %s21
        %s279 = smul.u32 2, %s21
        %vm281 = vcmask 134144
        %282 = vst.msk [vmem:[#allocation2] sm:$0xf] %vm281, 0
        %283 = vst.msk [vmem:[#allocation2 + $0xc] sm:$0xf] %vm281, 0
        %vm284 = vcmask 273544
        %285 = vst.msk [vmem:[#allocation2 + $0x8] sm:$0xf] %vm284, 0
        %286 = vst.msk [vmem:[#allocation2 + $0x14] sm:$0xf] %vm284, 0
        %287 = vst.msk [vmem:[#allocation3] sm:$0xf] %vm281, 0
        %288 = vst.msk [vmem:[#allocation3 + $0xc] sm:$0xf] %vm281, 0
        %289 = vst.msk [vmem:[#allocation3 + $0x8] sm:$0xf] %vm284, 0
        %290 = vst.msk [vmem:[#allocation3 + $0x14] sm:$0xf] %vm284, 0
        %291 = vst.msk [vmem:[#allocation4] sm:$0xf] %vm281, 0
        %292 = vst.msk [vmem:[#allocation4 + $0xc] sm:$0xf] %vm281, 0
        %293 = vst.msk [vmem:[#allocation4 + $0x8] sm:$0xf] %vm284, 0
        %294 = vst.msk [vmem:[#allocation4 + $0x14] sm:$0xf] %vm284, 0
        %v295 = vld [vmem:[%s1] sm:$0xf]
        %v296 = vld [vmem:[%s1 + $0x4] sm:$0xf]
        %v297 = vld [vmem:[%s3] sm:$0xff]
        %v298 = vld [vmem:[%s3 + $0x8] sm:$0xff]
        %v299 = vld [vmem:[%s5] sm:$0x7]
        %v300 = vld [vmem:[%s2] sm:$0xff]
        %v301 = vld [vmem:[%s2 + $0x8] sm:$0xff]
        %303 = vset.pattern.permute.xlu0 0
        %304 = vperm.xlu0 %303, %v300
        %v305 = vpop.permute.xlu0 %304
        %308 = vset.pattern.permute.xlu0 0
        %309 = vperm.xlu0 %308, %v301
        %v310 = vpop.permute.xlu0 %309
        %v312 = vld [vmem:[%s4] sm:$0xff]
        %v313 = vld [vmem:[%s4 + $0x8] sm:$0xff]
        %315 = vset.pattern.permute.xlu0 0
        %316 = vperm.xlu0 %315, %v312
        %v317 = vpop.permute.xlu0 %316
        %320 = vset.pattern.permute.xlu0 0
        %321 = vperm.xlu0 %320, %v313
        %v322 = vpop.permute.xlu0 %321
        %v324 = vld [vmem:[%s6] sm:$0x3f]
        %326 = vset.pattern.permute.xlu0 0
        %327 = vperm.xlu0 %326, %v324
        %v328 = vpop.permute.xlu0 %327
        %v330 = vlaneseq
        %v331 = vand.u32 %v330, 127
        %v332 = vadd.s32 %v331, 128
        %vm333 = vcmp.lt.s32.totalorder %v331, 0
        %v334 = vsub.s32 0, %v331
        %v335 = vsel %vm333, %v334, %v331
        %v336 = vshrl.u32 %v335, 4
        %v337 = vand.u32 %v335, 15
        %v338 = vsub.s32 0, %v337
        %v339 = vsel %vm333, %v338, %v337
        %vm340 = vcmp.lt.s32.totalorder %v332, 0
        %v341 = vsub.s32 0, %v332
        %v342 = vsel %vm340, %v341, %v332
        %v343 = vshrl.u32 %v342, 4
        %v344 = vand.u32 %v342, 15
        %v345 = vsub.s32 0, %v344
        %v346 = vsel %vm340, %v345, %v344
        %vm347 = vcmp.ne.s32.totalorder %v339, 0
        %vm348 = vcmp.ne.s32.totalorder %v346, 0
        %vm349 = vcmp.lt.s32.totalorder %v339, 0
        %vm350 = vcmp.lt.s32.totalorder %v346, 0
        %vm351 = vmand %vm349, %vm347
        %vm352 = vmand %vm350, %vm348
        %v353 = vadd.s32 %v339, 16
        %v354 = vadd.s32 %v346, 16
        %v355 = vsel %vm351, %v353, %v339
        %v356 = vsel %vm352, %v354, %v346
        %vm357 = vcmp.ne.s32.totalorder %v355, 0
        %vm358 = vcmp.ne.s32.totalorder %v356, 0
        %v359 = vsel %vm357, 1, 0
        %v360 = vsel %vm358, 1, 0
        %v361 = vcvt.s32.f32 %v359
        %v362 = vcvt.s32.f32 %v360
        %v363 = vpack.c.bf16 %v361, %v361
        %v364 = vpack.c.bf16 %v362, %v362
        %vm365 = vcmp.ne.s32.totalorder %v355, 15
        %vm366 = vcmp.ne.s32.totalorder %v356, 15
        %v367 = vsel %vm365, 1, 0
        %v368 = vsel %vm366, 1, 0
        %v369 = vcvt.s32.f32 %v367
        %v370 = vcvt.s32.f32 %v368
        %v371 = vpack.c.bf16 %v369, %v369
        %v372 = vpack.c.bf16 %v370, %v370
        %v373 = vld [vmem:[%s277] sm:$0xff]
        %v375 = vcombine.high %v373, %v373
        %vm377 = vcmask 1043456
        %v378 = vsel %vm377, %v373, 0.0
        %v379 = vsel %vm377, %v375, 0.0
        loop: start=0, step=1, limit=4
        $region49: #{tpu_custom_call.1} parent=47 // loop_pre_header
          _
        $region50: #{tpu_custom_call.1} parent=47 // loop_header
          %s381 = sphi 0, %s385
          %p382 = scmp.ge.s32.totalorder %s381, 4
          %v386 = vphi %v378, %v2693
          %v387 = vphi %v379, %v2694
        $region51: #{tpu_custom_call.1} parent=47 // loop_header_branch
          %384 = sbr.rel (%p382) target = $region55
        $region52: #{tpu_custom_call.1} parent=47 // loop_body
          %v388 = vpack.c.bf16 %v386, %v386
          %v389 = vpack.c.bf16 %v387, %v387
          %v392 = vunpack.c.l.b16 %v295
          %v393 = vunpack.c.l.b16 %v296
          %v394 = vpack.c.b16 %v393, %v392
          %vm395 = vcmask 48128
          %v397 = vsel %vm395, %v394, 0
          %vm399 = vcmask 1042432
          %v401 = vsel %vm399, %v388, 0
          %v404 = vsel %vm399, %v389, 0
          %406 = vmatprep.subr.bf16.mxu0 0
          %407 = vmatpush1.bf16.msra.mxu0 0
          %408 = vmatprep.subr.bf16.mxu0 0
          %409 = vmatpush1.bf16.msra.mxu0 0
          %410 = vmatprep.subr.bf16.mxu0 0
          %411 = vmatpush1.bf16.msra.mxu0 0
          %412 = vmatprep.subr.bf16.mxu0 0
          %413 = vmatpush1.bf16.msra.mxu0 0
          %414 = vmatprep.subr.bf16.mxu0 0
          %415 = vmatpush1.bf16.msra.mxu0 0
          %416 = vmatprep.subr.bf16.mxu0 0
          %417 = vmatpush1.bf16.msra.mxu0 0
          %418 = vmatprep.subr.bf16.mxu0 0
          %419 = vmatpush1.bf16.msra.mxu0 0
          %420 = vmatprep.subr.bf16.mxu0 %v404
          %421 = vmatpush1.bf16.msra.mxu0 %v401
          %422 = vmatprep.subr.bf16.mxu0 0
          %423 = vmatpush2.bf16.msra.mxu0 0
          %424 = vmatprep.subr.bf16.mxu0 0
          %425 = vmatpush2.bf16.msra.mxu0 0
          %426 = vmatprep.subr.bf16.mxu0 0
          %427 = vmatpush2.bf16.msra.mxu0 0
          %428 = vmatprep.subr.bf16.mxu0 0
          %429 = vmatpush2.bf16.msra.mxu0 0
          %430 = vmatprep.subr.bf16.mxu0 0
          %431 = vmatpush2.bf16.msra.mxu0 0
          %432 = vmatprep.subr.bf16.mxu0 0
          %433 = vmatpush2.bf16.msra.mxu0 0
          %434 = vmatprep.subr.bf16.mxu0 0
          %435 = vmatpush2.bf16.msra.mxu0 0
          %436 = vmatprep.subr.bf16.mxu0 0
          %437 = vmatpush2.bf16.msra.mxu0 0
          %438 = vmatprep.mubr.bf16.mxu0 0
          %439 = vmatmul.mubr.bf16.gmra.mxu0 %v397
          %v440 = vpop.f32.mrf.mxu0
          %v441 = vadd.f32 %v305, %v440
          %v442 = vpop.f32.mrf.mxu0
          %v443 = vadd.f32 %v305, %v442
          %v444 = vpop.f32.mrf.mxu0
          %v445 = vadd.f32 %v310, %v444
          %v446 = vpop.f32.mrf.mxu0
          %v447 = vadd.f32 %v310, %v446
          %448 = vdwg.mxu0
          %v449 = vmax.f32 %v441, 0.0
          %v450 = vmax.f32 %v443, 0.0
          %v451 = vmax.f32 %v445, 0.0
          %v452 = vmax.f32 %v447, 0.0
          %v453 = vpack.c.bf16 %v451, %v449
          %v454 = vpack.c.bf16 %v452, %v450
          %v457 = vunpack.c.l.b16 %v453
          %v458 = vunpack.c.l.b16 %v454
          %v459 = vunpack.c.h.b16 %v453
          %v460 = vunpack.c.h.b16 %v454
          %v461 = vpack.c.b16 %v458, %v457
          %v462 = vpack.c.b16 %v460, %v459
          %463 = vrot.lane.b32.xlu0 %v461, 17
          %v464 = vpop.permute.xlu0 %463
          %465 = vrot.lane.b32.xlu0 %v462, 17
          %v466 = vpop.permute.xlu0 %465
          %v467 = vrot.slane %v464, 4
          %v468 = vrot.slane %v466, 4
          %vm469 = vcmask 138240
          %v470 = vsel %vm469, %v467, %v464
          %v471 = vsel %vm469, %v468, %v466
          %vm476 = vcmask 1043592
          %vm477 = vcmask 1047556
          %vm478 = vmor %vm477, %vm476
          %479 = vst.msk [vmem:[#allocation2] sm:$0xff] %vm478, %v470
          %480 = vst.msk [vmem:[#allocation2 + $0x8] sm:$0xf] %vm281, %v467
          %481 = vst.msk [vmem:[#allocation2 + $0xc] sm:$0xff] %vm478, %v471
          %482 = vst.msk [vmem:[#allocation2 + $0x14] sm:$0xf] %vm281, %v468
          %v483 = vmul.bf16 %v453, %v363
          %v484 = vmul.bf16 %v454, %v364
          %v487 = vunpack.c.l.b16 %v483
          %v488 = vunpack.c.l.b16 %v484
          %v489 = vunpack.c.h.b16 %v483
          %v490 = vunpack.c.h.b16 %v484
          %v491 = vpack.c.b16 %v488, %v487
          %v492 = vpack.c.b16 %v490, %v489
          %493 = vrot.lane.b32.xlu0 %v491, 17
          %v494 = vpop.permute.xlu0 %493
          %495 = vrot.lane.b32.xlu0 %v492, 17
          %v496 = vpop.permute.xlu0 %495
          %v497 = vrot.slane %v494, 4
          %v498 = vrot.slane %v496, 4
          %v499 = vsel %vm469, %v497, %v494
          %v500 = vsel %vm469, %v498, %v496
          %505 = vst.msk [vmem:[#allocation3] sm:$0xff] %vm478, %v499
          %506 = vst.msk [vmem:[#allocation3 + $0x8] sm:$0xf] %vm281, %v497
          %507 = vst.msk [vmem:[#allocation3 + $0xc] sm:$0xff] %vm478, %v500
          %508 = vst.msk [vmem:[#allocation3 + $0x14] sm:$0xf] %vm281, %v498
          %v509 = vmul.bf16 %v453, %v371
          %v510 = vmul.bf16 %v454, %v372
          %v513 = vunpack.c.l.b16 %v509
          %v514 = vunpack.c.l.b16 %v510
          %v515 = vunpack.c.h.b16 %v509
          %v516 = vunpack.c.h.b16 %v510
          %v517 = vpack.c.b16 %v514, %v513
          %v518 = vpack.c.b16 %v516, %v515
          %519 = vrot.lane.b32.xlu0 %v517, 17
          %v520 = vpop.permute.xlu0 %519
          %521 = vrot.lane.b32.xlu0 %v518, 17
          %v522 = vpop.permute.xlu0 %521
          %v523 = vrot.slane %v520, 4
          %v524 = vrot.slane %v522, 4
          %v525 = vsel %vm469, %v523, %v520
          %v526 = vsel %vm469, %v524, %v522
          %531 = vst.msk [vmem:[#allocation4] sm:$0xff] %vm478, %v525
          %532 = vst.msk [vmem:[#allocation4 + $0x8] sm:$0xf] %vm281, %v523
          %533 = vst.msk [vmem:[#allocation4 + $0xc] sm:$0xff] %vm478, %v526
          %534 = vst.msk [vmem:[#allocation4 + $0x14] sm:$0xf] %vm281, %v524
          %v535 = vld [vmem:[#allocation4] sm:$0xff]
          %v536 = vld [vmem:[#allocation4 + $0xc] sm:$0xff]
          %537 = vst [vmem:[#allocation5] sm:$0xff] %v535
          %538 = vst [vmem:[#allocation5 + $0x8] sm:$0xff] %v536
          %v539 = vld [vmem:[#allocation2] sm:$0xff]
          %v540 = vld [vmem:[#allocation2 + $0x8] sm:$0xf]
          %v541 = vld [vmem:[#allocation2 + $0xc] sm:$0xff]
          %v542 = vld [vmem:[#allocation2 + $0x14] sm:$0xf]
          %547 = vrot.lane.b32.xlu0 %v539, 127
          %v548 = vpop.permute.xlu0 %547
          %549 = vrot.lane.b32.xlu0 %v540, 127
          %v550 = vpop.permute.xlu0 %549
          %551 = vrot.lane.b32.xlu0 %v541, 127
          %v552 = vpop.permute.xlu0 %551
          %553 = vrot.lane.b32.xlu0 %v542, 127
          %v554 = vpop.permute.xlu0 %553
          %v555 = vrot.slane %v548, 4
          %v556 = vrot.slane %v550, 4
          %v557 = vrot.slane %v552, 4
          %v558 = vrot.slane %v554, 4
          %vm559 = vcmask 1043456
          %v560 = vsel %vm559, %v555, %v556
          %vm561 = vcmask 1039360
          %v562 = vsel %vm561, %v548, %v560
          %v563 = vsel %vm559, %v557, %v558
          %v564 = vsel %vm561, %v552, %v563
          %567 = vst [vmem:[#allocation5 + $0x10] sm:$0xff] %v562
          %568 = vst [vmem:[#allocation5 + $0x18] sm:$0xff] %v564
          %v569 = vld [vmem:[#allocation3] sm:$0xff]
          %v570 = vld [vmem:[#allocation3 + $0x8] sm:$0xf]
          %v571 = vld [vmem:[#allocation3 + $0xc] sm:$0xff]
          %v572 = vld [vmem:[#allocation3 + $0x14] sm:$0xf]
          %577 = vrot.lane.b32.xlu0 %v569, 126
          %v578 = vpop.permute.xlu0 %577
          %579 = vrot.lane.b32.xlu0 %v570, 126
          %v580 = vpop.permute.xlu0 %579
          %581 = vrot.lane.b32.xlu0 %v571, 126
          %v582 = vpop.permute.xlu0 %581
          %583 = vrot.lane.b32.xlu0 %v572, 126
          %v584 = vpop.permute.xlu0 %583
          %v585 = vrot.slane %v578, 4
          %v586 = vrot.slane %v580, 4
          %v587 = vrot.slane %v582, 4
          %v588 = vrot.slane %v584, 4
          %v589 = vsel %vm559, %v585, %v586
          %vm590 = vcmask 1031168
          %v591 = vsel %vm590, %v578, %v589
          %v592 = vsel %vm559, %v587, %v588
          %v593 = vsel %vm590, %v582, %v592
          %596 = vst [vmem:[#allocation5 + $0x20] sm:$0xff] %v591
          %597 = vst [vmem:[#allocation5 + $0x28] sm:$0xff] %v593
          %v598 = vld [vmem:[#allocation4] sm:$0xff]
          %v599 = vld [vmem:[#allocation4 + $0x8] sm:$0xf]
          %v600 = vld [vmem:[#allocation4 + $0xc] sm:$0xff]
          %v601 = vld [vmem:[#allocation4 + $0x14] sm:$0xf]
          %606 = vrot.lane.b32.xlu0 %v598, 112
          %v607 = vpop.permute.xlu0 %606
          %608 = vrot.lane.b32.xlu0 %v599, 112
          %v609 = vpop.permute.xlu0 %608
          %610 = vrot.lane.b32.xlu0 %v600, 112
          %v611 = vpop.permute.xlu0 %610
          %612 = vrot.lane.b32.xlu0 %v601, 112
          %v613 = vpop.permute.xlu0 %612
          %v614 = vrot.slane %v607, 4
          %v615 = vrot.slane %v609, 4
          %v616 = vrot.slane %v611, 4
          %v617 = vrot.slane %v613, 4
          %v618 = vsel %vm559, %v614, %v615
          %vm619 = vcmask 916480
          %v620 = vsel %vm619, %v607, %v618
          %v621 = vsel %vm559, %v616, %v617
          %v622 = vsel %vm619, %v611, %v621
          %625 = vst [vmem:[#allocation5 + $0x30] sm:$0xff] %v620
          %626 = vst [vmem:[#allocation5 + $0x38] sm:$0xff] %v622
          %v627 = vld [vmem:[#allocation2] sm:$0xff]
          %v628 = vld [vmem:[#allocation2 + $0x8] sm:$0xf]
          %v629 = vld [vmem:[#allocation2 + $0xc] sm:$0xff]
          %v630 = vld [vmem:[#allocation2 + $0x14] sm:$0xf]
          %635 = vrot.lane.b32.xlu0 %v627, 111
          %v636 = vpop.permute.xlu0 %635
          %637 = vrot.lane.b32.xlu0 %v628, 111
          %v638 = vpop.permute.xlu0 %637
          %639 = vrot.lane.b32.xlu0 %v629, 111
          %v640 = vpop.permute.xlu0 %639
          %641 = vrot.lane.b32.xlu0 %v630, 111
          %v642 = vpop.permute.xlu0 %641
          %v643 = vrot.slane %v636, 4
          %v644 = vrot.slane %v638, 4
          %v645 = vrot.slane %v640, 4
          %v646 = vrot.slane %v642, 4
          %v647 = vsel %vm559, %v643, %v644
          %vm648 = vcmask 908288
          %v649 = vsel %vm648, %v636, %v647
          %v650 = vsel %vm559, %v645, %v646
          %v651 = vsel %vm648, %v640, %v650
          %654 = vst [vmem:[#allocation5 + $0x40] sm:$0xff] %v649
          %655 = vst [vmem:[#allocation5 + $0x48] sm:$0xff] %v651
          %v656 = vld [vmem:[#allocation3] sm:$0xff]
          %v657 = vld [vmem:[#allocation3 + $0x8] sm:$0xf]
          %v658 = vld [vmem:[#allocation3 + $0xc] sm:$0xff]
          %v659 = vld [vmem:[#allocation3 + $0x14] sm:$0xf]
          %664 = vrot.lane.b32.xlu0 %v656, 110
          %v665 = vpop.permute.xlu0 %664
          %666 = vrot.lane.b32.xlu0 %v657, 110
          %v667 = vpop.permute.xlu0 %666
          %668 = vrot.lane.b32.xlu0 %v658, 110
          %v669 = vpop.permute.xlu0 %668
          %670 = vrot.lane.b32.xlu0 %v659, 110
          %v671 = vpop.permute.xlu0 %670
          %v672 = vrot.slane %v665, 4
          %v673 = vrot.slane %v667, 4
          %v674 = vrot.slane %v669, 4
          %v675 = vrot.slane %v671, 4
          %v676 = vsel %vm559, %v672, %v673
          %vm677 = vcmask 900096
          %v678 = vsel %vm677, %v665, %v676
          %v679 = vsel %vm559, %v674, %v675
          %v680 = vsel %vm677, %v669, %v679
          %683 = vst [vmem:[#allocation5 + $0x50] sm:$0xff] %v678
          %684 = vst [vmem:[#allocation5 + $0x58] sm:$0xff] %v680
          %v685 = vld [vmem:[#allocation4] sm:$0xff]
          %v686 = vld [vmem:[#allocation4 + $0x8] sm:$0xf]
          %v687 = vld [vmem:[#allocation4 + $0xc] sm:$0xff]
          %v688 = vld [vmem:[#allocation4 + $0x14] sm:$0xf]
          %693 = vrot.lane.b32.xlu0 %v685, 96
          %v694 = vpop.permute.xlu0 %693
          %695 = vrot.lane.b32.xlu0 %v686, 96
          %v696 = vpop.permute.xlu0 %695
          %697 = vrot.lane.b32.xlu0 %v687, 96
          %v698 = vpop.permute.xlu0 %697
          %699 = vrot.lane.b32.xlu0 %v688, 96
          %v700 = vpop.permute.xlu0 %699
          %v701 = vrot.slane %v694, 4
          %v702 = vrot.slane %v696, 4
          %v703 = vrot.slane %v698, 4
          %v704 = vrot.slane %v700, 4
          %v705 = vsel %vm559, %v701, %v702
          %vm706 = vcmask 785408
          %v707 = vsel %vm706, %v694, %v705
          %v708 = vsel %vm559, %v703, %v704
          %v709 = vsel %vm706, %v698, %v708
          %712 = vst [vmem:[#allocation5 + $0x60] sm:$0xff] %v707
          %713 = vst [vmem:[#allocation5 + $0x68] sm:$0xff] %v709
          %v714 = vld [vmem:[#allocation2] sm:$0xff]
          %v715 = vld [vmem:[#allocation2 + $0x8] sm:$0xf]
          %v716 = vld [vmem:[#allocation2 + $0xc] sm:$0xff]
          %v717 = vld [vmem:[#allocation2 + $0x14] sm:$0xf]
          %722 = vrot.lane.b32.xlu0 %v714, 95
          %v723 = vpop.permute.xlu0 %722
          %724 = vrot.lane.b32.xlu0 %v715, 95
          %v725 = vpop.permute.xlu0 %724
          %726 = vrot.lane.b32.xlu0 %v716, 95
          %v727 = vpop.permute.xlu0 %726
          %728 = vrot.lane.b32.xlu0 %v717, 95
          %v729 = vpop.permute.xlu0 %728
          %v730 = vrot.slane %v723, 4
          %v731 = vrot.slane %v725, 4
          %v732 = vrot.slane %v727, 4
          %v733 = vrot.slane %v729, 4
          %v734 = vsel %vm559, %v730, %v731
          %vm735 = vcmask 777216
          %v736 = vsel %vm735, %v723, %v734
          %v737 = vsel %vm559, %v732, %v733
          %v738 = vsel %vm735, %v727, %v737
          %741 = vst [vmem:[#allocation5 + $0x70] sm:$0xff] %v736
          %742 = vst [vmem:[#allocation5 + $0x78] sm:$0xff] %v738
          %v743 = vld [vmem:[#allocation3] sm:$0xff]
          %v744 = vld [vmem:[#allocation3 + $0x8] sm:$0xf]
          %v745 = vld [vmem:[#allocation3 + $0xc] sm:$0xff]
          %v746 = vld [vmem:[#allocation3 + $0x14] sm:$0xf]
          %751 = vrot.lane.b32.xlu0 %v743, 94
          %v752 = vpop.permute.xlu0 %751
          %753 = vrot.lane.b32.xlu0 %v744, 94
          %v754 = vpop.permute.xlu0 %753
          %755 = vrot.lane.b32.xlu0 %v745, 94
          %v756 = vpop.permute.xlu0 %755
          %757 = vrot.lane.b32.xlu0 %v746, 94
          %v758 = vpop.permute.xlu0 %757
          %v759 = vrot.slane %v752, 4
          %v760 = vrot.slane %v754, 4
          %v761 = vrot.slane %v756, 4
          %v762 = vrot.slane %v758, 4
          %v763 = vsel %vm559, %v759, %v760
          %vm764 = vcmask 769024
          %v765 = vsel %vm764, %v752, %v763
          %v766 = vsel %vm559, %v761, %v762
          %v767 = vsel %vm764, %v756, %v766
          %770 = vst [vmem:[#allocation5 + $0x80] sm:$0xff] %v765
          %771 = vst [vmem:[#allocation5 + $0x88] sm:$0xff] %v767
          %v772 = vld [vmem:[#allocation5] sm:$0xff]
          %v773 = vld [vmem:[#allocation5 + $0x8] sm:$0xff]
          %v774 = vld [vmem:[#allocation5 + $0x10] sm:$0xff]
          %v775 = vld [vmem:[#allocation5 + $0x18] sm:$0xff]
          %v776 = vld [vmem:[#allocation5 + $0x20] sm:$0xff]
          %v777 = vld [vmem:[#allocation5 + $0x28] sm:$0xff]
          %v778 = vld [vmem:[#allocation5 + $0x30] sm:$0xff]
          %v779 = vld [vmem:[#allocation5 + $0x38] sm:$0xff]
          %v780 = vld [vmem:[#allocation5 + $0x40] sm:$0xff]
          %v781 = vld [vmem:[#allocation5 + $0x48] sm:$0xff]
          %v782 = vld [vmem:[#allocation5 + $0x50] sm:$0xff]
          %v783 = vld [vmem:[#allocation5 + $0x58] sm:$0xff]
          %v784 = vld [vmem:[#allocation5 + $0x60] sm:$0xff]
          %v785 = vld [vmem:[#allocation5 + $0x68] sm:$0xff]
          %v786 = vld [vmem:[#allocation5 + $0x70] sm:$0xff]
          %v787 = vld [vmem:[#allocation5 + $0x78] sm:$0xff]
          %v788 = vld [vmem:[#allocation5 + $0x80] sm:$0xff]
          %v789 = vld [vmem:[#allocation5 + $0x88] sm:$0xff]
          %v792 = vunpack.c.l.b16 %v297
          %v793 = vunpack.c.h.b16 %v297
          %v794 = vunpack.c.l.b16 %v298
          %v795 = vunpack.c.h.b16 %v298
          %v796 = vpack.c.b16 %v794, %v792
          %v797 = vpack.c.b16 %v795, %v793
          %v817 = vunpack.c.l.b16 %v772
          %v818 = vunpack.c.h.b16 %v772
          %v819 = vunpack.c.l.b16 %v773
          %v820 = vunpack.c.h.b16 %v773
          %v821 = vunpack.c.l.b16 %v774
          %v822 = vunpack.c.h.b16 %v774
          %v823 = vunpack.c.l.b16 %v775
          %v824 = vunpack.c.h.b16 %v775
          %v825 = vunpack.c.l.b16 %v776
          %v826 = vunpack.c.h.b16 %v776
          %v827 = vunpack.c.l.b16 %v777
          %v828 = vunpack.c.h.b16 %v777
          %v829 = vunpack.c.l.b16 %v778
          %v830 = vunpack.c.h.b16 %v778
          %v831 = vunpack.c.l.b16 %v779
          %v832 = vunpack.c.h.b16 %v779
          %v833 = vunpack.c.l.b16 %v780
          %v834 = vunpack.c.h.b16 %v780
          %v835 = vunpack.c.l.b16 %v781
          %v836 = vunpack.c.h.b16 %v781
          %v837 = vunpack.c.l.b16 %v782
          %v838 = vunpack.c.h.b16 %v782
          %v839 = vunpack.c.l.b16 %v783
          %v840 = vunpack.c.h.b16 %v783
          %v841 = vunpack.c.l.b16 %v784
          %v842 = vunpack.c.h.b16 %v784
          %v843 = vunpack.c.l.b16 %v785
          %v844 = vunpack.c.h.b16 %v785
          %v845 = vunpack.c.l.b16 %v786
          %v846 = vunpack.c.h.b16 %v786
          %v847 = vunpack.c.l.b16 %v787
          %v848 = vunpack.c.h.b16 %v787
          %v849 = vunpack.c.l.b16 %v788
          %v850 = vunpack.c.h.b16 %v788
          %v851 = vunpack.c.l.b16 %v789
          %v852 = vunpack.c.h.b16 %v789
          %v853 = vpack.c.b16 %v819, %v817
          %v854 = vpack.c.b16 %v820, %v818
          %v855 = vpack.c.b16 %v823, %v821
          %v856 = vpack.c.b16 %v824, %v822
          %v857 = vpack.c.b16 %v827, %v825
          %v858 = vpack.c.b16 %v828, %v826
          %v859 = vpack.c.b16 %v831, %v829
          %v860 = vpack.c.b16 %v832, %v830
          %v861 = vpack.c.b16 %v835, %v833
          %v862 = vpack.c.b16 %v836, %v834
          %v863 = vpack.c.b16 %v839, %v837
          %v864 = vpack.c.b16 %v840, %v838
          %v865 = vpack.c.b16 %v843, %v841
          %v866 = vpack.c.b16 %v844, %v842
          %v867 = vpack.c.b16 %v847, %v845
          %v868 = vpack.c.b16 %v848, %v846
          %v869 = vpack.c.b16 %v851, %v849
          %v870 = vpack.c.b16 %v852, %v850
          %vm889 = vcmask 130048
          %v891 = vsel %vm889, %v797, 0
          %893 = vmatprep.subr.bf16.mxu0 %v868
          %894 = vmatpush1.bf16.msra.mxu0 %v867
          %895 = vmatprep.subr.bf16.mxu0 %v866
          %896 = vmatpush1.bf16.msra.mxu0 %v865
          %897 = vmatprep.subr.bf16.mxu0 %v864
          %898 = vmatpush1.bf16.msra.mxu0 %v863
          %899 = vmatprep.subr.bf16.mxu0 %v862
          %900 = vmatpush1.bf16.msra.mxu0 %v861
          %901 = vmatprep.subr.bf16.mxu0 %v860
          %902 = vmatpush1.bf16.msra.mxu0 %v859
          %903 = vmatprep.subr.bf16.mxu0 %v858
          %904 = vmatpush1.bf16.msra.mxu0 %v857
          %905 = vmatprep.subr.bf16.mxu0 %v856
          %906 = vmatpush1.bf16.msra.mxu0 %v855
          %907 = vmatprep.subr.bf16.mxu0 %v854
          %908 = vmatpush1.bf16.msra.mxu0 %v853
          %909 = vmatprep.subr.bf16.mxu0 0
          %910 = vmatpush2.bf16.msra.mxu0 0
          %911 = vmatprep.subr.bf16.mxu0 0
          %912 = vmatpush2.bf16.msra.mxu0 0
          %913 = vmatprep.subr.bf16.mxu0 0
          %914 = vmatpush2.bf16.msra.mxu0 0
          %915 = vmatprep.subr.bf16.mxu0 0
          %916 = vmatpush2.bf16.msra.mxu0 0
          %917 = vmatprep.subr.bf16.mxu0 0
          %918 = vmatpush2.bf16.msra.mxu0 0
          %919 = vmatprep.subr.bf16.mxu0 0
          %920 = vmatpush2.bf16.msra.mxu0 0
          %921 = vmatprep.subr.bf16.mxu0 0
          %922 = vmatpush2.bf16.msra.mxu0 0
          %923 = vmatprep.subr.bf16.mxu0 %v870
          %924 = vmatpush2.bf16.msra.mxu0 %v869
          %925 = vmatprep.mubr.bf16.mxu0 %v891
          %926 = vmatmul.mubr.bf16.gmra.mxu0 %v796
          %v927 = vpop.f32.mrf.mxu0
          %v928 = vadd.f32 %v317, %v927
          %v929 = vpop.f32.mrf.mxu0
          %v930 = vadd.f32 %v317, %v929
          %v931 = vpop.f32.mrf.mxu0
          %v932 = vadd.f32 %v322, %v931
          %v933 = vpop.f32.mrf.mxu0
          %v934 = vadd.f32 %v322, %v933
          %935 = vdwg.mxu0
          %v936 = vmax.f32 %v928, 0.0
          %v937 = vmax.f32 %v930, 0.0
          %v938 = vmax.f32 %v932, 0.0
          %v939 = vmax.f32 %v934, 0.0
          %v940 = vpack.c.bf16 %v938, %v936
          %v941 = vpack.c.bf16 %v939, %v937
          %v943 = vsel %vm889, %v299, 0
          %945 = vmatprep.subr.bf16.mxu0 0
          %946 = vmatpush1.bf16.msra.mxu0 0
          %947 = vmatprep.subr.bf16.mxu0 0
          %948 = vmatpush1.bf16.msra.mxu0 0
          %949 = vmatprep.subr.bf16.mxu0 0
          %950 = vmatpush1.bf16.msra.mxu0 0
          %951 = vmatprep.subr.bf16.mxu0 0
          %952 = vmatpush1.bf16.msra.mxu0 0
          %953 = vmatprep.subr.bf16.mxu0 0
          %954 = vmatpush1.bf16.msra.mxu0 0
          %955 = vmatprep.subr.bf16.mxu0 0
          %956 = vmatpush1.bf16.msra.mxu0 0
          %957 = vmatprep.subr.bf16.mxu0 0
          %958 = vmatpush1.bf16.msra.mxu0 0
          %959 = vmatprep.subr.bf16.mxu0 %v941
          %960 = vmatpush1.bf16.msra.mxu0 %v940
          %961 = vmatprep.subr.bf16.mxu0 0
          %962 = vmatpush2.bf16.msra.mxu0 0
          %963 = vmatprep.subr.bf16.mxu0 0
          %964 = vmatpush2.bf16.msra.mxu0 0
          %965 = vmatprep.subr.bf16.mxu0 0
          %966 = vmatpush2.bf16.msra.mxu0 0
          %967 = vmatprep.subr.bf16.mxu0 0
          %968 = vmatpush2.bf16.msra.mxu0 0
          %969 = vmatprep.subr.bf16.mxu0 0
          %970 = vmatpush2.bf16.msra.mxu0 0
          %971 = vmatprep.subr.bf16.mxu0 0
          %972 = vmatpush2.bf16.msra.mxu0 0
          %973 = vmatprep.subr.bf16.mxu0 0
          %974 = vmatpush2.bf16.msra.mxu0 0
          %975 = vmatprep.subr.bf16.mxu0 0
          %976 = vmatpush2.bf16.msra.mxu0 0
          %977 = vmatprep.mubr.bf16.mxu0 0
          %978 = vmatmul.mubr.bf16.gmra.mxu0 %v943
          %v979 = vpop.f32.mrf.mxu0
          %v980 = vadd.f32 %v328, %v979
          %v981 = vpop.f32.mrf.mxu0
          %v982 = vadd.f32 %v328, %v981
          %v983 = vpop.f32.mrf.mxu0
          %v984 = vpop.f32.mrf.mxu0
          %985 = vdwg.mxu0
          %v986 = vmul.f32 %v980, 0.083333336
          %v987 = vmul.f32 %v982, 0.083333336
          %v988 = vadd.f32 %v386, %v986
          %v989 = vadd.f32 %v387, %v987
          %v990 = vpack.c.bf16 %v988, %v988
          %v991 = vpack.c.bf16 %v989, %v989
          %v993 = vsel %vm399, %v990, 0
          %v996 = vsel %vm399, %v991, 0
          %998 = vmatprep.subr.bf16.mxu0 0
          %999 = vmatpush1.bf16.msra.mxu0 0
          %1000 = vmatprep.subr.bf16.mxu0 0
          %1001 = vmatpush1.bf16.msra.mxu0 0
          %1002 = vmatprep.subr.bf16.mxu0 0
          %1003 = vmatpush1.bf16.msra.mxu0 0
          %1004 = vmatprep.subr.bf16.mxu0 0
          %1005 = vmatpush1.bf16.msra.mxu0 0
          %1006 = vmatprep.subr.bf16.mxu0 0
          %1007 = vmatpush1.bf16.msra.mxu0 0
          %1008 = vmatprep.subr.bf16.mxu0 0
          %1009 = vmatpush1.bf16.msra.mxu0 0
          %1010 = vmatprep.subr.bf16.mxu0 0
          %1011 = vmatpush1.bf16.msra.mxu0 0
          %1012 = vmatprep.subr.bf16.mxu0 %v996
          %1013 = vmatpush1.bf16.msra.mxu0 %v993
          %1014 = vmatprep.subr.bf16.mxu0 0
          %1015 = vmatpush2.bf16.msra.mxu0 0
          %1016 = vmatprep.subr.bf16.mxu0 0
          %1017 = vmatpush2.bf16.msra.mxu0 0
          %1018 = vmatprep.subr.bf16.mxu0 0
          %1019 = vmatpush2.bf16.msra.mxu0 0
          %1020 = vmatprep.subr.bf16.mxu0 0
          %1021 = vmatpush2.bf16.msra.mxu0 0
          %1022 = vmatprep.subr.bf16.mxu0 0
          %1023 = vmatpush2.bf16.msra.mxu0 0
          %1024 = vmatprep.subr.bf16.mxu0 0
          %1025 = vmatpush2.bf16.msra.mxu0 0
          %1026 = vmatprep.subr.bf16.mxu0 0
          %1027 = vmatpush2.bf16.msra.mxu0 0
          %1028 = vmatprep.subr.bf16.mxu0 0
          %1029 = vmatpush2.bf16.msra.mxu0 0
          %1030 = vmatprep.mubr.bf16.mxu0 0
          %1031 = vmatmul.mubr.bf16.gmra.mxu0 %v397
          %v1032 = vpop.f32.mrf.mxu0
          %v1033 = vadd.f32 %v305, %v1032
          %v1034 = vpop.f32.mrf.mxu0
          %v1035 = vadd.f32 %v305, %v1034
          %v1036 = vpop.f32.mrf.mxu0
          %v1037 = vadd.f32 %v310, %v1036
          %v1038 = vpop.f32.mrf.mxu0
          %v1039 = vadd.f32 %v310, %v1038
          %1040 = vdwg.mxu0
          %v1041 = vmax.f32 %v1033, 0.0
          %v1042 = vmax.f32 %v1035, 0.0
          %v1043 = vmax.f32 %v1037, 0.0
          %v1044 = vmax.f32 %v1039, 0.0
          %v1045 = vpack.c.bf16 %v1043, %v1041
          %v1046 = vpack.c.bf16 %v1044, %v1042
          %v1049 = vunpack.c.l.b16 %v1045
          %v1050 = vunpack.c.l.b16 %v1046
          %v1051 = vunpack.c.h.b16 %v1045
          %v1052 = vunpack.c.h.b16 %v1046
          %v1053 = vpack.c.b16 %v1050, %v1049
          %v1054 = vpack.c.b16 %v1052, %v1051
          %1055 = vrot.lane.b32.xlu0 %v1053, 17
          %v1056 = vpop.permute.xlu0 %1055
          %1057 = vrot.lane.b32.xlu0 %v1054, 17
          %v1058 = vpop.permute.xlu0 %1057
          %v1059 = vrot.slane %v1056, 4
          %v1060 = vrot.slane %v1058, 4
          %v1061 = vsel %vm469, %v1059, %v1056
          %v1062 = vsel %vm469, %v1060, %v1058
          %1067 = vst.msk [vmem:[#allocation2] sm:$0xff] %vm478, %v1061
          %1068 = vst.msk [vmem:[#allocation2 + $0x8] sm:$0xf] %vm281, %v1059
          %1069 = vst.msk [vmem:[#allocation2 + $0xc] sm:$0xff] %vm478, %v1062
          %1070 = vst.msk [vmem:[#allocation2 + $0x14] sm:$0xf] %vm281, %v1060
          %v1071 = vmul.bf16 %v1045, %v363
          %v1072 = vmul.bf16 %v1046, %v364
          %v1075 = vunpack.c.l.b16 %v1071
          %v1076 = vunpack.c.l.b16 %v1072
          %v1077 = vunpack.c.h.b16 %v1071
          %v1078 = vunpack.c.h.b16 %v1072
          %v1079 = vpack.c.b16 %v1076, %v1075
          %v1080 = vpack.c.b16 %v1078, %v1077
          %1081 = vrot.lane.b32.xlu0 %v1079, 17
          %v1082 = vpop.permute.xlu0 %1081
          %1083 = vrot.lane.b32.xlu0 %v1080, 17
          %v1084 = vpop.permute.xlu0 %1083
          %v1085 = vrot.slane %v1082, 4
          %v1086 = vrot.slane %v1084, 4
          %v1087 = vsel %vm469, %v1085, %v1082
          %v1088 = vsel %vm469, %v1086, %v1084
          %1093 = vst.msk [vmem:[#allocation3] sm:$0xff] %vm478, %v1087
          %1094 = vst.msk [vmem:[#allocation3 + $0x8] sm:$0xf] %vm281, %v1085
          %1095 = vst.msk [vmem:[#allocation3 + $0xc] sm:$0xff] %vm478, %v1088
          %1096 = vst.msk [vmem:[#allocation3 + $0x14] sm:$0xf] %vm281, %v1086
          %v1097 = vmul.bf16 %v1045, %v371
          %v1098 = vmul.bf16 %v1046, %v372
          %v1101 = vunpack.c.l.b16 %v1097
          %v1102 = vunpack.c.l.b16 %v1098
          %v1103 = vunpack.c.h.b16 %v1097
          %v1104 = vunpack.c.h.b16 %v1098
          %v1105 = vpack.c.b16 %v1102, %v1101
          %v1106 = vpack.c.b16 %v1104, %v1103
          %1107 = vrot.lane.b32.xlu0 %v1105, 17
          %v1108 = vpop.permute.xlu0 %1107
          %1109 = vrot.lane.b32.xlu0 %v1106, 17
          %v1110 = vpop.permute.xlu0 %1109
          %v1111 = vrot.slane %v1108, 4
          %v1112 = vrot.slane %v1110, 4
          %v1113 = vsel %vm469, %v1111, %v1108
          %v1114 = vsel %vm469, %v1112, %v1110
          %1119 = vst.msk [vmem:[#allocation4] sm:$0xff] %vm478, %v1113
          %1120 = vst.msk [vmem:[#allocation4 + $0x8] sm:$0xf] %vm281, %v1111
          %1121 = vst.msk [vmem:[#allocation4 + $0xc] sm:$0xff] %vm478, %v1114
          %1122 = vst.msk [vmem:[#allocation4 + $0x14] sm:$0xf] %vm281, %v1112
          %v1123 = vld [vmem:[#allocation4] sm:$0xff]
          %v1124 = vld [vmem:[#allocation4 + $0xc] sm:$0xff]
          %1125 = vst [vmem:[#allocation5] sm:$0xff] %v1123
          %1126 = vst [vmem:[#allocation5 + $0x8] sm:$0xff] %v1124
          %v1127 = vld [vmem:[#allocation2] sm:$0xff]
          %v1128 = vld [vmem:[#allocation2 + $0x8] sm:$0xf]
          %v1129 = vld [vmem:[#allocation2 + $0xc] sm:$0xff]
          %v1130 = vld [vmem:[#allocation2 + $0x14] sm:$0xf]
          %1135 = vrot.lane.b32.xlu0 %v1127, 127
          %v1136 = vpop.permute.xlu0 %1135
          %1137 = vrot.lane.b32.xlu0 %v1128, 127
          %v1138 = vpop.permute.xlu0 %1137
          %1139 = vrot.lane.b32.xlu0 %v1129, 127
          %v1140 = vpop.permute.xlu0 %1139
          %1141 = vrot.lane.b32.xlu0 %v1130, 127
          %v1142 = vpop.permute.xlu0 %1141
          %v1143 = vrot.slane %v1136, 4
          %v1144 = vrot.slane %v1138, 4
          %v1145 = vrot.slane %v1140, 4
          %v1146 = vrot.slane %v1142, 4
          %v1147 = vsel %vm559, %v1143, %v1144
          %v1148 = vsel %vm561, %v1136, %v1147
          %v1149 = vsel %vm559, %v1145, %v1146
          %v1150 = vsel %vm561, %v1140, %v1149
          %1153 = vst [vmem:[#allocation5 + $0x10] sm:$0xff] %v1148
          %1154 = vst [vmem:[#allocation5 + $0x18] sm:$0xff] %v1150
          %v1155 = vld [vmem:[#allocation3] sm:$0xff]
          %v1156 = vld [vmem:[#allocation3 + $0x8] sm:$0xf]
          %v1157 = vld [vmem:[#allocation3 + $0xc] sm:$0xff]
          %v1158 = vld [vmem:[#allocation3 + $0x14] sm:$0xf]
          %1163 = vrot.lane.b32.xlu0 %v1155, 126
          %v1164 = vpop.permute.xlu0 %1163
          %1165 = vrot.lane.b32.xlu0 %v1156, 126
          %v1166 = vpop.permute.xlu0 %1165
          %1167 = vrot.lane.b32.xlu0 %v1157, 126
          %v1168 = vpop.permute.xlu0 %1167
          %1169 = vrot.lane.b32.xlu0 %v1158, 126
          %v1170 = vpop.permute.xlu0 %1169
          %v1171 = vrot.slane %v1164, 4
          %v1172 = vrot.slane %v1166, 4
          %v1173 = vrot.slane %v1168, 4
          %v1174 = vrot.slane %v1170, 4
          %v1175 = vsel %vm559, %v1171, %v1172
          %v1176 = vsel %vm590, %v1164, %v1175
          %v1177 = vsel %vm559, %v1173, %v1174
          %v1178 = vsel %vm590, %v1168, %v1177
          %1181 = vst [vmem:[#allocation5 + $0x20] sm:$0xff] %v1176
          %1182 = vst [vmem:[#allocation5 + $0x28] sm:$0xff] %v1178
          %v1183 = vld [vmem:[#allocation4] sm:$0xff]
          %v1184 = vld [vmem:[#allocation4 + $0x8] sm:$0xf]
          %v1185 = vld [vmem:[#allocation4 + $0xc] sm:$0xff]
          %v1186 = vld [vmem:[#allocation4 + $0x14] sm:$0xf]
          %1191 = vrot.lane.b32.xlu0 %v1183, 112
          %v1192 = vpop.permute.xlu0 %1191
          %1193 = vrot.lane.b32.xlu0 %v1184, 112
          %v1194 = vpop.permute.xlu0 %1193
          %1195 = vrot.lane.b32.xlu0 %v1185, 112
          %v1196 = vpop.permute.xlu0 %1195
          %1197 = vrot.lane.b32.xlu0 %v1186, 112
          %v1198 = vpop.permute.xlu0 %1197
          %v1199 = vrot.slane %v1192, 4
          %v1200 = vrot.slane %v1194, 4
          %v1201 = vrot.slane %v1196, 4
          %v1202 = vrot.slane %v1198, 4
          %v1203 = vsel %vm559, %v1199, %v1200
          %v1204 = vsel %vm619, %v1192, %v1203
          %v1205 = vsel %vm559, %v1201, %v1202
          %v1206 = vsel %vm619, %v1196, %v1205
          %1209 = vst [vmem:[#allocation5 + $0x30] sm:$0xff] %v1204
          %1210 = vst [vmem:[#allocation5 + $0x38] sm:$0xff] %v1206
          %v1211 = vld [vmem:[#allocation2] sm:$0xff]
          %v1212 = vld [vmem:[#allocation2 + $0x8] sm:$0xf]
          %v1213 = vld [vmem:[#allocation2 + $0xc] sm:$0xff]
          %v1214 = vld [vmem:[#allocation2 + $0x14] sm:$0xf]
          %1219 = vrot.lane.b32.xlu0 %v1211, 111
          %v1220 = vpop.permute.xlu0 %1219
          %1221 = vrot.lane.b32.xlu0 %v1212, 111
          %v1222 = vpop.permute.xlu0 %1221
          %1223 = vrot.lane.b32.xlu0 %v1213, 111
          %v1224 = vpop.permute.xlu0 %1223
          %1225 = vrot.lane.b32.xlu0 %v1214, 111
          %v1226 = vpop.permute.xlu0 %1225
          %v1227 = vrot.slane %v1220, 4
          %v1228 = vrot.slane %v1222, 4
          %v1229 = vrot.slane %v1224, 4
          %v1230 = vrot.slane %v1226, 4
          %v1231 = vsel %vm559, %v1227, %v1228
          %v1232 = vsel %vm648, %v1220, %v1231
          %v1233 = vsel %vm559, %v1229, %v1230
          %v1234 = vsel %vm648, %v1224, %v1233
          %1237 = vst [vmem:[#allocation5 + $0x40] sm:$0xff] %v1232
          %1238 = vst [vmem:[#allocation5 + $0x48] sm:$0xff] %v1234
          %v1239 = vld [vmem:[#allocation3] sm:$0xff]
          %v1240 = vld [vmem:[#allocation3 + $0x8] sm:$0xf]
          %v1241 = vld [vmem:[#allocation3 + $0xc] sm:$0xff]
          %v1242 = vld [vmem:[#allocation3 + $0x14] sm:$0xf]
          %1247 = vrot.lane.b32.xlu0 %v1239, 110
          %v1248 = vpop.permute.xlu0 %1247
          %1249 = vrot.lane.b32.xlu0 %v1240, 110
          %v1250 = vpop.permute.xlu0 %1249
          %1251 = vrot.lane.b32.xlu0 %v1241, 110
          %v1252 = vpop.permute.xlu0 %1251
          %1253 = vrot.lane.b32.xlu0 %v1242, 110
          %v1254 = vpop.permute.xlu0 %1253
          %v1255 = vrot.slane %v1248, 4
          %v1256 = vrot.slane %v1250, 4
          %v1257 = vrot.slane %v1252, 4
          %v1258 = vrot.slane %v1254, 4
          %v1259 = vsel %vm559, %v1255, %v1256
          %v1260 = vsel %vm677, %v1248, %v1259
          %v1261 = vsel %vm559, %v1257, %v1258
          %v1262 = vsel %vm677, %v1252, %v1261
          %1265 = vst [vmem:[#allocation5 + $0x50] sm:$0xff] %v1260
          %1266 = vst [vmem:[#allocation5 + $0x58] sm:$0xff] %v1262
          %v1267 = vld [vmem:[#allocation4] sm:$0xff]
          %v1268 = vld [vmem:[#allocation4 + $0x8] sm:$0xf]
          %v1269 = vld [vmem:[#allocation4 + $0xc] sm:$0xff]
          %v1270 = vld [vmem:[#allocation4 + $0x14] sm:$0xf]
          %1275 = vrot.lane.b32.xlu0 %v1267, 96
          %v1276 = vpop.permute.xlu0 %1275
          %1277 = vrot.lane.b32.xlu0 %v1268, 96
          %v1278 = vpop.permute.xlu0 %1277
          %1279 = vrot.lane.b32.xlu0 %v1269, 96
          %v1280 = vpop.permute.xlu0 %1279
          %1281 = vrot.lane.b32.xlu0 %v1270, 96
          %v1282 = vpop.permute.xlu0 %1281
          %v1283 = vrot.slane %v1276, 4
          %v1284 = vrot.slane %v1278, 4
          %v1285 = vrot.slane %v1280, 4
          %v1286 = vrot.slane %v1282, 4
          %v1287 = vsel %vm559, %v1283, %v1284
          %v1288 = vsel %vm706, %v1276, %v1287
          %v1289 = vsel %vm559, %v1285, %v1286
          %v1290 = vsel %vm706, %v1280, %v1289
          %1293 = vst [vmem:[#allocation5 + $0x60] sm:$0xff] %v1288
          %1294 = vst [vmem:[#allocation5 + $0x68] sm:$0xff] %v1290
          %v1295 = vld [vmem:[#allocation2] sm:$0xff]
          %v1296 = vld [vmem:[#allocation2 + $0x8] sm:$0xf]
          %v1297 = vld [vmem:[#allocation2 + $0xc] sm:$0xff]
          %v1298 = vld [vmem:[#allocation2 + $0x14] sm:$0xf]
          %1303 = vrot.lane.b32.xlu0 %v1295, 95
          %v1304 = vpop.permute.xlu0 %1303
          %1305 = vrot.lane.b32.xlu0 %v1296, 95
          %v1306 = vpop.permute.xlu0 %1305
          %1307 = vrot.lane.b32.xlu0 %v1297, 95
          %v1308 = vpop.permute.xlu0 %1307
          %1309 = vrot.lane.b32.xlu0 %v1298, 95
          %v1310 = vpop.permute.xlu0 %1309
          %v1311 = vrot.slane %v1304, 4
          %v1312 = vrot.slane %v1306, 4
          %v1313 = vrot.slane %v1308, 4
          %v1314 = vrot.slane %v1310, 4
          %v1315 = vsel %vm559, %v1311, %v1312
          %v1316 = vsel %vm735, %v1304, %v1315
          %v1317 = vsel %vm559, %v1313, %v1314
          %v1318 = vsel %vm735, %v1308, %v1317
          %1321 = vst [vmem:[#allocation5 + $0x70] sm:$0xff] %v1316
          %1322 = vst [vmem:[#allocation5 + $0x78] sm:$0xff] %v1318
          %v1323 = vld [vmem:[#allocation3] sm:$0xff]
          %v1324 = vld [vmem:[#allocation3 + $0x8] sm:$0xf]
          %v1325 = vld [vmem:[#allocation3 + $0xc] sm:$0xff]
          %v1326 = vld [vmem:[#allocation3 + $0x14] sm:$0xf]
          %1331 = vrot.lane.b32.xlu0 %v1323, 94
          %v1332 = vpop.permute.xlu0 %1331
          %1333 = vrot.lane.b32.xlu0 %v1324, 94
          %v1334 = vpop.permute.xlu0 %1333
          %1335 = vrot.lane.b32.xlu0 %v1325, 94
          %v1336 = vpop.permute.xlu0 %1335
          %1337 = vrot.lane.b32.xlu0 %v1326, 94
          %v1338 = vpop.permute.xlu0 %1337
          %v1339 = vrot.slane %v1332, 4
          %v1340 = vrot.slane %v1334, 4
          %v1341 = vrot.slane %v1336, 4
          %v1342 = vrot.slane %v1338, 4
          %v1343 = vsel %vm559, %v1339, %v1340
          %v1344 = vsel %vm764, %v1332, %v1343
          %v1345 = vsel %vm559, %v1341, %v1342
          %v1346 = vsel %vm764, %v1336, %v1345
          %1349 = vst [vmem:[#allocation5 + $0x80] sm:$0xff] %v1344
          %1350 = vst [vmem:[#allocation5 + $0x88] sm:$0xff] %v1346
          %v1351 = vld [vmem:[#allocation5] sm:$0xff]
          %v1352 = vld [vmem:[#allocation5 + $0x8] sm:$0xff]
          %v1353 = vld [vmem:[#allocation5 + $0x10] sm:$0xff]
          %v1354 = vld [vmem:[#allocation5 + $0x18] sm:$0xff]
          %v1355 = vld [vmem:[#allocation5 + $0x20] sm:$0xff]
          %v1356 = vld [vmem:[#allocation5 + $0x28] sm:$0xff]
          %v1357 = vld [vmem:[#allocation5 + $0x30] sm:$0xff]
          %v1358 = vld [vmem:[#allocation5 + $0x38] sm:$0xff]
          %v1359 = vld [vmem:[#allocation5 + $0x40] sm:$0xff]
          %v1360 = vld [vmem:[#allocation5 + $0x48] sm:$0xff]
          %v1361 = vld [vmem:[#allocation5 + $0x50] sm:$0xff]
          %v1362 = vld [vmem:[#allocation5 + $0x58] sm:$0xff]
          %v1363 = vld [vmem:[#allocation5 + $0x60] sm:$0xff]
          %v1364 = vld [vmem:[#allocation5 + $0x68] sm:$0xff]
          %v1365 = vld [vmem:[#allocation5 + $0x70] sm:$0xff]
          %v1366 = vld [vmem:[#allocation5 + $0x78] sm:$0xff]
          %v1367 = vld [vmem:[#allocation5 + $0x80] sm:$0xff]
          %v1368 = vld [vmem:[#allocation5 + $0x88] sm:$0xff]
          %v1387 = vunpack.c.l.b16 %v1351
          %v1388 = vunpack.c.h.b16 %v1351
          %v1389 = vunpack.c.l.b16 %v1352
          %v1390 = vunpack.c.h.b16 %v1352
          %v1391 = vunpack.c.l.b16 %v1353
          %v1392 = vunpack.c.h.b16 %v1353
          %v1393 = vunpack.c.l.b16 %v1354
          %v1394 = vunpack.c.h.b16 %v1354
          %v1395 = vunpack.c.l.b16 %v1355
          %v1396 = vunpack.c.h.b16 %v1355
          %v1397 = vunpack.c.l.b16 %v1356
          %v1398 = vunpack.c.h.b16 %v1356
          %v1399 = vunpack.c.l.b16 %v1357
          %v1400 = vunpack.c.h.b16 %v1357
          %v1401 = vunpack.c.l.b16 %v1358
          %v1402 = vunpack.c.h.b16 %v1358
          %v1403 = vunpack.c.l.b16 %v1359
          %v1404 = vunpack.c.h.b16 %v1359
          %v1405 = vunpack.c.l.b16 %v1360
          %v1406 = vunpack.c.h.b16 %v1360
          %v1407 = vunpack.c.l.b16 %v1361
          %v1408 = vunpack.c.h.b16 %v1361
          %v1409 = vunpack.c.l.b16 %v1362
          %v1410 = vunpack.c.h.b16 %v1362
          %v1411 = vunpack.c.l.b16 %v1363
          %v1412 = vunpack.c.h.b16 %v1363
          %v1413 = vunpack.c.l.b16 %v1364
          %v1414 = vunpack.c.h.b16 %v1364
          %v1415 = vunpack.c.l.b16 %v1365
          %v1416 = vunpack.c.h.b16 %v1365
          %v1417 = vunpack.c.l.b16 %v1366
          %v1418 = vunpack.c.h.b16 %v1366
          %v1419 = vunpack.c.l.b16 %v1367
          %v1420 = vunpack.c.h.b16 %v1367
          %v1421 = vunpack.c.l.b16 %v1368
          %v1422 = vunpack.c.h.b16 %v1368
          %v1423 = vpack.c.b16 %v1389, %v1387
          %v1424 = vpack.c.b16 %v1390, %v1388
          %v1425 = vpack.c.b16 %v1393, %v1391
          %v1426 = vpack.c.b16 %v1394, %v1392
          %v1427 = vpack.c.b16 %v1397, %v1395
          %v1428 = vpack.c.b16 %v1398, %v1396
          %v1429 = vpack.c.b16 %v1401, %v1399
          %v1430 = vpack.c.b16 %v1402, %v1400
          %v1431 = vpack.c.b16 %v1405, %v1403
          %v1432 = vpack.c.b16 %v1406, %v1404
          %v1433 = vpack.c.b16 %v1409, %v1407
          %v1434 = vpack.c.b16 %v1410, %v1408
          %v1435 = vpack.c.b16 %v1413, %v1411
          %v1436 = vpack.c.b16 %v1414, %v1412
          %v1437 = vpack.c.b16 %v1417, %v1415
          %v1438 = vpack.c.b16 %v1418, %v1416
          %v1439 = vpack.c.b16 %v1421, %v1419
          %v1440 = vpack.c.b16 %v1422, %v1420
          %1459 = vmatprep.subr.bf16.mxu0 %v1438
          %1460 = vmatpush1.bf16.msra.mxu0 %v1437
          %1461 = vmatprep.subr.bf16.mxu0 %v1436
          %1462 = vmatpush1.bf16.msra.mxu0 %v1435
          %1463 = vmatprep.subr.bf16.mxu0 %v1434
          %1464 = vmatpush1.bf16.msra.mxu0 %v1433
          %1465 = vmatprep.subr.bf16.mxu0 %v1432
          %1466 = vmatpush1.bf16.msra.mxu0 %v1431
          %1467 = vmatprep.subr.bf16.mxu0 %v1430
          %1468 = vmatpush1.bf16.msra.mxu0 %v1429
          %1469 = vmatprep.subr.bf16.mxu0 %v1428
          %1470 = vmatpush1.bf16.msra.mxu0 %v1427
          %1471 = vmatprep.subr.bf16.mxu0 %v1426
          %1472 = vmatpush1.bf16.msra.mxu0 %v1425
          %1473 = vmatprep.subr.bf16.mxu0 %v1424
          %1474 = vmatpush1.bf16.msra.mxu0 %v1423
          %1475 = vmatprep.subr.bf16.mxu0 0
          %1476 = vmatpush2.bf16.msra.mxu0 0
          %1477 = vmatprep.subr.bf16.mxu0 0
          %1478 = vmatpush2.bf16.msra.mxu0 0
          %1479 = vmatprep.subr.bf16.mxu0 0
          %1480 = vmatpush2.bf16.msra.mxu0 0
          %1481 = vmatprep.subr.bf16.mxu0 0
          %1482 = vmatpush2.bf16.msra.mxu0 0
          %1483 = vmatprep.subr.bf16.mxu0 0
          %1484 = vmatpush2.bf16.msra.mxu0 0
          %1485 = vmatprep.subr.bf16.mxu0 0
          %1486 = vmatpush2.bf16.msra.mxu0 0
          %1487 = vmatprep.subr.bf16.mxu0 0
          %1488 = vmatpush2.bf16.msra.mxu0 0
          %1489 = vmatprep.subr.bf16.mxu0 %v1440
          %1490 = vmatpush2.bf16.msra.mxu0 %v1439
          %1491 = vmatprep.mubr.bf16.mxu0 %v891
          %1492 = vmatmul.mubr.bf16.gmra.mxu0 %v796
          %v1493 = vpop.f32.mrf.mxu0
          %v1494 = vadd.f32 %v317, %v1493
          %v1495 = vpop.f32.mrf.mxu0
          %v1496 = vadd.f32 %v317, %v1495
          %v1497 = vpop.f32.mrf.mxu0
          %v1498 = vadd.f32 %v322, %v1497
          %v1499 = vpop.f32.mrf.mxu0
          %v1500 = vadd.f32 %v322, %v1499
          %1501 = vdwg.mxu0
          %v1502 = vmax.f32 %v1494, 0.0
          %v1503 = vmax.f32 %v1496, 0.0
          %v1504 = vmax.f32 %v1498, 0.0
          %v1505 = vmax.f32 %v1500, 0.0
          %v1506 = vpack.c.bf16 %v1504, %v1502
          %v1507 = vpack.c.bf16 %v1505, %v1503
          %1508 = vmatprep.subr.bf16.mxu0 0
          %1509 = vmatpush1.bf16.msra.mxu0 0
          %1510 = vmatprep.subr.bf16.mxu0 0
          %1511 = vmatpush1.bf16.msra.mxu0 0
          %1512 = vmatprep.subr.bf16.mxu0 0
          %1513 = vmatpush1.bf16.msra.mxu0 0
          %1514 = vmatprep.subr.bf16.mxu0 0
          %1515 = vmatpush1.bf16.msra.mxu0 0
          %1516 = vmatprep.subr.bf16.mxu0 0
          %1517 = vmatpush1.bf16.msra.mxu0 0
          %1518 = vmatprep.subr.bf16.mxu0 0
          %1519 = vmatpush1.bf16.msra.mxu0 0
          %1520 = vmatprep.subr.bf16.mxu0 0
          %1521 = vmatpush1.bf16.msra.mxu0 0
          %1522 = vmatprep.subr.bf16.mxu0 %v1507
          %1523 = vmatpush1.bf16.msra.mxu0 %v1506
          %1524 = vmatprep.subr.bf16.mxu0 0
          %1525 = vmatpush2.bf16.msra.mxu0 0
          %1526 = vmatprep.subr.bf16.mxu0 0
          %1527 = vmatpush2.bf16.msra.mxu0 0
          %1528 = vmatprep.subr.bf16.mxu0 0
          %1529 = vmatpush2.bf16.msra.mxu0 0
          %1530 = vmatprep.subr.bf16.mxu0 0
          %1531 = vmatpush2.bf16.msra.mxu0 0
          %1532 = vmatprep.subr.bf16.mxu0 0
          %1533 = vmatpush2.bf16.msra.mxu0 0
          %1534 = vmatprep.subr.bf16.mxu0 0
          %1535 = vmatpush2.bf16.msra.mxu0 0
          %1536 = vmatprep.subr.bf16.mxu0 0
          %1537 = vmatpush2.bf16.msra.mxu0 0
          %1538 = vmatprep.subr.bf16.mxu0 0
          %1539 = vmatpush2.bf16.msra.mxu0 0
          %1540 = vmatprep.mubr.bf16.mxu0 0
          %1541 = vmatmul.mubr.bf16.gmra.mxu0 %v943
          %v1542 = vpop.f32.mrf.mxu0
          %v1543 = vadd.f32 %v328, %v1542
          %v1544 = vpop.f32.mrf.mxu0
          %v1545 = vadd.f32 %v328, %v1544
          %v1546 = vpop.f32.mrf.mxu0
          %v1547 = vpop.f32.mrf.mxu0
          %1548 = vdwg.mxu0
          %v1549 = vmul.f32 %v980, 0.33333334
          %v1550 = vmul.f32 %v982, 0.33333334
          %v1551 = vsub.f32 %v1543, %v1549
          %v1552 = vsub.f32 %v1545, %v1550
          %v1553 = vmul.f32 %v1551, 0.25
          %v1554 = vmul.f32 %v1552, 0.25
          %v1555 = vadd.f32 %v386, %v1553
          %v1556 = vadd.f32 %v387, %v1554
          %v1557 = vpack.c.bf16 %v1555, %v1555
          %v1558 = vpack.c.bf16 %v1556, %v1556
          %v1560 = vsel %vm399, %v1557, 0
          %v1563 = vsel %vm399, %v1558, 0
          %1565 = vmatprep.subr.bf16.mxu0 0
          %1566 = vmatpush1.bf16.msra.mxu0 0
          %1567 = vmatprep.subr.bf16.mxu0 0
          %1568 = vmatpush1.bf16.msra.mxu0 0
          %1569 = vmatprep.subr.bf16.mxu0 0
          %1570 = vmatpush1.bf16.msra.mxu0 0
          %1571 = vmatprep.subr.bf16.mxu0 0
          %1572 = vmatpush1.bf16.msra.mxu0 0
          %1573 = vmatprep.subr.bf16.mxu0 0
          %1574 = vmatpush1.bf16.msra.mxu0 0
          %1575 = vmatprep.subr.bf16.mxu0 0
          %1576 = vmatpush1.bf16.msra.mxu0 0
          %1577 = vmatprep.subr.bf16.mxu0 0
          %1578 = vmatpush1.bf16.msra.mxu0 0
          %1579 = vmatprep.subr.bf16.mxu0 %v1563
          %1580 = vmatpush1.bf16.msra.mxu0 %v1560
          %1581 = vmatprep.subr.bf16.mxu0 0
          %1582 = vmatpush2.bf16.msra.mxu0 0
          %1583 = vmatprep.subr.bf16.mxu0 0
          %1584 = vmatpush2.bf16.msra.mxu0 0
          %1585 = vmatprep.subr.bf16.mxu0 0
          %1586 = vmatpush2.bf16.msra.mxu0 0
          %1587 = vmatprep.subr.bf16.mxu0 0
          %1588 = vmatpush2.bf16.msra.mxu0 0
          %1589 = vmatprep.subr.bf16.mxu0 0
          %1590 = vmatpush2.bf16.msra.mxu0 0
          %1591 = vmatprep.subr.bf16.mxu0 0
          %1592 = vmatpush2.bf16.msra.mxu0 0
          %1593 = vmatprep.subr.bf16.mxu0 0
          %1594 = vmatpush2.bf16.msra.mxu0 0
          %1595 = vmatprep.subr.bf16.mxu0 0
          %1596 = vmatpush2.bf16.msra.mxu0 0
          %1597 = vmatprep.mubr.bf16.mxu0 0
          %1598 = vmatmul.mubr.bf16.gmra.mxu0 %v397
          %v1599 = vpop.f32.mrf.mxu0
          %v1600 = vadd.f32 %v305, %v1599
          %v1601 = vpop.f32.mrf.mxu0
          %v1602 = vadd.f32 %v305, %v1601
          %v1603 = vpop.f32.mrf.mxu0
          %v1604 = vadd.f32 %v310, %v1603
          %v1605 = vpop.f32.mrf.mxu0
          %v1606 = vadd.f32 %v310, %v1605
          %1607 = vdwg.mxu0
          %v1608 = vmax.f32 %v1600, 0.0
          %v1609 = vmax.f32 %v1602, 0.0
          %v1610 = vmax.f32 %v1604, 0.0
          %v1611 = vmax.f32 %v1606, 0.0
          %v1612 = vpack.c.bf16 %v1610, %v1608
          %v1613 = vpack.c.bf16 %v1611, %v1609
          %v1616 = vunpack.c.l.b16 %v1612
          %v1617 = vunpack.c.l.b16 %v1613
          %v1618 = vunpack.c.h.b16 %v1612
          %v1619 = vunpack.c.h.b16 %v1613
          %v1620 = vpack.c.b16 %v1617, %v1616
          %v1621 = vpack.c.b16 %v1619, %v1618
          %1622 = vrot.lane.b32.xlu0 %v1620, 17
          %v1623 = vpop.permute.xlu0 %1622
          %1624 = vrot.lane.b32.xlu0 %v1621, 17
          %v1625 = vpop.permute.xlu0 %1624
          %v1626 = vrot.slane %v1623, 4
          %v1627 = vrot.slane %v1625, 4
          %v1628 = vsel %vm469, %v1626, %v1623
          %v1629 = vsel %vm469, %v1627, %v1625
          %1634 = vst.msk [vmem:[#allocation2] sm:$0xff] %vm478, %v1628
          %1635 = vst.msk [vmem:[#allocation2 + $0x8] sm:$0xf] %vm281, %v1626
          %1636 = vst.msk [vmem:[#allocation2 + $0xc] sm:$0xff] %vm478, %v1629
          %1637 = vst.msk [vmem:[#allocation2 + $0x14] sm:$0xf] %vm281, %v1627
          %v1638 = vmul.bf16 %v1612, %v363
          %v1639 = vmul.bf16 %v1613, %v364
          %v1642 = vunpack.c.l.b16 %v1638
          %v1643 = vunpack.c.l.b16 %v1639
          %v1644 = vunpack.c.h.b16 %v1638
          %v1645 = vunpack.c.h.b16 %v1639
          %v1646 = vpack.c.b16 %v1643, %v1642
          %v1647 = vpack.c.b16 %v1645, %v1644
          %1648 = vrot.lane.b32.xlu0 %v1646, 17
          %v1649 = vpop.permute.xlu0 %1648
          %1650 = vrot.lane.b32.xlu0 %v1647, 17
          %v1651 = vpop.permute.xlu0 %1650
          %v1652 = vrot.slane %v1649, 4
          %v1653 = vrot.slane %v1651, 4
          %v1654 = vsel %vm469, %v1652, %v1649
          %v1655 = vsel %vm469, %v1653, %v1651
          %1660 = vst.msk [vmem:[#allocation3] sm:$0xff] %vm478, %v1654
          %1661 = vst.msk [vmem:[#allocation3 + $0x8] sm:$0xf] %vm281, %v1652
          %1662 = vst.msk [vmem:[#allocation3 + $0xc] sm:$0xff] %vm478, %v1655
          %1663 = vst.msk [vmem:[#allocation3 + $0x14] sm:$0xf] %vm281, %v1653
          %v1664 = vmul.bf16 %v1612, %v371
          %v1665 = vmul.bf16 %v1613, %v372
          %v1668 = vunpack.c.l.b16 %v1664
          %v1669 = vunpack.c.l.b16 %v1665
          %v1670 = vunpack.c.h.b16 %v1664
          %v1671 = vunpack.c.h.b16 %v1665
          %v1672 = vpack.c.b16 %v1669, %v1668
          %v1673 = vpack.c.b16 %v1671, %v1670
          %1674 = vrot.lane.b32.xlu0 %v1672, 17
          %v1675 = vpop.permute.xlu0 %1674
          %1676 = vrot.lane.b32.xlu0 %v1673, 17
          %v1677 = vpop.permute.xlu0 %1676
          %v1678 = vrot.slane %v1675, 4
          %v1679 = vrot.slane %v1677, 4
          %v1680 = vsel %vm469, %v1678, %v1675
          %v1681 = vsel %vm469, %v1679, %v1677
          %1686 = vst.msk [vmem:[#allocation4] sm:$0xff] %vm478, %v1680
          %1687 = vst.msk [vmem:[#allocation4 + $0x8] sm:$0xf] %vm281, %v1678
          %1688 = vst.msk [vmem:[#allocation4 + $0xc] sm:$0xff] %vm478, %v1681
          %1689 = vst.msk [vmem:[#allocation4 + $0x14] sm:$0xf] %vm281, %v1679
          %v1690 = vld [vmem:[#allocation4] sm:$0xff]
          %v1691 = vld [vmem:[#allocation4 + $0xc] sm:$0xff]
          %1692 = vst [vmem:[#allocation5] sm:$0xff] %v1690
          %1693 = vst [vmem:[#allocation5 + $0x8] sm:$0xff] %v1691
          %v1694 = vld [vmem:[#allocation2] sm:$0xff]
          %v1695 = vld [vmem:[#allocation2 + $0x8] sm:$0xf]
          %v1696 = vld [vmem:[#allocation2 + $0xc] sm:$0xff]
          %v1697 = vld [vmem:[#allocation2 + $0x14] sm:$0xf]
          %1702 = vrot.lane.b32.xlu0 %v1694, 127
          %v1703 = vpop.permute.xlu0 %1702
          %1704 = vrot.lane.b32.xlu0 %v1695, 127
          %v1705 = vpop.permute.xlu0 %1704
          %1706 = vrot.lane.b32.xlu0 %v1696, 127
          %v1707 = vpop.permute.xlu0 %1706
          %1708 = vrot.lane.b32.xlu0 %v1697, 127
          %v1709 = vpop.permute.xlu0 %1708
          %v1710 = vrot.slane %v1703, 4
          %v1711 = vrot.slane %v1705, 4
          %v1712 = vrot.slane %v1707, 4
          %v1713 = vrot.slane %v1709, 4
          %v1714 = vsel %vm559, %v1710, %v1711
          %v1715 = vsel %vm561, %v1703, %v1714
          %v1716 = vsel %vm559, %v1712, %v1713
          %v1717 = vsel %vm561, %v1707, %v1716
          %1720 = vst [vmem:[#allocation5 + $0x10] sm:$0xff] %v1715
          %1721 = vst [vmem:[#allocation5 + $0x18] sm:$0xff] %v1717
          %v1722 = vld [vmem:[#allocation3] sm:$0xff]
          %v1723 = vld [vmem:[#allocation3 + $0x8] sm:$0xf]
          %v1724 = vld [vmem:[#allocation3 + $0xc] sm:$0xff]
          %v1725 = vld [vmem:[#allocation3 + $0x14] sm:$0xf]
          %1730 = vrot.lane.b32.xlu0 %v1722, 126
          %v1731 = vpop.permute.xlu0 %1730
          %1732 = vrot.lane.b32.xlu0 %v1723, 126
          %v1733 = vpop.permute.xlu0 %1732
          %1734 = vrot.lane.b32.xlu0 %v1724, 126
          %v1735 = vpop.permute.xlu0 %1734
          %1736 = vrot.lane.b32.xlu0 %v1725, 126
          %v1737 = vpop.permute.xlu0 %1736
          %v1738 = vrot.slane %v1731, 4
          %v1739 = vrot.slane %v1733, 4
          %v1740 = vrot.slane %v1735, 4
          %v1741 = vrot.slane %v1737, 4
          %v1742 = vsel %vm559, %v1738, %v1739
          %v1743 = vsel %vm590, %v1731, %v1742
          %v1744 = vsel %vm559, %v1740, %v1741
          %v1745 = vsel %vm590, %v1735, %v1744
          %1748 = vst [vmem:[#allocation5 + $0x20] sm:$0xff] %v1743
          %1749 = vst [vmem:[#allocation5 + $0x28] sm:$0xff] %v1745
          %v1750 = vld [vmem:[#allocation4] sm:$0xff]
          %v1751 = vld [vmem:[#allocation4 + $0x8] sm:$0xf]
          %v1752 = vld [vmem:[#allocation4 + $0xc] sm:$0xff]
          %v1753 = vld [vmem:[#allocation4 + $0x14] sm:$0xf]
          %1758 = vrot.lane.b32.xlu0 %v1750, 112
          %v1759 = vpop.permute.xlu0 %1758
          %1760 = vrot.lane.b32.xlu0 %v1751, 112
          %v1761 = vpop.permute.xlu0 %1760
          %1762 = vrot.lane.b32.xlu0 %v1752, 112
          %v1763 = vpop.permute.xlu0 %1762
          %1764 = vrot.lane.b32.xlu0 %v1753, 112
          %v1765 = vpop.permute.xlu0 %1764
          %v1766 = vrot.slane %v1759, 4
          %v1767 = vrot.slane %v1761, 4
          %v1768 = vrot.slane %v1763, 4
          %v1769 = vrot.slane %v1765, 4
          %v1770 = vsel %vm559, %v1766, %v1767
          %v1771 = vsel %vm619, %v1759, %v1770
          %v1772 = vsel %vm559, %v1768, %v1769
          %v1773 = vsel %vm619, %v1763, %v1772
          %1776 = vst [vmem:[#allocation5 + $0x30] sm:$0xff] %v1771
          %1777 = vst [vmem:[#allocation5 + $0x38] sm:$0xff] %v1773
          %v1778 = vld [vmem:[#allocation2] sm:$0xff]
          %v1779 = vld [vmem:[#allocation2 + $0x8] sm:$0xf]
          %v1780 = vld [vmem:[#allocation2 + $0xc] sm:$0xff]
          %v1781 = vld [vmem:[#allocation2 + $0x14] sm:$0xf]
          %1786 = vrot.lane.b32.xlu0 %v1778, 111
          %v1787 = vpop.permute.xlu0 %1786
          %1788 = vrot.lane.b32.xlu0 %v1779, 111
          %v1789 = vpop.permute.xlu0 %1788
          %1790 = vrot.lane.b32.xlu0 %v1780, 111
          %v1791 = vpop.permute.xlu0 %1790
          %1792 = vrot.lane.b32.xlu0 %v1781, 111
          %v1793 = vpop.permute.xlu0 %1792
          %v1794 = vrot.slane %v1787, 4
          %v1795 = vrot.slane %v1789, 4
          %v1796 = vrot.slane %v1791, 4
          %v1797 = vrot.slane %v1793, 4
          %v1798 = vsel %vm559, %v1794, %v1795
          %v1799 = vsel %vm648, %v1787, %v1798
          %v1800 = vsel %vm559, %v1796, %v1797
          %v1801 = vsel %vm648, %v1791, %v1800
          %1804 = vst [vmem:[#allocation5 + $0x40] sm:$0xff] %v1799
          %1805 = vst [vmem:[#allocation5 + $0x48] sm:$0xff] %v1801
          %v1806 = vld [vmem:[#allocation3] sm:$0xff]
          %v1807 = vld [vmem:[#allocation3 + $0x8] sm:$0xf]
          %v1808 = vld [vmem:[#allocation3 + $0xc] sm:$0xff]
          %v1809 = vld [vmem:[#allocation3 + $0x14] sm:$0xf]
          %1814 = vrot.lane.b32.xlu0 %v1806, 110
          %v1815 = vpop.permute.xlu0 %1814
          %1816 = vrot.lane.b32.xlu0 %v1807, 110
          %v1817 = vpop.permute.xlu0 %1816
          %1818 = vrot.lane.b32.xlu0 %v1808, 110
          %v1819 = vpop.permute.xlu0 %1818
          %1820 = vrot.lane.b32.xlu0 %v1809, 110
          %v1821 = vpop.permute.xlu0 %1820
          %v1822 = vrot.slane %v1815, 4
          %v1823 = vrot.slane %v1817, 4
          %v1824 = vrot.slane %v1819, 4
          %v1825 = vrot.slane %v1821, 4
          %v1826 = vsel %vm559, %v1822, %v1823
          %v1827 = vsel %vm677, %v1815, %v1826
          %v1828 = vsel %vm559, %v1824, %v1825
          %v1829 = vsel %vm677, %v1819, %v1828
          %1832 = vst [vmem:[#allocation5 + $0x50] sm:$0xff] %v1827
          %1833 = vst [vmem:[#allocation5 + $0x58] sm:$0xff] %v1829
          %v1834 = vld [vmem:[#allocation4] sm:$0xff]
          %v1835 = vld [vmem:[#allocation4 + $0x8] sm:$0xf]
          %v1836 = vld [vmem:[#allocation4 + $0xc] sm:$0xff]
          %v1837 = vld [vmem:[#allocation4 + $0x14] sm:$0xf]
          %1842 = vrot.lane.b32.xlu0 %v1834, 96
          %v1843 = vpop.permute.xlu0 %1842
          %1844 = vrot.lane.b32.xlu0 %v1835, 96
          %v1845 = vpop.permute.xlu0 %1844
          %1846 = vrot.lane.b32.xlu0 %v1836, 96
          %v1847 = vpop.permute.xlu0 %1846
          %1848 = vrot.lane.b32.xlu0 %v1837, 96
          %v1849 = vpop.permute.xlu0 %1848
          %v1850 = vrot.slane %v1843, 4
          %v1851 = vrot.slane %v1845, 4
          %v1852 = vrot.slane %v1847, 4
          %v1853 = vrot.slane %v1849, 4
          %v1854 = vsel %vm559, %v1850, %v1851
          %v1855 = vsel %vm706, %v1843, %v1854
          %v1856 = vsel %vm559, %v1852, %v1853
          %v1857 = vsel %vm706, %v1847, %v1856
          %1860 = vst [vmem:[#allocation5 + $0x60] sm:$0xff] %v1855
          %1861 = vst [vmem:[#allocation5 + $0x68] sm:$0xff] %v1857
          %v1862 = vld [vmem:[#allocation2] sm:$0xff]
          %v1863 = vld [vmem:[#allocation2 + $0x8] sm:$0xf]
          %v1864 = vld [vmem:[#allocation2 + $0xc] sm:$0xff]
          %v1865 = vld [vmem:[#allocation2 + $0x14] sm:$0xf]
          %1870 = vrot.lane.b32.xlu0 %v1862, 95
          %v1871 = vpop.permute.xlu0 %1870
          %1872 = vrot.lane.b32.xlu0 %v1863, 95
          %v1873 = vpop.permute.xlu0 %1872
          %1874 = vrot.lane.b32.xlu0 %v1864, 95
          %v1875 = vpop.permute.xlu0 %1874
          %1876 = vrot.lane.b32.xlu0 %v1865, 95
          %v1877 = vpop.permute.xlu0 %1876
          %v1878 = vrot.slane %v1871, 4
          %v1879 = vrot.slane %v1873, 4
          %v1880 = vrot.slane %v1875, 4
          %v1881 = vrot.slane %v1877, 4
          %v1882 = vsel %vm559, %v1878, %v1879
          %v1883 = vsel %vm735, %v1871, %v1882
          %v1884 = vsel %vm559, %v1880, %v1881
          %v1885 = vsel %vm735, %v1875, %v1884
          %1888 = vst [vmem:[#allocation5 + $0x70] sm:$0xff] %v1883
          %1889 = vst [vmem:[#allocation5 + $0x78] sm:$0xff] %v1885
          %v1890 = vld [vmem:[#allocation3] sm:$0xff]
          %v1891 = vld [vmem:[#allocation3 + $0x8] sm:$0xf]
          %v1892 = vld [vmem:[#allocation3 + $0xc] sm:$0xff]
          %v1893 = vld [vmem:[#allocation3 + $0x14] sm:$0xf]
          %1898 = vrot.lane.b32.xlu0 %v1890, 94
          %v1899 = vpop.permute.xlu0 %1898
          %1900 = vrot.lane.b32.xlu0 %v1891, 94
          %v1901 = vpop.permute.xlu0 %1900
          %1902 = vrot.lane.b32.xlu0 %v1892, 94
          %v1903 = vpop.permute.xlu0 %1902
          %1904 = vrot.lane.b32.xlu0 %v1893, 94
          %v1905 = vpop.permute.xlu0 %1904
          %v1906 = vrot.slane %v1899, 4
          %v1907 = vrot.slane %v1901, 4
          %v1908 = vrot.slane %v1903, 4
          %v1909 = vrot.slane %v1905, 4
          %v1910 = vsel %vm559, %v1906, %v1907
          %v1911 = vsel %vm764, %v1899, %v1910
          %v1912 = vsel %vm559, %v1908, %v1909
          %v1913 = vsel %vm764, %v1903, %v1912
          %1916 = vst [vmem:[#allocation5 + $0x80] sm:$0xff] %v1911
          %1917 = vst [vmem:[#allocation5 + $0x88] sm:$0xff] %v1913
          %v1918 = vld [vmem:[#allocation5] sm:$0xff]
          %v1919 = vld [vmem:[#allocation5 + $0x8] sm:$0xff]
          %v1920 = vld [vmem:[#allocation5 + $0x10] sm:$0xff]
          %v1921 = vld [vmem:[#allocation5 + $0x18] sm:$0xff]
          %v1922 = vld [vmem:[#allocation5 + $0x20] sm:$0xff]
          %v1923 = vld [vmem:[#allocation5 + $0x28] sm:$0xff]
          %v1924 = vld [vmem:[#allocation5 + $0x30] sm:$0xff]
          %v1925 = vld [vmem:[#allocation5 + $0x38] sm:$0xff]
          %v1926 = vld [vmem:[#allocation5 + $0x40] sm:$0xff]
          %v1927 = vld [vmem:[#allocation5 + $0x48] sm:$0xff]
          %v1928 = vld [vmem:[#allocation5 + $0x50] sm:$0xff]
          %v1929 = vld [vmem:[#allocation5 + $0x58] sm:$0xff]
          %v1930 = vld [vmem:[#allocation5 + $0x60] sm:$0xff]
          %v1931 = vld [vmem:[#allocation5 + $0x68] sm:$0xff]
          %v1932 = vld [vmem:[#allocation5 + $0x70] sm:$0xff]
          %v1933 = vld [vmem:[#allocation5 + $0x78] sm:$0xff]
          %v1934 = vld [vmem:[#allocation5 + $0x80] sm:$0xff]
          %v1935 = vld [vmem:[#allocation5 + $0x88] sm:$0xff]
          %v1954 = vunpack.c.l.b16 %v1918
          %v1955 = vunpack.c.h.b16 %v1918
          %v1956 = vunpack.c.l.b16 %v1919
          %v1957 = vunpack.c.h.b16 %v1919
          %v1958 = vunpack.c.l.b16 %v1920
          %v1959 = vunpack.c.h.b16 %v1920
          %v1960 = vunpack.c.l.b16 %v1921
          %v1961 = vunpack.c.h.b16 %v1921
          %v1962 = vunpack.c.l.b16 %v1922
          %v1963 = vunpack.c.h.b16 %v1922
          %v1964 = vunpack.c.l.b16 %v1923
          %v1965 = vunpack.c.h.b16 %v1923
          %v1966 = vunpack.c.l.b16 %v1924
          %v1967 = vunpack.c.h.b16 %v1924
          %v1968 = vunpack.c.l.b16 %v1925
          %v1969 = vunpack.c.h.b16 %v1925
          %v1970 = vunpack.c.l.b16 %v1926
          %v1971 = vunpack.c.h.b16 %v1926
          %v1972 = vunpack.c.l.b16 %v1927
          %v1973 = vunpack.c.h.b16 %v1927
          %v1974 = vunpack.c.l.b16 %v1928
          %v1975 = vunpack.c.h.b16 %v1928
          %v1976 = vunpack.c.l.b16 %v1929
          %v1977 = vunpack.c.h.b16 %v1929
          %v1978 = vunpack.c.l.b16 %v1930
          %v1979 = vunpack.c.h.b16 %v1930
          %v1980 = vunpack.c.l.b16 %v1931
          %v1981 = vunpack.c.h.b16 %v1931
          %v1982 = vunpack.c.l.b16 %v1932
          %v1983 = vunpack.c.h.b16 %v1932
          %v1984 = vunpack.c.l.b16 %v1933
          %v1985 = vunpack.c.h.b16 %v1933
          %v1986 = vunpack.c.l.b16 %v1934
          %v1987 = vunpack.c.h.b16 %v1934
          %v1988 = vunpack.c.l.b16 %v1935
          %v1989 = vunpack.c.h.b16 %v1935
          %v1990 = vpack.c.b16 %v1956, %v1954
          %v1991 = vpack.c.b16 %v1957, %v1955
          %v1992 = vpack.c.b16 %v1960, %v1958
          %v1993 = vpack.c.b16 %v1961, %v1959
          %v1994 = vpack.c.b16 %v1964, %v1962
          %v1995 = vpack.c.b16 %v1965, %v1963
          %v1996 = vpack.c.b16 %v1968, %v1966
          %v1997 = vpack.c.b16 %v1969, %v1967
          %v1998 = vpack.c.b16 %v1972, %v1970
          %v1999 = vpack.c.b16 %v1973, %v1971
          %v2000 = vpack.c.b16 %v1976, %v1974
          %v2001 = vpack.c.b16 %v1977, %v1975
          %v2002 = vpack.c.b16 %v1980, %v1978
          %v2003 = vpack.c.b16 %v1981, %v1979
          %v2004 = vpack.c.b16 %v1984, %v1982
          %v2005 = vpack.c.b16 %v1985, %v1983
          %v2006 = vpack.c.b16 %v1988, %v1986
          %v2007 = vpack.c.b16 %v1989, %v1987
          %2026 = vmatprep.subr.bf16.mxu0 %v2005
          %2027 = vmatpush1.bf16.msra.mxu0 %v2004
          %2028 = vmatprep.subr.bf16.mxu0 %v2003
          %2029 = vmatpush1.bf16.msra.mxu0 %v2002
          %2030 = vmatprep.subr.bf16.mxu0 %v2001
          %2031 = vmatpush1.bf16.msra.mxu0 %v2000
          %2032 = vmatprep.subr.bf16.mxu0 %v1999
          %2033 = vmatpush1.bf16.msra.mxu0 %v1998
          %2034 = vmatprep.subr.bf16.mxu0 %v1997
          %2035 = vmatpush1.bf16.msra.mxu0 %v1996
          %2036 = vmatprep.subr.bf16.mxu0 %v1995
          %2037 = vmatpush1.bf16.msra.mxu0 %v1994
          %2038 = vmatprep.subr.bf16.mxu0 %v1993
          %2039 = vmatpush1.bf16.msra.mxu0 %v1992
          %2040 = vmatprep.subr.bf16.mxu0 %v1991
          %2041 = vmatpush1.bf16.msra.mxu0 %v1990
          %2042 = vmatprep.subr.bf16.mxu0 0
          %2043 = vmatpush2.bf16.msra.mxu0 0
          %2044 = vmatprep.subr.bf16.mxu0 0
          %2045 = vmatpush2.bf16.msra.mxu0 0
          %2046 = vmatprep.subr.bf16.mxu0 0
          %2047 = vmatpush2.bf16.msra.mxu0 0
          %2048 = vmatprep.subr.bf16.mxu0 0
          %2049 = vmatpush2.bf16.msra.mxu0 0
          %2050 = vmatprep.subr.bf16.mxu0 0
          %2051 = vmatpush2.bf16.msra.mxu0 0
          %2052 = vmatprep.subr.bf16.mxu0 0
          %2053 = vmatpush2.bf16.msra.mxu0 0
          %2054 = vmatprep.subr.bf16.mxu0 0
          %2055 = vmatpush2.bf16.msra.mxu0 0
          %2056 = vmatprep.subr.bf16.mxu0 %v2007
          %2057 = vmatpush2.bf16.msra.mxu0 %v2006
          %2058 = vmatprep.mubr.bf16.mxu0 %v891
          %2059 = vmatmul.mubr.bf16.gmra.mxu0 %v796
          %v2060 = vpop.f32.mrf.mxu0
          %v2061 = vadd.f32 %v317, %v2060
          %v2062 = vpop.f32.mrf.mxu0
          %v2063 = vadd.f32 %v317, %v2062
          %v2064 = vpop.f32.mrf.mxu0
          %v2065 = vadd.f32 %v322, %v2064
          %v2066 = vpop.f32.mrf.mxu0
          %v2067 = vadd.f32 %v322, %v2066
          %2068 = vdwg.mxu0
          %v2069 = vmax.f32 %v2061, 0.0
          %v2070 = vmax.f32 %v2063, 0.0
          %v2071 = vmax.f32 %v2065, 0.0
          %v2072 = vmax.f32 %v2067, 0.0
          %v2073 = vpack.c.bf16 %v2071, %v2069
          %v2074 = vpack.c.bf16 %v2072, %v2070
          %2075 = vmatprep.subr.bf16.mxu0 0
          %2076 = vmatpush1.bf16.msra.mxu0 0
          %2077 = vmatprep.subr.bf16.mxu0 0
          %2078 = vmatpush1.bf16.msra.mxu0 0
          %2079 = vmatprep.subr.bf16.mxu0 0
          %2080 = vmatpush1.bf16.msra.mxu0 0
          %2081 = vmatprep.subr.bf16.mxu0 0
          %2082 = vmatpush1.bf16.msra.mxu0 0
          %2083 = vmatprep.subr.bf16.mxu0 0
          %2084 = vmatpush1.bf16.msra.mxu0 0
          %2085 = vmatprep.subr.bf16.mxu0 0
          %2086 = vmatpush1.bf16.msra.mxu0 0
          %2087 = vmatprep.subr.bf16.mxu0 0
          %2088 = vmatpush1.bf16.msra.mxu0 0
          %2089 = vmatprep.subr.bf16.mxu0 %v2074
          %2090 = vmatpush1.bf16.msra.mxu0 %v2073
          %2091 = vmatprep.subr.bf16.mxu0 0
          %2092 = vmatpush2.bf16.msra.mxu0 0
          %2093 = vmatprep.subr.bf16.mxu0 0
          %2094 = vmatpush2.bf16.msra.mxu0 0
          %2095 = vmatprep.subr.bf16.mxu0 0
          %2096 = vmatpush2.bf16.msra.mxu0 0
          %2097 = vmatprep.subr.bf16.mxu0 0
          %2098 = vmatpush2.bf16.msra.mxu0 0
          %2099 = vmatprep.subr.bf16.mxu0 0
          %2100 = vmatpush2.bf16.msra.mxu0 0
          %2101 = vmatprep.subr.bf16.mxu0 0
          %2102 = vmatpush2.bf16.msra.mxu0 0
          %2103 = vmatprep.subr.bf16.mxu0 0
          %2104 = vmatpush2.bf16.msra.mxu0 0
          %2105 = vmatprep.subr.bf16.mxu0 0
          %2106 = vmatpush2.bf16.msra.mxu0 0
          %2107 = vmatprep.mubr.bf16.mxu0 0
          %2108 = vmatmul.mubr.bf16.gmra.mxu0 %v943
          %v2109 = vpop.f32.mrf.mxu0
          %v2110 = vadd.f32 %v328, %v2109
          %v2111 = vpop.f32.mrf.mxu0
          %v2112 = vadd.f32 %v328, %v2111
          %v2113 = vpop.f32.mrf.mxu0
          %v2114 = vpop.f32.mrf.mxu0
          %2115 = vdwg.mxu0
          %v2116 = vsub.f32 %v980, %v1543
          %v2117 = vsub.f32 %v982, %v1545
          %v2118 = vadd.f32 %v2116, %v2110
          %v2119 = vadd.f32 %v2117, %v2112
          %v2120 = vmul.f32 %v2118, 0.25
          %v2121 = vmul.f32 %v2119, 0.25
          %v2122 = vadd.f32 %v386, %v2120
          %v2123 = vadd.f32 %v387, %v2121
          %v2124 = vpack.c.bf16 %v2122, %v2122
          %v2125 = vpack.c.bf16 %v2123, %v2123
          %v2127 = vsel %vm399, %v2124, 0
          %v2130 = vsel %vm399, %v2125, 0
          %2132 = vmatprep.subr.bf16.mxu0 0
          %2133 = vmatpush1.bf16.msra.mxu0 0
          %2134 = vmatprep.subr.bf16.mxu0 0
          %2135 = vmatpush1.bf16.msra.mxu0 0
          %2136 = vmatprep.subr.bf16.mxu0 0
          %2137 = vmatpush1.bf16.msra.mxu0 0
          %2138 = vmatprep.subr.bf16.mxu0 0
          %2139 = vmatpush1.bf16.msra.mxu0 0
          %2140 = vmatprep.subr.bf16.mxu0 0
          %2141 = vmatpush1.bf16.msra.mxu0 0
          %2142 = vmatprep.subr.bf16.mxu0 0
          %2143 = vmatpush1.bf16.msra.mxu0 0
          %2144 = vmatprep.subr.bf16.mxu0 0
          %2145 = vmatpush1.bf16.msra.mxu0 0
          %2146 = vmatprep.subr.bf16.mxu0 %v2130
          %2147 = vmatpush1.bf16.msra.mxu0 %v2127
          %2148 = vmatprep.subr.bf16.mxu0 0
          %2149 = vmatpush2.bf16.msra.mxu0 0
          %2150 = vmatprep.subr.bf16.mxu0 0
          %2151 = vmatpush2.bf16.msra.mxu0 0
          %2152 = vmatprep.subr.bf16.mxu0 0
          %2153 = vmatpush2.bf16.msra.mxu0 0
          %2154 = vmatprep.subr.bf16.mxu0 0
          %2155 = vmatpush2.bf16.msra.mxu0 0
          %2156 = vmatprep.subr.bf16.mxu0 0
          %2157 = vmatpush2.bf16.msra.mxu0 0
          %2158 = vmatprep.subr.bf16.mxu0 0
          %2159 = vmatpush2.bf16.msra.mxu0 0
          %2160 = vmatprep.subr.bf16.mxu0 0
          %2161 = vmatpush2.bf16.msra.mxu0 0
          %2162 = vmatprep.subr.bf16.mxu0 0
          %2163 = vmatpush2.bf16.msra.mxu0 0
          %2164 = vmatprep.mubr.bf16.mxu0 0
          %2165 = vmatmul.mubr.bf16.gmra.mxu0 %v397
          %v2166 = vpop.f32.mrf.mxu0
          %v2167 = vadd.f32 %v305, %v2166
          %v2168 = vpop.f32.mrf.mxu0
          %v2169 = vadd.f32 %v305, %v2168
          %v2170 = vpop.f32.mrf.mxu0
          %v2171 = vadd.f32 %v310, %v2170
          %v2172 = vpop.f32.mrf.mxu0
          %v2173 = vadd.f32 %v310, %v2172
          %2174 = vdwg.mxu0
          %v2175 = vmax.f32 %v2167, 0.0
          %v2176 = vmax.f32 %v2169, 0.0
          %v2177 = vmax.f32 %v2171, 0.0
          %v2178 = vmax.f32 %v2173, 0.0
          %v2179 = vpack.c.bf16 %v2177, %v2175
          %v2180 = vpack.c.bf16 %v2178, %v2176
          %v2183 = vunpack.c.l.b16 %v2179
          %v2184 = vunpack.c.l.b16 %v2180
          %v2185 = vunpack.c.h.b16 %v2179
          %v2186 = vunpack.c.h.b16 %v2180
          %v2187 = vpack.c.b16 %v2184, %v2183
          %v2188 = vpack.c.b16 %v2186, %v2185
          %2189 = vrot.lane.b32.xlu0 %v2187, 17
          %v2190 = vpop.permute.xlu0 %2189
          %2191 = vrot.lane.b32.xlu0 %v2188, 17
          %v2192 = vpop.permute.xlu0 %2191
          %v2193 = vrot.slane %v2190, 4
          %v2194 = vrot.slane %v2192, 4
          %v2195 = vsel %vm469, %v2193, %v2190
          %v2196 = vsel %vm469, %v2194, %v2192
          %2201 = vst.msk [vmem:[#allocation2] sm:$0xff] %vm478, %v2195
          %2202 = vst.msk [vmem:[#allocation2 + $0x8] sm:$0xf] %vm281, %v2193
          %2203 = vst.msk [vmem:[#allocation2 + $0xc] sm:$0xff] %vm478, %v2196
          %2204 = vst.msk [vmem:[#allocation2 + $0x14] sm:$0xf] %vm281, %v2194
          %v2205 = vmul.bf16 %v2179, %v363
          %v2206 = vmul.bf16 %v2180, %v364
          %v2209 = vunpack.c.l.b16 %v2205
          %v2210 = vunpack.c.l.b16 %v2206
          %v2211 = vunpack.c.h.b16 %v2205
          %v2212 = vunpack.c.h.b16 %v2206
          %v2213 = vpack.c.b16 %v2210, %v2209
          %v2214 = vpack.c.b16 %v2212, %v2211
          %2215 = vrot.lane.b32.xlu0 %v2213, 17
          %v2216 = vpop.permute.xlu0 %2215
          %2217 = vrot.lane.b32.xlu0 %v2214, 17
          %v2218 = vpop.permute.xlu0 %2217
          %v2219 = vrot.slane %v2216, 4
          %v2220 = vrot.slane %v2218, 4
          %v2221 = vsel %vm469, %v2219, %v2216
          %v2222 = vsel %vm469, %v2220, %v2218
          %2227 = vst.msk [vmem:[#allocation3] sm:$0xff] %vm478, %v2221
          %2228 = vst.msk [vmem:[#allocation3 + $0x8] sm:$0xf] %vm281, %v2219
          %2229 = vst.msk [vmem:[#allocation3 + $0xc] sm:$0xff] %vm478, %v2222
          %2230 = vst.msk [vmem:[#allocation3 + $0x14] sm:$0xf] %vm281, %v2220
          %v2231 = vmul.bf16 %v2179, %v371
          %v2232 = vmul.bf16 %v2180, %v372
          %v2235 = vunpack.c.l.b16 %v2231
          %v2236 = vunpack.c.l.b16 %v2232
          %v2237 = vunpack.c.h.b16 %v2231
          %v2238 = vunpack.c.h.b16 %v2232
          %v2239 = vpack.c.b16 %v2236, %v2235
          %v2240 = vpack.c.b16 %v2238, %v2237
          %2241 = vrot.lane.b32.xlu0 %v2239, 17
          %v2242 = vpop.permute.xlu0 %2241
          %2243 = vrot.lane.b32.xlu0 %v2240, 17
          %v2244 = vpop.permute.xlu0 %2243
          %v2245 = vrot.slane %v2242, 4
          %v2246 = vrot.slane %v2244, 4
          %v2247 = vsel %vm469, %v2245, %v2242
          %v2248 = vsel %vm469, %v2246, %v2244
          %2253 = vst.msk [vmem:[#allocation4] sm:$0xff] %vm478, %v2247
          %2254 = vst.msk [vmem:[#allocation4 + $0x8] sm:$0xf] %vm281, %v2245
          %2255 = vst.msk [vmem:[#allocation4 + $0xc] sm:$0xff] %vm478, %v2248
          %2256 = vst.msk [vmem:[#allocation4 + $0x14] sm:$0xf] %vm281, %v2246
          %v2257 = vld [vmem:[#allocation4] sm:$0xff]
          %v2258 = vld [vmem:[#allocation4 + $0xc] sm:$0xff]
          %2259 = vst [vmem:[#allocation5] sm:$0xff] %v2257
          %2260 = vst [vmem:[#allocation5 + $0x8] sm:$0xff] %v2258
          %v2261 = vld [vmem:[#allocation2] sm:$0xff]
          %v2262 = vld [vmem:[#allocation2 + $0x8] sm:$0xf]
          %v2263 = vld [vmem:[#allocation2 + $0xc] sm:$0xff]
          %v2264 = vld [vmem:[#allocation2 + $0x14] sm:$0xf]
          %2269 = vrot.lane.b32.xlu0 %v2261, 127
          %v2270 = vpop.permute.xlu0 %2269
          %2271 = vrot.lane.b32.xlu0 %v2262, 127
          %v2272 = vpop.permute.xlu0 %2271
          %2273 = vrot.lane.b32.xlu0 %v2263, 127
          %v2274 = vpop.permute.xlu0 %2273
          %2275 = vrot.lane.b32.xlu0 %v2264, 127
          %v2276 = vpop.permute.xlu0 %2275
          %v2277 = vrot.slane %v2270, 4
          %v2278 = vrot.slane %v2272, 4
          %v2279 = vrot.slane %v2274, 4
          %v2280 = vrot.slane %v2276, 4
          %v2281 = vsel %vm559, %v2277, %v2278
          %v2282 = vsel %vm561, %v2270, %v2281
          %v2283 = vsel %vm559, %v2279, %v2280
          %v2284 = vsel %vm561, %v2274, %v2283
          %2287 = vst [vmem:[#allocation5 + $0x10] sm:$0xff] %v2282
          %2288 = vst [vmem:[#allocation5 + $0x18] sm:$0xff] %v2284
          %v2289 = vld [vmem:[#allocation3] sm:$0xff]
          %v2290 = vld [vmem:[#allocation3 + $0x8] sm:$0xf]
          %v2291 = vld [vmem:[#allocation3 + $0xc] sm:$0xff]
          %v2292 = vld [vmem:[#allocation3 + $0x14] sm:$0xf]
          %2297 = vrot.lane.b32.xlu0 %v2289, 126
          %v2298 = vpop.permute.xlu0 %2297
          %2299 = vrot.lane.b32.xlu0 %v2290, 126
          %v2300 = vpop.permute.xlu0 %2299
          %2301 = vrot.lane.b32.xlu0 %v2291, 126
          %v2302 = vpop.permute.xlu0 %2301
          %2303 = vrot.lane.b32.xlu0 %v2292, 126
          %v2304 = vpop.permute.xlu0 %2303
          %v2305 = vrot.slane %v2298, 4
          %v2306 = vrot.slane %v2300, 4
          %v2307 = vrot.slane %v2302, 4
          %v2308 = vrot.slane %v2304, 4
          %v2309 = vsel %vm559, %v2305, %v2306
          %v2310 = vsel %vm590, %v2298, %v2309
          %v2311 = vsel %vm559, %v2307, %v2308
          %v2312 = vsel %vm590, %v2302, %v2311
          %2315 = vst [vmem:[#allocation5 + $0x20] sm:$0xff] %v2310
          %2316 = vst [vmem:[#allocation5 + $0x28] sm:$0xff] %v2312
          %v2317 = vld [vmem:[#allocation4] sm:$0xff]
          %v2318 = vld [vmem:[#allocation4 + $0x8] sm:$0xf]
          %v2319 = vld [vmem:[#allocation4 + $0xc] sm:$0xff]
          %v2320 = vld [vmem:[#allocation4 + $0x14] sm:$0xf]
          %2325 = vrot.lane.b32.xlu0 %v2317, 112
          %v2326 = vpop.permute.xlu0 %2325
          %2327 = vrot.lane.b32.xlu0 %v2318, 112
          %v2328 = vpop.permute.xlu0 %2327
          %2329 = vrot.lane.b32.xlu0 %v2319, 112
          %v2330 = vpop.permute.xlu0 %2329
          %2331 = vrot.lane.b32.xlu0 %v2320, 112
          %v2332 = vpop.permute.xlu0 %2331
          %v2333 = vrot.slane %v2326, 4
          %v2334 = vrot.slane %v2328, 4
          %v2335 = vrot.slane %v2330, 4
          %v2336 = vrot.slane %v2332, 4
          %v2337 = vsel %vm559, %v2333, %v2334
          %v2338 = vsel %vm619, %v2326, %v2337
          %v2339 = vsel %vm559, %v2335, %v2336
          %v2340 = vsel %vm619, %v2330, %v2339
          %2343 = vst [vmem:[#allocation5 + $0x30] sm:$0xff] %v2338
          %2344 = vst [vmem:[#allocation5 + $0x38] sm:$0xff] %v2340
          %v2345 = vld [vmem:[#allocation2] sm:$0xff]
          %v2346 = vld [vmem:[#allocation2 + $0x8] sm:$0xf]
          %v2347 = vld [vmem:[#allocation2 + $0xc] sm:$0xff]
          %v2348 = vld [vmem:[#allocation2 + $0x14] sm:$0xf]
          %2353 = vrot.lane.b32.xlu0 %v2345, 111
          %v2354 = vpop.permute.xlu0 %2353
          %2355 = vrot.lane.b32.xlu0 %v2346, 111
          %v2356 = vpop.permute.xlu0 %2355
          %2357 = vrot.lane.b32.xlu0 %v2347, 111
          %v2358 = vpop.permute.xlu0 %2357
          %2359 = vrot.lane.b32.xlu0 %v2348, 111
          %v2360 = vpop.permute.xlu0 %2359
          %v2361 = vrot.slane %v2354, 4
          %v2362 = vrot.slane %v2356, 4
          %v2363 = vrot.slane %v2358, 4
          %v2364 = vrot.slane %v2360, 4
          %v2365 = vsel %vm559, %v2361, %v2362
          %v2366 = vsel %vm648, %v2354, %v2365
          %v2367 = vsel %vm559, %v2363, %v2364
          %v2368 = vsel %vm648, %v2358, %v2367
          %2371 = vst [vmem:[#allocation5 + $0x40] sm:$0xff] %v2366
          %2372 = vst [vmem:[#allocation5 + $0x48] sm:$0xff] %v2368
          %v2373 = vld [vmem:[#allocation3] sm:$0xff]
          %v2374 = vld [vmem:[#allocation3 + $0x8] sm:$0xf]
          %v2375 = vld [vmem:[#allocation3 + $0xc] sm:$0xff]
          %v2376 = vld [vmem:[#allocation3 + $0x14] sm:$0xf]
          %2381 = vrot.lane.b32.xlu0 %v2373, 110
          %v2382 = vpop.permute.xlu0 %2381
          %2383 = vrot.lane.b32.xlu0 %v2374, 110
          %v2384 = vpop.permute.xlu0 %2383
          %2385 = vrot.lane.b32.xlu0 %v2375, 110
          %v2386 = vpop.permute.xlu0 %2385
          %2387 = vrot.lane.b32.xlu0 %v2376, 110
          %v2388 = vpop.permute.xlu0 %2387
          %v2389 = vrot.slane %v2382, 4
          %v2390 = vrot.slane %v2384, 4
          %v2391 = vrot.slane %v2386, 4
          %v2392 = vrot.slane %v2388, 4
          %v2393 = vsel %vm559, %v2389, %v2390
          %v2394 = vsel %vm677, %v2382, %v2393
          %v2395 = vsel %vm559, %v2391, %v2392
          %v2396 = vsel %vm677, %v2386, %v2395
          %2399 = vst [vmem:[#allocation5 + $0x50] sm:$0xff] %v2394
          %2400 = vst [vmem:[#allocation5 + $0x58] sm:$0xff] %v2396
          %v2401 = vld [vmem:[#allocation4] sm:$0xff]
          %v2402 = vld [vmem:[#allocation4 + $0x8] sm:$0xf]
          %v2403 = vld [vmem:[#allocation4 + $0xc] sm:$0xff]
          %v2404 = vld [vmem:[#allocation4 + $0x14] sm:$0xf]
          %2409 = vrot.lane.b32.xlu0 %v2401, 96
          %v2410 = vpop.permute.xlu0 %2409
          %2411 = vrot.lane.b32.xlu0 %v2402, 96
          %v2412 = vpop.permute.xlu0 %2411
          %2413 = vrot.lane.b32.xlu0 %v2403, 96
          %v2414 = vpop.permute.xlu0 %2413
          %2415 = vrot.lane.b32.xlu0 %v2404, 96
          %v2416 = vpop.permute.xlu0 %2415
          %v2417 = vrot.slane %v2410, 4
          %v2418 = vrot.slane %v2412, 4
          %v2419 = vrot.slane %v2414, 4
          %v2420 = vrot.slane %v2416, 4
          %v2421 = vsel %vm559, %v2417, %v2418
          %v2422 = vsel %vm706, %v2410, %v2421
          %v2423 = vsel %vm559, %v2419, %v2420
          %v2424 = vsel %vm706, %v2414, %v2423
          %2427 = vst [vmem:[#allocation5 + $0x60] sm:$0xff] %v2422
          %2428 = vst [vmem:[#allocation5 + $0x68] sm:$0xff] %v2424
          %v2429 = vld [vmem:[#allocation2] sm:$0xff]
          %v2430 = vld [vmem:[#allocation2 + $0x8] sm:$0xf]
          %v2431 = vld [vmem:[#allocation2 + $0xc] sm:$0xff]
          %v2432 = vld [vmem:[#allocation2 + $0x14] sm:$0xf]
          %2437 = vrot.lane.b32.xlu0 %v2429, 95
          %v2438 = vpop.permute.xlu0 %2437
          %2439 = vrot.lane.b32.xlu0 %v2430, 95
          %v2440 = vpop.permute.xlu0 %2439
          %2441 = vrot.lane.b32.xlu0 %v2431, 95
          %v2442 = vpop.permute.xlu0 %2441
          %2443 = vrot.lane.b32.xlu0 %v2432, 95
          %v2444 = vpop.permute.xlu0 %2443
          %v2445 = vrot.slane %v2438, 4
          %v2446 = vrot.slane %v2440, 4
          %v2447 = vrot.slane %v2442, 4
          %v2448 = vrot.slane %v2444, 4
          %v2449 = vsel %vm559, %v2445, %v2446
          %v2450 = vsel %vm735, %v2438, %v2449
          %v2451 = vsel %vm559, %v2447, %v2448
          %v2452 = vsel %vm735, %v2442, %v2451
          %2455 = vst [vmem:[#allocation5 + $0x70] sm:$0xff] %v2450
          %2456 = vst [vmem:[#allocation5 + $0x78] sm:$0xff] %v2452
          %v2457 = vld [vmem:[#allocation3] sm:$0xff]
          %v2458 = vld [vmem:[#allocation3 + $0x8] sm:$0xf]
          %v2459 = vld [vmem:[#allocation3 + $0xc] sm:$0xff]
          %v2460 = vld [vmem:[#allocation3 + $0x14] sm:$0xf]
          %2465 = vrot.lane.b32.xlu0 %v2457, 94
          %v2466 = vpop.permute.xlu0 %2465
          %2467 = vrot.lane.b32.xlu0 %v2458, 94
          %v2468 = vpop.permute.xlu0 %2467
          %2469 = vrot.lane.b32.xlu0 %v2459, 94
          %v2470 = vpop.permute.xlu0 %2469
          %2471 = vrot.lane.b32.xlu0 %v2460, 94
          %v2472 = vpop.permute.xlu0 %2471
          %v2473 = vrot.slane %v2466, 4
          %v2474 = vrot.slane %v2468, 4
          %v2475 = vrot.slane %v2470, 4
          %v2476 = vrot.slane %v2472, 4
          %v2477 = vsel %vm559, %v2473, %v2474
          %v2478 = vsel %vm764, %v2466, %v2477
          %v2479 = vsel %vm559, %v2475, %v2476
          %v2480 = vsel %vm764, %v2470, %v2479
          %2483 = vst [vmem:[#allocation5 + $0x80] sm:$0xff] %v2478
          %2484 = vst [vmem:[#allocation5 + $0x88] sm:$0xff] %v2480
          %v2485 = vld [vmem:[#allocation5] sm:$0xff]
          %v2486 = vld [vmem:[#allocation5 + $0x8] sm:$0xff]
          %v2487 = vld [vmem:[#allocation5 + $0x10] sm:$0xff]
          %v2488 = vld [vmem:[#allocation5 + $0x18] sm:$0xff]
          %v2489 = vld [vmem:[#allocation5 + $0x20] sm:$0xff]
          %v2490 = vld [vmem:[#allocation5 + $0x28] sm:$0xff]
          %v2491 = vld [vmem:[#allocation5 + $0x30] sm:$0xff]
          %v2492 = vld [vmem:[#allocation5 + $0x38] sm:$0xff]
          %v2493 = vld [vmem:[#allocation5 + $0x40] sm:$0xff]
          %v2494 = vld [vmem:[#allocation5 + $0x48] sm:$0xff]
          %v2495 = vld [vmem:[#allocation5 + $0x50] sm:$0xff]
          %v2496 = vld [vmem:[#allocation5 + $0x58] sm:$0xff]
          %v2497 = vld [vmem:[#allocation5 + $0x60] sm:$0xff]
          %v2498 = vld [vmem:[#allocation5 + $0x68] sm:$0xff]
          %v2499 = vld [vmem:[#allocation5 + $0x70] sm:$0xff]
          %v2500 = vld [vmem:[#allocation5 + $0x78] sm:$0xff]
          %v2501 = vld [vmem:[#allocation5 + $0x80] sm:$0xff]
          %v2502 = vld [vmem:[#allocation5 + $0x88] sm:$0xff]
          %v2521 = vunpack.c.l.b16 %v2485
          %v2522 = vunpack.c.h.b16 %v2485
          %v2523 = vunpack.c.l.b16 %v2486
          %v2524 = vunpack.c.h.b16 %v2486
          %v2525 = vunpack.c.l.b16 %v2487
          %v2526 = vunpack.c.h.b16 %v2487
          %v2527 = vunpack.c.l.b16 %v2488
          %v2528 = vunpack.c.h.b16 %v2488
          %v2529 = vunpack.c.l.b16 %v2489
          %v2530 = vunpack.c.h.b16 %v2489
          %v2531 = vunpack.c.l.b16 %v2490
          %v2532 = vunpack.c.h.b16 %v2490
          %v2533 = vunpack.c.l.b16 %v2491
          %v2534 = vunpack.c.h.b16 %v2491
          %v2535 = vunpack.c.l.b16 %v2492
          %v2536 = vunpack.c.h.b16 %v2492
          %v2537 = vunpack.c.l.b16 %v2493
          %v2538 = vunpack.c.h.b16 %v2493
          %v2539 = vunpack.c.l.b16 %v2494
          %v2540 = vunpack.c.h.b16 %v2494
          %v2541 = vunpack.c.l.b16 %v2495
          %v2542 = vunpack.c.h.b16 %v2495
          %v2543 = vunpack.c.l.b16 %v2496
          %v2544 = vunpack.c.h.b16 %v2496
          %v2545 = vunpack.c.l.b16 %v2497
          %v2546 = vunpack.c.h.b16 %v2497
          %v2547 = vunpack.c.l.b16 %v2498
          %v2548 = vunpack.c.h.b16 %v2498
          %v2549 = vunpack.c.l.b16 %v2499
          %v2550 = vunpack.c.h.b16 %v2499
          %v2551 = vunpack.c.l.b16 %v2500
          %v2552 = vunpack.c.h.b16 %v2500
          %v2553 = vunpack.c.l.b16 %v2501
          %v2554 = vunpack.c.h.b16 %v2501
          %v2555 = vunpack.c.l.b16 %v2502
          %v2556 = vunpack.c.h.b16 %v2502
          %v2557 = vpack.c.b16 %v2523, %v2521
          %v2558 = vpack.c.b16 %v2524, %v2522
          %v2559 = vpack.c.b16 %v2527, %v2525
          %v2560 = vpack.c.b16 %v2528, %v2526
          %v2561 = vpack.c.b16 %v2531, %v2529
          %v2562 = vpack.c.b16 %v2532, %v2530
          %v2563 = vpack.c.b16 %v2535, %v2533
          %v2564 = vpack.c.b16 %v2536, %v2534
          %v2565 = vpack.c.b16 %v2539, %v2537
          %v2566 = vpack.c.b16 %v2540, %v2538
          %v2567 = vpack.c.b16 %v2543, %v2541
          %v2568 = vpack.c.b16 %v2544, %v2542
          %v2569 = vpack.c.b16 %v2547, %v2545
          %v2570 = vpack.c.b16 %v2548, %v2546
          %v2571 = vpack.c.b16 %v2551, %v2549
          %v2572 = vpack.c.b16 %v2552, %v2550
          %v2573 = vpack.c.b16 %v2555, %v2553
          %v2574 = vpack.c.b16 %v2556, %v2554
          %2593 = vmatprep.subr.bf16.mxu0 %v2572
          %2594 = vmatpush1.bf16.msra.mxu0 %v2571
          %2595 = vmatprep.subr.bf16.mxu0 %v2570
          %2596 = vmatpush1.bf16.msra.mxu0 %v2569
          %2597 = vmatprep.subr.bf16.mxu0 %v2568
          %2598 = vmatpush1.bf16.msra.mxu0 %v2567
          %2599 = vmatprep.subr.bf16.mxu0 %v2566
          %2600 = vmatpush1.bf16.msra.mxu0 %v2565
          %2601 = vmatprep.subr.bf16.mxu0 %v2564
          %2602 = vmatpush1.bf16.msra.mxu0 %v2563
          %2603 = vmatprep.subr.bf16.mxu0 %v2562
          %2604 = vmatpush1.bf16.msra.mxu0 %v2561
          %2605 = vmatprep.subr.bf16.mxu0 %v2560
          %2606 = vmatpush1.bf16.msra.mxu0 %v2559
          %2607 = vmatprep.subr.bf16.mxu0 %v2558
          %2608 = vmatpush1.bf16.msra.mxu0 %v2557
          %2609 = vmatprep.subr.bf16.mxu0 0
          %2610 = vmatpush2.bf16.msra.mxu0 0
          %2611 = vmatprep.subr.bf16.mxu0 0
          %2612 = vmatpush2.bf16.msra.mxu0 0
          %2613 = vmatprep.subr.bf16.mxu0 0
          %2614 = vmatpush2.bf16.msra.mxu0 0
          %2615 = vmatprep.subr.bf16.mxu0 0
          %2616 = vmatpush2.bf16.msra.mxu0 0
          %2617 = vmatprep.subr.bf16.mxu0 0
          %2618 = vmatpush2.bf16.msra.mxu0 0
          %2619 = vmatprep.subr.bf16.mxu0 0
          %2620 = vmatpush2.bf16.msra.mxu0 0
          %2621 = vmatprep.subr.bf16.mxu0 0
          %2622 = vmatpush2.bf16.msra.mxu0 0
          %2623 = vmatprep.subr.bf16.mxu0 %v2574
          %2624 = vmatpush2.bf16.msra.mxu0 %v2573
          %2625 = vmatprep.mubr.bf16.mxu0 %v891
          %2626 = vmatmul.mubr.bf16.gmra.mxu0 %v796
          %v2627 = vpop.f32.mrf.mxu0
          %v2628 = vadd.f32 %v317, %v2627
          %v2629 = vpop.f32.mrf.mxu0
          %v2630 = vadd.f32 %v317, %v2629
          %v2631 = vpop.f32.mrf.mxu0
          %v2632 = vadd.f32 %v322, %v2631
          %v2633 = vpop.f32.mrf.mxu0
          %v2634 = vadd.f32 %v322, %v2633
          %2635 = vdwg.mxu0
          %v2636 = vmax.f32 %v2628, 0.0
          %v2637 = vmax.f32 %v2630, 0.0
          %v2638 = vmax.f32 %v2632, 0.0
          %v2639 = vmax.f32 %v2634, 0.0
          %v2640 = vpack.c.bf16 %v2638, %v2636
          %v2641 = vpack.c.bf16 %v2639, %v2637
          %2642 = vmatprep.subr.bf16.mxu0 0
          %2643 = vmatpush1.bf16.msra.mxu0 0
          %2644 = vmatprep.subr.bf16.mxu0 0
          %2645 = vmatpush1.bf16.msra.mxu0 0
          %2646 = vmatprep.subr.bf16.mxu0 0
          %2647 = vmatpush1.bf16.msra.mxu0 0
          %2648 = vmatprep.subr.bf16.mxu0 0
          %2649 = vmatpush1.bf16.msra.mxu0 0
          %2650 = vmatprep.subr.bf16.mxu0 0
          %2651 = vmatpush1.bf16.msra.mxu0 0
          %2652 = vmatprep.subr.bf16.mxu0 0
          %2653 = vmatpush1.bf16.msra.mxu0 0
          %2654 = vmatprep.subr.bf16.mxu0 0
          %2655 = vmatpush1.bf16.msra.mxu0 0
          %2656 = vmatprep.subr.bf16.mxu0 %v2641
          %2657 = vmatpush1.bf16.msra.mxu0 %v2640
          %2658 = vmatprep.subr.bf16.mxu0 0
          %2659 = vmatpush2.bf16.msra.mxu0 0
          %2660 = vmatprep.subr.bf16.mxu0 0
          %2661 = vmatpush2.bf16.msra.mxu0 0
          %2662 = vmatprep.subr.bf16.mxu0 0
          %2663 = vmatpush2.bf16.msra.mxu0 0
          %2664 = vmatprep.subr.bf16.mxu0 0
          %2665 = vmatpush2.bf16.msra.mxu0 0
          %2666 = vmatprep.subr.bf16.mxu0 0
          %2667 = vmatpush2.bf16.msra.mxu0 0
          %2668 = vmatprep.subr.bf16.mxu0 0
          %2669 = vmatpush2.bf16.msra.mxu0 0
          %2670 = vmatprep.subr.bf16.mxu0 0
          %2671 = vmatpush2.bf16.msra.mxu0 0
          %2672 = vmatprep.subr.bf16.mxu0 0
          %2673 = vmatpush2.bf16.msra.mxu0 0
          %2674 = vmatprep.mubr.bf16.mxu0 0
          %2675 = vmatmul.mubr.bf16.gmra.mxu0 %v943
          %v2676 = vpop.f32.mrf.mxu0
          %v2677 = vadd.f32 %v328, %v2676
          %v2678 = vpop.f32.mrf.mxu0
          %v2679 = vadd.f32 %v328, %v2678
          %v2680 = vpop.f32.mrf.mxu0
          %v2681 = vpop.f32.mrf.mxu0
          %2682 = vdwg.mxu0
          %v2683 = vadd.f32 %v1543, %v2110
          %v2684 = vadd.f32 %v1545, %v2112
          %v2685 = vmul.f32 %v2683, 3.0
          %v2686 = vmul.f32 %v2684, 3.0
          %v2687 = vadd.f32 %v980, %v2685
          %v2688 = vadd.f32 %v982, %v2686
          %v2689 = vadd.f32 %v2687, %v2677
          %v2690 = vadd.f32 %v2688, %v2679
          %v2691 = vmul.f32 %v2689, 0.03125
          %v2692 = vmul.f32 %v2690, 0.03125
          %v2693 = vadd.f32 %v386, %v2691
          %v2694 = vadd.f32 %v387, %v2692
        $region53: #{tpu_custom_call.1} parent=47 // loop_footer
          %s385 = sadd.s32 1, %s381
        $region54: #{tpu_custom_call.1} parent=47 // loop_footer_branch
          %380 = sbr.rel target = $region50
        $region55: #{tpu_custom_call.1} parent=47 // loop_exit
          _
        %2695 = vst [vmem:[%s272] sm:$0x3f] %v386
        %2696 = vst [vmem:[%s272 + $0x8] sm:$0x3f] %v387
        %s2697 = sand.u32 %s181, 1
        %s2698 = scalar_lea.sflag [#allocation7], %s2697
        %s2699 = sand.u32 %s181, 1
        %s2700 = smul.addr %s2699, 16
        %s2701 = scalar_lea.vmem [#allocation6], %s2700
        // Predicated region
        $region56: #{tpu_custom_call.1} parent=47 // pred_check
          %p2702 = pneg %p191
        $region57: #{tpu_custom_call.1} parent=47 // pred_check_branch
          %2704 = sbr.rel (%p2702) target = $region59
        $region58: #{tpu_custom_call.1} parent=47 // pred_region
          %s2705 = smul.u32 2, %s21
          %s2707 = ssub.s32 256, 256
          %2708 = vsyncadd %s2698, %s2707
          %s2709 = smul.addr %s2705, 128
          %s2710 = scalar_lea.hbm %s7, %s2709
          %s2712 = sshll.u32 %s2701, 4
          %s2713 = int_to_ptr.vmem [resolvable:$true] %s2712
          %2715 = dma.vmem_to_hbm [thread:$0]  %s2713, 256, %s2710, %s2698
        $region59: #{tpu_custom_call.1} parent=47 // pred_fallthru
          _
      $region48: #{tpu_custom_call.1} parent=5 // pred_fallthru
        _
      %p2716 = scmp.le.s32.totalorder 2, %s16
      // Predicated region
      $region60: #{tpu_custom_call.1} parent=5 // pred_check
        %p2717 = pneg %p2716
      $region61: #{tpu_custom_call.1} parent=5 // pred_check_branch
        %2719 = sbr.rel (%p2717) target = $region63
      $region62: #{tpu_custom_call.1} parent=5 // pred_region
        %s2720 = ssub.s32 %s16, 2
        // Predicated region
        $region64: #{tpu_custom_call.1} parent=62 // pred_check
          %p2721 = pneg %p197
        $region65: #{tpu_custom_call.1} parent=62 // pred_check_branch
          %2723 = sbr.rel (%p2721) target = $region67
        $region66: #{tpu_custom_call.1} parent=62 // pred_region
          %s2724 = sand.u32 %s182, 1
          %s2725 = scalar_lea.sflag [#allocation7], %s2724
          %s2726 = sand.u32 %s182, 1
          %s2727 = smul.addr %s2726, 16
          %s2728 = scalar_lea.vmem [#allocation6], %s2727
          %2729 = dma.done %s2725, 256
        $region67: #{tpu_custom_call.1} parent=62 // pred_fallthru
          _
      $region63: #{tpu_custom_call.1} parent=5 // pred_fallthru
        _
    $region6: #{tpu_custom_call.1} parent=1 // loop_footer
      %s20 = sadd.s32 1, %s16
    $region7: #{tpu_custom_call.1} parent=1 // loop_footer_branch
      %15 = sbr.rel target = $region3
    $region8: #{tpu_custom_call.1} parent=1 // loop_exit
      _
    %2730 = vsyncpa [#allocation7], 1
    %s2731 = scalar_lea.sflag [#allocation7], 1
    %2732 = vsyncpa %s2731, 1

</llo_original>
